<compile_context>
chip_gen: v7x
topology: tpu7x:2x2x1
jax: 0.10.0
libtpu: 0.0.40
codegen_flags: <defaults>
</compile_context>

<pallas_src>
import functools

import jax
import jax.numpy as jnp
from jax.experimental import pallas as pl
from jax.experimental.pallas import tpu as pltpu


# ---------------------------------------------------------------------------
# Fused kernel: all stages + residual + ReLU for one batch element
# ---------------------------------------------------------------------------
def _res_conv_block_kernel(w_ref, b_ref, x_ref, out_ref, hpad_ref, *,
                           n_stages, C, H, W):
    """Fused ResidualConvBlock for one batch element (NCHW, W on lanes).

    w_ref:    SMEM (n_stages*C*C*9,)  flattened (stage, cout, cin, kh, kw) weights
    b_ref:    SMEM (n_stages*C,)      flattened (stage, cout) biases
    x_ref:    VMEM (1, C, H, W)       input block
    out_ref:  VMEM (1, C, H, W)       output block
    hpad_ref: VMEM (C, H+2, W+2)      zero-padded activation scratch (f32)
    """
    # Zero-padded scratch: borders stay zero, interior = current activation.
    hpad_ref[...] = jnp.zeros_like(hpad_ref)
    for c in range(C):
        hpad_ref[c, 1:H + 1, 1:W + 1] = x_ref[0, c].astype(jnp.float32)

    for s in range(n_stages):
        # C accumulators of shape (H, W); bias added at the end.
        accs = [jnp.zeros((H, W), jnp.float32) for _ in range(C)]
        for ci in range(C):
            for kh in range(3):
                for kw in range(3):
                    patch = hpad_ref[ci, kh:kh + H, kw:kw + W]        # (H, W)
                    for co in range(C):
                        widx = ((s * C + co) * C + ci) * 9 + kh * 3 + kw
                        wv = w_ref[widx]                              # scalar from SMEM
                        accs[co] = accs[co] + wv * patch              # VPU FMA (broadcast)

        if s != n_stages - 1:
            # bias + ReLU, write back into the padded scratch interior (stays in VMEM).
            for co in range(C):
                h_next = jnp.maximum(accs[co] + b_ref[s * C + co], 0.0)
                hpad_ref[co, 1:H + 1, 1:W + 1] = h_next
        else:
            # bias + residual add + final ReLU, write the output.
            for co in range(C):
                res = x_ref[0, co].astype(jnp.float32)
                y = jnp.maximum(accs[co] + b_ref[s * C + co] + res, 0.0)
                out_ref[0, co] = y.astype(out_ref.dtype)


# ---------------------------------------------------------------------------
# Wrapper
# ---------------------------------------------------------------------------
def residual_conv_block(x_nchw, torch_weights, biases):
    """Forward of ResidualConvBlock (normalization='none') as one fused Pallas kernel.

    x_nchw:        (N, C, H, W)             PyTorch layout
    torch_weights: list of (C, C, 3, 3)     PyTorch OIHW conv weights
    biases:        list of (C,)             conv biases
    """
    N, C, H, W = x_nchw.shape
    n_stages = len(torch_weights)

    # Flatten weights/biases for SMEM scalar prefetch:
    # index = ((stage*C + cout)*C + cin)*9 + kh*3 + kw
    w_flat = jnp.concatenate(
        [jnp.asarray(w, jnp.float32).reshape(-1) for w in torch_weights])
    b_flat = jnp.concatenate(
        [jnp.asarray(b, jnp.float32).reshape(-1) for b in biases])

    kernel = functools.partial(_res_conv_block_kernel,
                               n_stages=n_stages, C=C, H=H, W=W)

    return pl.pallas_call(
        kernel,
        out_shape=jax.ShapeDtypeStruct((N, C, H, W), x_nchw.dtype),
        grid_spec=pltpu.PrefetchScalarGridSpec(
            num_scalar_prefetch=2,
            grid=(N,),
            in_specs=[
                pl.BlockSpec((1, C, H, W), lambda n, w, b: (n, 0, 0, 0)),
            ],
            out_specs=pl.BlockSpec((1, C, H, W), lambda n, w, b: (n, 0, 0, 0)),
            scratch_shapes=[pltpu.VMEM((C, H + 2, W + 2), jnp.float32)],
        ),
        compiler_params=pltpu.CompilerParams(
            dimension_semantics=("parallel",),
            vmem_limit_bytes=64 * 1024 * 1024,
        ),
    )(w_flat, b_flat, x_nchw)


# ---------------------------------------------------------------------------
# Pure-JAX reference (mirrors the PyTorch forward, NCHW)
# ---------------------------------------------------------------------------
def _reference(x_nchw, torch_weights, biases):
    h = x_nchw
    n_stages = len(torch_weights)
    for i, (w, b) in enumerate(zip(torch_weights, biases)):
        h = jax.lax.conv_general_dilated(
            h, w, window_strides=(1, 1), padding="SAME",
            dimension_numbers=("NCHW", "OIHW", "NCHW"))
        h = h + b[None, :, None, None]
        if i != n_stages - 1:
            h = jnp.maximum(h, 0.0)
    return jnp.maximum(h + x_nchw, 0.0)


# ---------------------------------------------------------------------------
if __name__ == "__main__":
    # ResidualConvBlock(n_stages=2, n_filters_in=4, n_filters_out=4, normalization='none')
    # (the residual add requires n_filters_in == n_filters_out)
    N, C, H, W = 2, 4, 16, 16
    n_stages = 2

    key = jax.random.PRNGKey(0)
    kx, *kws = jax.random.split(key, 1 + 2 * n_stages)
    x = jax.random.normal(kx, (N, C, H, W), dtype=jnp.float32)

    torch_weights, biases = [], []
    for i in range(n_stages):
        w = 0.1 * jax.random.normal(kws[2 * i], (C, C, 3, 3), dtype=jnp.float32)
        b = 0.05 * jax.random.normal(kws[2 * i + 1], (C,), dtype=jnp.float32)
        torch_weights.append(w)
        biases.append(b)

    out = jax.block_until_ready(residual_conv_block(x, torch_weights, biases))

    ref = _reference(x, torch_weights, biases)
    assert out.shape == ref.shape == (N, C, H, W)
    assert jnp.allclose(out, ref, atol=1e-4, rtol=1e-4), (
        f"max abs err {jnp.max(jnp.abs(out - ref))}")

    print("KERNEL_OK")
</pallas_src>

<mosaic_0001>
module attributes {stable_mosaic.version = 11 : i64} {
  func.func @_res_conv_block_kernel(%arg0: i32, %arg1: memref<288xf32, #tpu.memory_space<smem>>, %arg2: memref<8xf32, #tpu.memory_space<smem>>, %arg3: memref<1x4x16x16xf32, #tpu.memory_space<vmem>>, %arg4: memref<1x4x16x16xf32, #tpu.memory_space<vmem>>, %arg5: memref<4x18x18xf32, #tpu.memory_space<vmem>>) attributes {dimension_semantics = [#tpu.dimension_semantics<parallel>], iteration_bounds = array<i64: 2>, scalar_prefetch = 2 : i64, scratch_operands = 1 : i64, tpu.core_type = #tpu.core_type<tc>, window_params = [{transform_indices = @transform_0, window_bounds = array<i64: 1, 4, 16, 16>}, {transform_indices = @transform_1, window_bounds = array<i64: 1, 4, 16, 16>}]} {
    %cst = arith.constant 0.000000e+00 : f32
    %0 = vector.broadcast %cst : f32 to vector<4x18x18xf32>
    %c0 = arith.constant 0 : index
    %c0_0 = arith.constant 0 : index
    %c0_1 = arith.constant 0 : index
    %1 = vector.load %arg5[%c0, %c0_0, %c0_1] : memref<4x18x18xf32, #tpu.memory_space<vmem>>, vector<4x18x18xf32>
    tpu.vector_store %arg5[%c0, %c0_0, %c0_1], %0 {strides = array<i32>} : memref<4x18x18xf32, #tpu.memory_space<vmem>>, vector<4x18x18xf32>,
    %c0_2 = arith.constant 0 : index
    %c0_3 = arith.constant 0 : index
    %c0_4 = arith.constant 0 : index
    %c0_5 = arith.constant 0 : index
    %2 = vector.load %arg3[%c0_2, %c0_3, %c0_4, %c0_5] : memref<1x4x16x16xf32, #tpu.memory_space<vmem>>, vector<1x1x16x16xf32>
    %3 = vector.shape_cast %2 : vector<1x1x16x16xf32> to vector<16x16xf32>
    %c0_6 = arith.constant 0 : index
    %c1 = arith.constant 1 : index
    %c1_7 = arith.constant 1 : index
    %4 = vector.load %arg5[%c0_6, %c1, %c1_7] : memref<4x18x18xf32, #tpu.memory_space<vmem>>, vector<1x16x16xf32>
    %5 = vector.shape_cast %4 : vector<1x16x16xf32> to vector<16x16xf32>
    %6 = vector.shape_cast %3 : vector<16x16xf32> to vector<1x16x16xf32>
    tpu.vector_store %arg5[%c0_6, %c1, %c1_7], %6 {strides = array<i32>} : memref<4x18x18xf32, #tpu.memory_space<vmem>>, vector<1x16x16xf32>,
    %c0_8 = arith.constant 0 : index
    %c1_9 = arith.constant 1 : index
    %c0_10 = arith.constant 0 : index
    %c0_11 = arith.constant 0 : index
    %7 = vector.load %arg3[%c0_8, %c1_9, %c0_10, %c0_11] : memref<1x4x16x16xf32, #tpu.memory_space<vmem>>, vector<1x1x16x16xf32>
    %8 = vector.shape_cast %7 : vector<1x1x16x16xf32> to vector<16x16xf32>
    %c1_12 = arith.constant 1 : index
    %c1_13 = arith.constant 1 : index
    %c1_14 = arith.constant 1 : index
    %9 = vector.load %arg5[%c1_12, %c1_13, %c1_14] : memref<4x18x18xf32, #tpu.memory_space<vmem>>, vector<1x16x16xf32>
    %10 = vector.shape_cast %9 : vector<1x16x16xf32> to vector<16x16xf32>
    %11 = vector.shape_cast %8 : vector<16x16xf32> to vector<1x16x16xf32>
    tpu.vector_store %arg5[%c1_12, %c1_13, %c1_14], %11 {strides = array<i32>} : memref<4x18x18xf32, #tpu.memory_space<vmem>>, vector<1x16x16xf32>,
    %c0_15 = arith.constant 0 : index
    %c2 = arith.constant 2 : index
    %c0_16 = arith.constant 0 : index
    %c0_17 = arith.constant 0 : index
    %12 = vector.load %arg3[%c0_15, %c2, %c0_16, %c0_17] : memref<1x4x16x16xf32, #tpu.memory_space<vmem>>, vector<1x1x16x16xf32>
    %13 = vector.shape_cast %12 : vector<1x1x16x16xf32> to vector<16x16xf32>
    %c2_18 = arith.constant 2 : index
    %c1_19 = arith.constant 1 : index
    %c1_20 = arith.constant 1 : index
    %14 = vector.load %arg5[%c2_18, %c1_19, %c1_20] : memref<4x18x18xf32, #tpu.memory_space<vmem>>, vector<1x16x16xf32>
    %15 = vector.shape_cast %14 : vector<1x16x16xf32> to vector<16x16xf32>
    %16 = vector.shape_cast %13 : vector<16x16xf32> to vector<1x16x16xf32>
    tpu.vector_store %arg5[%c2_18, %c1_19, %c1_20], %16 {strides = array<i32>} : memref<4x18x18xf32, #tpu.memory_space<vmem>>, vector<1x16x16xf32>,
    %c0_21 = arith.constant 0 : index
    %c3 = arith.constant 3 : index
    %c0_22 = arith.constant 0 : index
    %c0_23 = arith.constant 0 : index
    %17 = vector.load %arg3[%c0_21, %c3, %c0_22, %c0_23] : memref<1x4x16x16xf32, #tpu.memory_space<vmem>>, vector<1x1x16x16xf32>
    %18 = vector.shape_cast %17 : vector<1x1x16x16xf32> to vector<16x16xf32>
    %c3_24 = arith.constant 3 : index
    %c1_25 = arith.constant 1 : index
    %c1_26 = arith.constant 1 : index
    %19 = vector.load %arg5[%c3_24, %c1_25, %c1_26] : memref<4x18x18xf32, #tpu.memory_space<vmem>>, vector<1x16x16xf32>
    %20 = vector.shape_cast %19 : vector<1x16x16xf32> to vector<16x16xf32>
    %21 = vector.shape_cast %18 : vector<16x16xf32> to vector<1x16x16xf32>
    tpu.vector_store %arg5[%c3_24, %c1_25, %c1_26], %21 {strides = array<i32>} : memref<4x18x18xf32, #tpu.memory_space<vmem>>, vector<1x16x16xf32>,
    %cst_27 = arith.constant 0.000000e+00 : f32
    %22 = vector.broadcast %cst_27 : f32 to vector<16x16xf32>
    %cst_28 = arith.constant 0.000000e+00 : f32
    %23 = vector.broadcast %cst_28 : f32 to vector<16x16xf32>
    %cst_29 = arith.constant 0.000000e+00 : f32
    %24 = vector.broadcast %cst_29 : f32 to vector<16x16xf32>
    %cst_30 = arith.constant 0.000000e+00 : f32
    %25 = vector.broadcast %cst_30 : f32 to vector<16x16xf32>
    %c0_31 = arith.constant 0 : index
    %c0_32 = arith.constant 0 : index
    %c0_33 = arith.constant 0 : index
    %26 = vector.load %arg5[%c0_31, %c0_32, %c0_33] : memref<4x18x18xf32, #tpu.memory_space<vmem>>, vector<1x16x16xf32>
    %27 = vector.shape_cast %26 : vector<1x16x16xf32> to vector<16x16xf32>
    %c0_34 = arith.constant 0 : index
    %28 = memref.load %arg1[%c0_34] : memref<288xf32, #tpu.memory_space<smem>>
    %29 = vector.broadcast %28 : f32 to vector<16x16xf32>
    %30 = arith.mulf %29, %27 : vector<16x16xf32>
    %31 = arith.addf %22, %30 : vector<16x16xf32>
    %c36 = arith.constant 36 : index
    %32 = memref.load %arg1[%c36] : memref<288xf32, #tpu.memory_space<smem>>
    %33 = vector.broadcast %32 : f32 to vector<16x16xf32>
    %34 = arith.mulf %33, %27 : vector<16x16xf32>
    %35 = arith.addf %23, %34 : vector<16x16xf32>
    %c72 = arith.constant 72 : index
    %36 = memref.load %arg1[%c72] : memref<288xf32, #tpu.memory_space<smem>>
    %37 = vector.broadcast %36 : f32 to vector<16x16xf32>
    %38 = arith.mulf %37, %27 : vector<16x16xf32>
    %39 = arith.addf %24, %38 : vector<16x16xf32>
    %c108 = arith.constant 108 : index
    %40 = memref.load %arg1[%c108] : memref<288xf32, #tpu.memory_space<smem>>
    %41 = vector.broadcast %40 : f32 to vector<16x16xf32>
    %42 = arith.mulf %41, %27 : vector<16x16xf32>
    %43 = arith.addf %25, %42 : vector<16x16xf32>
    %c0_35 = arith.constant 0 : index
    %c0_36 = arith.constant 0 : index
    %c1_37 = arith.constant 1 : index
    %44 = vector.load %arg5[%c0_35, %c0_36, %c1_37] : memref<4x18x18xf32, #tpu.memory_space<vmem>>, vector<1x16x16xf32>
    %45 = vector.shape_cast %44 : vector<1x16x16xf32> to vector<16x16xf32>
    %c1_38 = arith.constant 1 : index
    %46 = memref.load %arg1[%c1_38] : memref<288xf32, #tpu.memory_space<smem>>
    %47 = vector.broadcast %46 : f32 to vector<16x16xf32>
    %48 = arith.mulf %47, %45 : vector<16x16xf32>
    %49 = arith.addf %31, %48 : vector<16x16xf32>
    %c37 = arith.constant 37 : index
    %50 = memref.load %arg1[%c37] : memref<288xf32, #tpu.memory_space<smem>>
    %51 = vector.broadcast %50 : f32 to vector<16x16xf32>
    %52 = arith.mulf %51, %45 : vector<16x16xf32>
    %53 = arith.addf %35, %52 : vector<16x16xf32>
    %c73 = arith.constant 73 : index
    %54 = memref.load %arg1[%c73] : memref<288xf32, #tpu.memory_space<smem>>
    %55 = vector.broadcast %54 : f32 to vector<16x16xf32>
    %56 = arith.mulf %55, %45 : vector<16x16xf32>
    %57 = arith.addf %39, %56 : vector<16x16xf32>
    %c109 = arith.constant 109 : index
    %58 = memref.load %arg1[%c109] : memref<288xf32, #tpu.memory_space<smem>>
    %59 = vector.broadcast %58 : f32 to vector<16x16xf32>
    %60 = arith.mulf %59, %45 : vector<16x16xf32>
    %61 = arith.addf %43, %60 : vector<16x16xf32>
    %c0_39 = arith.constant 0 : index
    %c0_40 = arith.constant 0 : index
    %c2_41 = arith.constant 2 : index
    %62 = vector.load %arg5[%c0_39, %c0_40, %c2_41] : memref<4x18x18xf32, #tpu.memory_space<vmem>>, vector<1x16x16xf32>
    %63 = vector.shape_cast %62 : vector<1x16x16xf32> to vector<16x16xf32>
    %c2_42 = arith.constant 2 : index
    %64 = memref.load %arg1[%c2_42] : memref<288xf32, #tpu.memory_space<smem>>
    %65 = vector.broadcast %64 : f32 to vector<16x16xf32>
    %66 = arith.mulf %65, %63 : vector<16x16xf32>
    %67 = arith.addf %49, %66 : vector<16x16xf32>
    %c38 = arith.constant 38 : index
    %68 = memref.load %arg1[%c38] : memref<288xf32, #tpu.memory_space<smem>>
    %69 = vector.broadcast %68 : f32 to vector<16x16xf32>
    %70 = arith.mulf %69, %63 : vector<16x16xf32>
    %71 = arith.addf %53, %70 : vector<16x16xf32>
    %c74 = arith.constant 74 : index
    %72 = memref.load %arg1[%c74] : memref<288xf32, #tpu.memory_space<smem>>
    %73 = vector.broadcast %72 : f32 to vector<16x16xf32>
    %74 = arith.mulf %73, %63 : vector<16x16xf32>
    %75 = arith.addf %57, %74 : vector<16x16xf32>
    %c110 = arith.constant 110 : index
    %76 = memref.load %arg1[%c110] : memref<288xf32, #tpu.memory_space<smem>>
    %77 = vector.broadcast %76 : f32 to vector<16x16xf32>
    %78 = arith.mulf %77, %63 : vector<16x16xf32>
    %79 = arith.addf %61, %78 : vector<16x16xf32>
    %c0_43 = arith.constant 0 : index
    %c1_44 = arith.constant 1 : index
    %c0_45 = arith.constant 0 : index
    %80 = vector.load %arg5[%c0_43, %c1_44, %c0_45] : memref<4x18x18xf32, #tpu.memory_space<vmem>>, vector<1x16x16xf32>
    %81 = vector.shape_cast %80 : vector<1x16x16xf32> to vector<16x16xf32>
    %c3_46 = arith.constant 3 : index
    %82 = memref.load %arg1[%c3_46] : memref<288xf32, #tpu.memory_space<smem>>
    %83 = vector.broadcast %82 : f32 to vector<16x16xf32>
    %84 = arith.mulf %83, %81 : vector<16x16xf32>
    %85 = arith.addf %67, %84 : vector<16x16xf32>
    %c39 = arith.constant 39 : index
    %86 = memref.load %arg1[%c39] : memref<288xf32, #tpu.memory_space<smem>>
    %87 = vector.broadcast %86 : f32 to vector<16x16xf32>
    %88 = arith.mulf %87, %81 : vector<16x16xf32>
    %89 = arith.addf %71, %88 : vector<16x16xf32>
    %c75 = arith.constant 75 : index
    %90 = memref.load %arg1[%c75] : memref<288xf32, #tpu.memory_space<smem>>
    %91 = vector.broadcast %90 : f32 to vector<16x16xf32>
    %92 = arith.mulf %91, %81 : vector<16x16xf32>
    %93 = arith.addf %75, %92 : vector<16x16xf32>
    %c111 = arith.constant 111 : index
    %94 = memref.load %arg1[%c111] : memref<288xf32, #tpu.memory_space<smem>>
    %95 = vector.broadcast %94 : f32 to vector<16x16xf32>
    %96 = arith.mulf %95, %81 : vector<16x16xf32>
    %97 = arith.addf %79, %96 : vector<16x16xf32>
    %c0_47 = arith.constant 0 : index
    %c1_48 = arith.constant 1 : index
    %c1_49 = arith.constant 1 : index
    %98 = vector.load %arg5[%c0_47, %c1_48, %c1_49] : memref<4x18x18xf32, #tpu.memory_space<vmem>>, vector<1x16x16xf32>
    %99 = vector.shape_cast %98 : vector<1x16x16xf32> to vector<16x16xf32>
    %c4 = arith.constant 4 : index
    %100 = memref.load %arg1[%c4] : memref<288xf32, #tpu.memory_space<smem>>
    %101 = vector.broadcast %100 : f32 to vector<16x16xf32>
    %102 = arith.mulf %101, %99 : vector<16x16xf32>
    %103 = arith.addf %85, %102 : vector<16x16xf32>
    %c40 = arith.constant 40 : index
    %104 = memref.load %arg1[%c40] : memref<288xf32, #tpu.memory_space<smem>>
    %105 = vector.broadcast %104 : f32 to vector<16x16xf32>
    %106 = arith.mulf %105, %99 : vector<16x16xf32>
    %107 = arith.addf %89, %106 : vector<16x16xf32>
    %c76 = arith.constant 76 : index
    %108 = memref.load %arg1[%c76] : memref<288xf32, #tpu.memory_space<smem>>
    %109 = vector.broadcast %108 : f32 to vector<16x16xf32>
    %110 = arith.mulf %109, %99 : vector<16x16xf32>
    %111 = arith.addf %93, %110 : vector<16x16xf32>
    %c112 = arith.constant 112 : index
    %112 = memref.load %arg1[%c112] : memref<288xf32, #tpu.memory_space<smem>>
    %113 = vector.broadcast %112 : f32 to vector<16x16xf32>
    %114 = arith.mulf %113, %99 : vector<16x16xf32>
    %115 = arith.addf %97, %114 : vector<16x16xf32>
    %c0_50 = arith.constant 0 : index
    %c1_51 = arith.constant 1 : index
    %c2_52 = arith.constant 2 : index
    %116 = vector.load %arg5[%c0_50, %c1_51, %c2_52] : memref<4x18x18xf32, #tpu.memory_space<vmem>>, vector<1x16x16xf32>
    %117 = vector.shape_cast %116 : vector<1x16x16xf32> to vector<16x16xf32>
    %c5 = arith.constant 5 : index
    %118 = memref.load %arg1[%c5] : memref<288xf32, #tpu.memory_space<smem>>
    %119 = vector.broadcast %118 : f32 to vector<16x16xf32>
    %120 = arith.mulf %119, %117 : vector<16x16xf32>
    %121 = arith.addf %103, %120 : vector<16x16xf32>
    %c41 = arith.constant 41 : index
    %122 = memref.load %arg1[%c41] : memref<288xf32, #tpu.memory_space<smem>>
    %123 = vector.broadcast %122 : f32 to vector<16x16xf32>
    %124 = arith.mulf %123, %117 : vector<16x16xf32>
    %125 = arith.addf %107, %124 : vector<16x16xf32>
    %c77 = arith.constant 77 : index
    %126 = memref.load %arg1[%c77] : memref<288xf32, #tpu.memory_space<smem>>
    %127 = vector.broadcast %126 : f32 to vector<16x16xf32>
    %128 = arith.mulf %127, %117 : vector<16x16xf32>
    %129 = arith.addf %111, %128 : vector<16x16xf32>
    %c113 = arith.constant 113 : index
    %130 = memref.load %arg1[%c113] : memref<288xf32, #tpu.memory_space<smem>>
    %131 = vector.broadcast %130 : f32 to vector<16x16xf32>
    %132 = arith.mulf %131, %117 : vector<16x16xf32>
    %133 = arith.addf %115, %132 : vector<16x16xf32>
    %c0_53 = arith.constant 0 : index
    %c2_54 = arith.constant 2 : index
    %c0_55 = arith.constant 0 : index
    %134 = vector.load %arg5[%c0_53, %c2_54, %c0_55] : memref<4x18x18xf32, #tpu.memory_space<vmem>>, vector<1x16x16xf32>
    %135 = vector.shape_cast %134 : vector<1x16x16xf32> to vector<16x16xf32>
    %c6 = arith.constant 6 : index
    %136 = memref.load %arg1[%c6] : memref<288xf32, #tpu.memory_space<smem>>
    %137 = vector.broadcast %136 : f32 to vector<16x16xf32>
    %138 = arith.mulf %137, %135 : vector<16x16xf32>
    %139 = arith.addf %121, %138 : vector<16x16xf32>
    %c42 = arith.constant 42 : index
    %140 = memref.load %arg1[%c42] : memref<288xf32, #tpu.memory_space<smem>>
    %141 = vector.broadcast %140 : f32 to vector<16x16xf32>
    %142 = arith.mulf %141, %135 : vector<16x16xf32>
    %143 = arith.addf %125, %142 : vector<16x16xf32>
    %c78 = arith.constant 78 : index
    %144 = memref.load %arg1[%c78] : memref<288xf32, #tpu.memory_space<smem>>
    %145 = vector.broadcast %144 : f32 to vector<16x16xf32>
    %146 = arith.mulf %145, %135 : vector<16x16xf32>
    %147 = arith.addf %129, %146 : vector<16x16xf32>
    %c114 = arith.constant 114 : index
    %148 = memref.load %arg1[%c114] : memref<288xf32, #tpu.memory_space<smem>>
    %149 = vector.broadcast %148 : f32 to vector<16x16xf32>
    %150 = arith.mulf %149, %135 : vector<16x16xf32>
    %151 = arith.addf %133, %150 : vector<16x16xf32>
    %c0_56 = arith.constant 0 : index
    %c2_57 = arith.constant 2 : index
    %c1_58 = arith.constant 1 : index
    %152 = vector.load %arg5[%c0_56, %c2_57, %c1_58] : memref<4x18x18xf32, #tpu.memory_space<vmem>>, vector<1x16x16xf32>
    %153 = vector.shape_cast %152 : vector<1x16x16xf32> to vector<16x16xf32>
    %c7 = arith.constant 7 : index
    %154 = memref.load %arg1[%c7] : memref<288xf32, #tpu.memory_space<smem>>
    %155 = vector.broadcast %154 : f32 to vector<16x16xf32>
    %156 = arith.mulf %155, %153 : vector<16x16xf32>
    %157 = arith.addf %139, %156 : vector<16x16xf32>
    %c43 = arith.constant 43 : index
    %158 = memref.load %arg1[%c43] : memref<288xf32, #tpu.memory_space<smem>>
    %159 = vector.broadcast %158 : f32 to vector<16x16xf32>
    %160 = arith.mulf %159, %153 : vector<16x16xf32>
    %161 = arith.addf %143, %160 : vector<16x16xf32>
    %c79 = arith.constant 79 : index
    %162 = memref.load %arg1[%c79] : memref<288xf32, #tpu.memory_space<smem>>
    %163 = vector.broadcast %162 : f32 to vector<16x16xf32>
    %164 = arith.mulf %163, %153 : vector<16x16xf32>
    %165 = arith.addf %147, %164 : vector<16x16xf32>
    %c115 = arith.constant 115 : index
    %166 = memref.load %arg1[%c115] : memref<288xf32, #tpu.memory_space<smem>>
    %167 = vector.broadcast %166 : f32 to vector<16x16xf32>
    %168 = arith.mulf %167, %153 : vector<16x16xf32>
    %169 = arith.addf %151, %168 : vector<16x16xf32>
    %c0_59 = arith.constant 0 : index
    %c2_60 = arith.constant 2 : index
    %c2_61 = arith.constant 2 : index
    %170 = vector.load %arg5[%c0_59, %c2_60, %c2_61] : memref<4x18x18xf32, #tpu.memory_space<vmem>>, vector<1x16x16xf32>
    %171 = vector.shape_cast %170 : vector<1x16x16xf32> to vector<16x16xf32>
    %c8 = arith.constant 8 : index
    %172 = memref.load %arg1[%c8] : memref<288xf32, #tpu.memory_space<smem>>
    %173 = vector.broadcast %172 : f32 to vector<16x16xf32>
    %174 = arith.mulf %173, %171 : vector<16x16xf32>
    %175 = arith.addf %157, %174 : vector<16x16xf32>
    %c44 = arith.constant 44 : index
    %176 = memref.load %arg1[%c44] : memref<288xf32, #tpu.memory_space<smem>>
    %177 = vector.broadcast %176 : f32 to vector<16x16xf32>
    %178 = arith.mulf %177, %171 : vector<16x16xf32>
    %179 = arith.addf %161, %178 : vector<16x16xf32>
    %c80 = arith.constant 80 : index
    %180 = memref.load %arg1[%c80] : memref<288xf32, #tpu.memory_space<smem>>
    %181 = vector.broadcast %180 : f32 to vector<16x16xf32>
    %182 = arith.mulf %181, %171 : vector<16x16xf32>
    %183 = arith.addf %165, %182 : vector<16x16xf32>
    %c116 = arith.constant 116 : index
    %184 = memref.load %arg1[%c116] : memref<288xf32, #tpu.memory_space<smem>>
    %185 = vector.broadcast %184 : f32 to vector<16x16xf32>
    %186 = arith.mulf %185, %171 : vector<16x16xf32>
    %187 = arith.addf %169, %186 : vector<16x16xf32>
    %c1_62 = arith.constant 1 : index
    %c0_63 = arith.constant 0 : index
    %c0_64 = arith.constant 0 : index
    %188 = vector.load %arg5[%c1_62, %c0_63, %c0_64] : memref<4x18x18xf32, #tpu.memory_space<vmem>>, vector<1x16x16xf32>
    %189 = vector.shape_cast %188 : vector<1x16x16xf32> to vector<16x16xf32>
    %c9 = arith.constant 9 : index
    %190 = memref.load %arg1[%c9] : memref<288xf32, #tpu.memory_space<smem>>
    %191 = vector.broadcast %190 : f32 to vector<16x16xf32>
    %192 = arith.mulf %191, %189 : vector<16x16xf32>
    %193 = arith.addf %175, %192 : vector<16x16xf32>
    %c45 = arith.constant 45 : index
    %194 = memref.load %arg1[%c45] : memref<288xf32, #tpu.memory_space<smem>>
    %195 = vector.broadcast %194 : f32 to vector<16x16xf32>
    %196 = arith.mulf %195, %189 : vector<16x16xf32>
    %197 = arith.addf %179, %196 : vector<16x16xf32>
    %c81 = arith.constant 81 : index
    %198 = memref.load %arg1[%c81] : memref<288xf32, #tpu.memory_space<smem>>
    %199 = vector.broadcast %198 : f32 to vector<16x16xf32>
    %200 = arith.mulf %199, %189 : vector<16x16xf32>
    %201 = arith.addf %183, %200 : vector<16x16xf32>
    %c117 = arith.constant 117 : index
    %202 = memref.load %arg1[%c117] : memref<288xf32, #tpu.memory_space<smem>>
    %203 = vector.broadcast %202 : f32 to vector<16x16xf32>
    %204 = arith.mulf %203, %189 : vector<16x16xf32>
    %205 = arith.addf %187, %204 : vector<16x16xf32>
    %c1_65 = arith.constant 1 : index
    %c0_66 = arith.constant 0 : index
    %c1_67 = arith.constant 1 : index
    %206 = vector.load %arg5[%c1_65, %c0_66, %c1_67] : memref<4x18x18xf32, #tpu.memory_space<vmem>>, vector<1x16x16xf32>
    %207 = vector.shape_cast %206 : vector<1x16x16xf32> to vector<16x16xf32>
    %c10 = arith.constant 10 : index
    %208 = memref.load %arg1[%c10] : memref<288xf32, #tpu.memory_space<smem>>
    %209 = vector.broadcast %208 : f32 to vector<16x16xf32>
    %210 = arith.mulf %209, %207 : vector<16x16xf32>
    %211 = arith.addf %193, %210 : vector<16x16xf32>
    %c46 = arith.constant 46 : index
    %212 = memref.load %arg1[%c46] : memref<288xf32, #tpu.memory_space<smem>>
    %213 = vector.broadcast %212 : f32 to vector<16x16xf32>
    %214 = arith.mulf %213, %207 : vector<16x16xf32>
    %215 = arith.addf %197, %214 : vector<16x16xf32>
    %c82 = arith.constant 82 : index
    %216 = memref.load %arg1[%c82] : memref<288xf32, #tpu.memory_space<smem>>
    %217 = vector.broadcast %216 : f32 to vector<16x16xf32>
    %218 = arith.mulf %217, %207 : vector<16x16xf32>
    %219 = arith.addf %201, %218 : vector<16x16xf32>
    %c118 = arith.constant 118 : index
    %220 = memref.load %arg1[%c118] : memref<288xf32, #tpu.memory_space<smem>>
    %221 = vector.broadcast %220 : f32 to vector<16x16xf32>
    %222 = arith.mulf %221, %207 : vector<16x16xf32>
    %223 = arith.addf %205, %222 : vector<16x16xf32>
    %c1_68 = arith.constant 1 : index
    %c0_69 = arith.constant 0 : index
    %c2_70 = arith.constant 2 : index
    %224 = vector.load %arg5[%c1_68, %c0_69, %c2_70] : memref<4x18x18xf32, #tpu.memory_space<vmem>>, vector<1x16x16xf32>
    %225 = vector.shape_cast %224 : vector<1x16x16xf32> to vector<16x16xf32>
    %c11 = arith.constant 11 : index
    %226 = memref.load %arg1[%c11] : memref<288xf32, #tpu.memory_space<smem>>
    %227 = vector.broadcast %226 : f32 to vector<16x16xf32>
    %228 = arith.mulf %227, %225 : vector<16x16xf32>
    %229 = arith.addf %211, %228 : vector<16x16xf32>
    %c47 = arith.constant 47 : index
    %230 = memref.load %arg1[%c47] : memref<288xf32, #tpu.memory_space<smem>>
    %231 = vector.broadcast %230 : f32 to vector<16x16xf32>
    %232 = arith.mulf %231, %225 : vector<16x16xf32>
    %233 = arith.addf %215, %232 : vector<16x16xf32>
    %c83 = arith.constant 83 : index
    %234 = memref.load %arg1[%c83] : memref<288xf32, #tpu.memory_space<smem>>
    %235 = vector.broadcast %234 : f32 to vector<16x16xf32>
    %236 = arith.mulf %235, %225 : vector<16x16xf32>
    %237 = arith.addf %219, %236 : vector<16x16xf32>
    %c119 = arith.constant 119 : index
    %238 = memref.load %arg1[%c119] : memref<288xf32, #tpu.memory_space<smem>>
    %239 = vector.broadcast %238 : f32 to vector<16x16xf32>
    %240 = arith.mulf %239, %225 : vector<16x16xf32>
    %241 = arith.addf %223, %240 : vector<16x16xf32>
    %c1_71 = arith.constant 1 : index
    %c1_72 = arith.constant 1 : index
    %c0_73 = arith.constant 0 : index
    %242 = vector.load %arg5[%c1_71, %c1_72, %c0_73] : memref<4x18x18xf32, #tpu.memory_space<vmem>>, vector<1x16x16xf32>
    %243 = vector.shape_cast %242 : vector<1x16x16xf32> to vector<16x16xf32>
    %c12 = arith.constant 12 : index
    %244 = memref.load %arg1[%c12] : memref<288xf32, #tpu.memory_space<smem>>
    %245 = vector.broadcast %244 : f32 to vector<16x16xf32>
    %246 = arith.mulf %245, %243 : vector<16x16xf32>
    %247 = arith.addf %229, %246 : vector<16x16xf32>
    %c48 = arith.constant 48 : index
    %248 = memref.load %arg1[%c48] : memref<288xf32, #tpu.memory_space<smem>>
    %249 = vector.broadcast %248 : f32 to vector<16x16xf32>
    %250 = arith.mulf %249, %243 : vector<16x16xf32>
    %251 = arith.addf %233, %250 : vector<16x16xf32>
    %c84 = arith.constant 84 : index
    %252 = memref.load %arg1[%c84] : memref<288xf32, #tpu.memory_space<smem>>
    %253 = vector.broadcast %252 : f32 to vector<16x16xf32>
    %254 = arith.mulf %253, %243 : vector<16x16xf32>
    %255 = arith.addf %237, %254 : vector<16x16xf32>
    %c120 = arith.constant 120 : index
    %256 = memref.load %arg1[%c120] : memref<288xf32, #tpu.memory_space<smem>>
    %257 = vector.broadcast %256 : f32 to vector<16x16xf32>
    %258 = arith.mulf %257, %243 : vector<16x16xf32>
    %259 = arith.addf %241, %258 : vector<16x16xf32>
    %c1_74 = arith.constant 1 : index
    %c1_75 = arith.constant 1 : index
    %c1_76 = arith.constant 1 : index
    %260 = vector.load %arg5[%c1_74, %c1_75, %c1_76] : memref<4x18x18xf32, #tpu.memory_space<vmem>>, vector<1x16x16xf32>
    %261 = vector.shape_cast %260 : vector<1x16x16xf32> to vector<16x16xf32>
    %c13 = arith.constant 13 : index
    %262 = memref.load %arg1[%c13] : memref<288xf32, #tpu.memory_space<smem>>
    %263 = vector.broadcast %262 : f32 to vector<16x16xf32>
    %264 = arith.mulf %263, %261 : vector<16x16xf32>
    %265 = arith.addf %247, %264 : vector<16x16xf32>
    %c49 = arith.constant 49 : index
    %266 = memref.load %arg1[%c49] : memref<288xf32, #tpu.memory_space<smem>>
    %267 = vector.broadcast %266 : f32 to vector<16x16xf32>
    %268 = arith.mulf %267, %261 : vector<16x16xf32>
    %269 = arith.addf %251, %268 : vector<16x16xf32>
    %c85 = arith.constant 85 : index
    %270 = memref.load %arg1[%c85] : memref<288xf32, #tpu.memory_space<smem>>
    %271 = vector.broadcast %270 : f32 to vector<16x16xf32>
    %272 = arith.mulf %271, %261 : vector<16x16xf32>
    %273 = arith.addf %255, %272 : vector<16x16xf32>
    %c121 = arith.constant 121 : index
    %274 = memref.load %arg1[%c121] : memref<288xf32, #tpu.memory_space<smem>>
    %275 = vector.broadcast %274 : f32 to vector<16x16xf32>
    %276 = arith.mulf %275, %261 : vector<16x16xf32>
    %277 = arith.addf %259, %276 : vector<16x16xf32>
    %c1_77 = arith.constant 1 : index
    %c1_78 = arith.constant 1 : index
    %c2_79 = arith.constant 2 : index
    %278 = vector.load %arg5[%c1_77, %c1_78, %c2_79] : memref<4x18x18xf32, #tpu.memory_space<vmem>>, vector<1x16x16xf32>
    %279 = vector.shape_cast %278 : vector<1x16x16xf32> to vector<16x16xf32>
    %c14 = arith.constant 14 : index
    %280 = memref.load %arg1[%c14] : memref<288xf32, #tpu.memory_space<smem>>
    %281 = vector.broadcast %280 : f32 to vector<16x16xf32>
    %282 = arith.mulf %281, %279 : vector<16x16xf32>
    %283 = arith.addf %265, %282 : vector<16x16xf32>
    %c50 = arith.constant 50 : index
    %284 = memref.load %arg1[%c50] : memref<288xf32, #tpu.memory_space<smem>>
    %285 = vector.broadcast %284 : f32 to vector<16x16xf32>
    %286 = arith.mulf %285, %279 : vector<16x16xf32>
    %287 = arith.addf %269, %286 : vector<16x16xf32>
    %c86 = arith.constant 86 : index
    %288 = memref.load %arg1[%c86] : memref<288xf32, #tpu.memory_space<smem>>
    %289 = vector.broadcast %288 : f32 to vector<16x16xf32>
    %290 = arith.mulf %289, %279 : vector<16x16xf32>
    %291 = arith.addf %273, %290 : vector<16x16xf32>
    %c122 = arith.constant 122 : index
    %292 = memref.load %arg1[%c122] : memref<288xf32, #tpu.memory_space<smem>>
    %293 = vector.broadcast %292 : f32 to vector<16x16xf32>
    %294 = arith.mulf %293, %279 : vector<16x16xf32>
    %295 = arith.addf %277, %294 : vector<16x16xf32>
    %c1_80 = arith.constant 1 : index
    %c2_81 = arith.constant 2 : index
    %c0_82 = arith.constant 0 : index
    %296 = vector.load %arg5[%c1_80, %c2_81, %c0_82] : memref<4x18x18xf32, #tpu.memory_space<vmem>>, vector<1x16x16xf32>
    %297 = vector.shape_cast %296 : vector<1x16x16xf32> to vector<16x16xf32>
    %c15 = arith.constant 15 : index
    %298 = memref.load %arg1[%c15] : memref<288xf32, #tpu.memory_space<smem>>
    %299 = vector.broadcast %298 : f32 to vector<16x16xf32>
    %300 = arith.mulf %299, %297 : vector<16x16xf32>
    %301 = arith.addf %283, %300 : vector<16x16xf32>
    %c51 = arith.constant 51 : index
    %302 = memref.load %arg1[%c51] : memref<288xf32, #tpu.memory_space<smem>>
    %303 = vector.broadcast %302 : f32 to vector<16x16xf32>
    %304 = arith.mulf %303, %297 : vector<16x16xf32>
    %305 = arith.addf %287, %304 : vector<16x16xf32>
    %c87 = arith.constant 87 : index
    %306 = memref.load %arg1[%c87] : memref<288xf32, #tpu.memory_space<smem>>
    %307 = vector.broadcast %306 : f32 to vector<16x16xf32>
    %308 = arith.mulf %307, %297 : vector<16x16xf32>
    %309 = arith.addf %291, %308 : vector<16x16xf32>
    %c123 = arith.constant 123 : index
    %310 = memref.load %arg1[%c123] : memref<288xf32, #tpu.memory_space<smem>>
    %311 = vector.broadcast %310 : f32 to vector<16x16xf32>
    %312 = arith.mulf %311, %297 : vector<16x16xf32>
    %313 = arith.addf %295, %312 : vector<16x16xf32>
    %c1_83 = arith.constant 1 : index
    %c2_84 = arith.constant 2 : index
    %c1_85 = arith.constant 1 : index
    %314 = vector.load %arg5[%c1_83, %c2_84, %c1_85] : memref<4x18x18xf32, #tpu.memory_space<vmem>>, vector<1x16x16xf32>
    %315 = vector.shape_cast %314 : vector<1x16x16xf32> to vector<16x16xf32>
    %c16 = arith.constant 16 : index
    %316 = memref.load %arg1[%c16] : memref<288xf32, #tpu.memory_space<smem>>
    %317 = vector.broadcast %316 : f32 to vector<16x16xf32>
    %318 = arith.mulf %317, %315 : vector<16x16xf32>
    %319 = arith.addf %301, %318 : vector<16x16xf32>
    %c52 = arith.constant 52 : index
    %320 = memref.load %arg1[%c52] : memref<288xf32, #tpu.memory_space<smem>>
    %321 = vector.broadcast %320 : f32 to vector<16x16xf32>
    %322 = arith.mulf %321, %315 : vector<16x16xf32>
    %323 = arith.addf %305, %322 : vector<16x16xf32>
    %c88 = arith.constant 88 : index
    %324 = memref.load %arg1[%c88] : memref<288xf32, #tpu.memory_space<smem>>
    %325 = vector.broadcast %324 : f32 to vector<16x16xf32>
    %326 = arith.mulf %325, %315 : vector<16x16xf32>
    %327 = arith.addf %309, %326 : vector<16x16xf32>
    %c124 = arith.constant 124 : index
    %328 = memref.load %arg1[%c124] : memref<288xf32, #tpu.memory_space<smem>>
    %329 = vector.broadcast %328 : f32 to vector<16x16xf32>
    %330 = arith.mulf %329, %315 : vector<16x16xf32>
    %331 = arith.addf %313, %330 : vector<16x16xf32>
    %c1_86 = arith.constant 1 : index
    %c2_87 = arith.constant 2 : index
    %c2_88 = arith.constant 2 : index
    %332 = vector.load %arg5[%c1_86, %c2_87, %c2_88] : memref<4x18x18xf32, #tpu.memory_space<vmem>>, vector<1x16x16xf32>
    %333 = vector.shape_cast %332 : vector<1x16x16xf32> to vector<16x16xf32>
    %c17 = arith.constant 17 : index
    %334 = memref.load %arg1[%c17] : memref<288xf32, #tpu.memory_space<smem>>
    %335 = vector.broadcast %334 : f32 to vector<16x16xf32>
    %336 = arith.mulf %335, %333 : vector<16x16xf32>
    %337 = arith.addf %319, %336 : vector<16x16xf32>
    %c53 = arith.constant 53 : index
    %338 = memref.load %arg1[%c53] : memref<288xf32, #tpu.memory_space<smem>>
    %339 = vector.broadcast %338 : f32 to vector<16x16xf32>
    %340 = arith.mulf %339, %333 : vector<16x16xf32>
    %341 = arith.addf %323, %340 : vector<16x16xf32>
    %c89 = arith.constant 89 : index
    %342 = memref.load %arg1[%c89] : memref<288xf32, #tpu.memory_space<smem>>
    %343 = vector.broadcast %342 : f32 to vector<16x16xf32>
    %344 = arith.mulf %343, %333 : vector<16x16xf32>
    %345 = arith.addf %327, %344 : vector<16x16xf32>
    %c125 = arith.constant 125 : index
    %346 = memref.load %arg1[%c125] : memref<288xf32, #tpu.memory_space<smem>>
    %347 = vector.broadcast %346 : f32 to vector<16x16xf32>
    %348 = arith.mulf %347, %333 : vector<16x16xf32>
    %349 = arith.addf %331, %348 : vector<16x16xf32>
    %c2_89 = arith.constant 2 : index
    %c0_90 = arith.constant 0 : index
    %c0_91 = arith.constant 0 : index
    %350 = vector.load %arg5[%c2_89, %c0_90, %c0_91] : memref<4x18x18xf32, #tpu.memory_space<vmem>>, vector<1x16x16xf32>
    %351 = vector.shape_cast %350 : vector<1x16x16xf32> to vector<16x16xf32>
    %c18 = arith.constant 18 : index
    %352 = memref.load %arg1[%c18] : memref<288xf32, #tpu.memory_space<smem>>
    %353 = vector.broadcast %352 : f32 to vector<16x16xf32>
    %354 = arith.mulf %353, %351 : vector<16x16xf32>
    %355 = arith.addf %337, %354 : vector<16x16xf32>
    %c54 = arith.constant 54 : index
    %356 = memref.load %arg1[%c54] : memref<288xf32, #tpu.memory_space<smem>>
    %357 = vector.broadcast %356 : f32 to vector<16x16xf32>
    %358 = arith.mulf %357, %351 : vector<16x16xf32>
    %359 = arith.addf %341, %358 : vector<16x16xf32>
    %c90 = arith.constant 90 : index
    %360 = memref.load %arg1[%c90] : memref<288xf32, #tpu.memory_space<smem>>
    %361 = vector.broadcast %360 : f32 to vector<16x16xf32>
    %362 = arith.mulf %361, %351 : vector<16x16xf32>
    %363 = arith.addf %345, %362 : vector<16x16xf32>
    %c126 = arith.constant 126 : index
    %364 = memref.load %arg1[%c126] : memref<288xf32, #tpu.memory_space<smem>>
    %365 = vector.broadcast %364 : f32 to vector<16x16xf32>
    %366 = arith.mulf %365, %351 : vector<16x16xf32>
    %367 = arith.addf %349, %366 : vector<16x16xf32>
    %c2_92 = arith.constant 2 : index
    %c0_93 = arith.constant 0 : index
    %c1_94 = arith.constant 1 : index
    %368 = vector.load %arg5[%c2_92, %c0_93, %c1_94] : memref<4x18x18xf32, #tpu.memory_space<vmem>>, vector<1x16x16xf32>
    %369 = vector.shape_cast %368 : vector<1x16x16xf32> to vector<16x16xf32>
    %c19 = arith.constant 19 : index
    %370 = memref.load %arg1[%c19] : memref<288xf32, #tpu.memory_space<smem>>
    %371 = vector.broadcast %370 : f32 to vector<16x16xf32>
    %372 = arith.mulf %371, %369 : vector<16x16xf32>
    %373 = arith.addf %355, %372 : vector<16x16xf32>
    %c55 = arith.constant 55 : index
    %374 = memref.load %arg1[%c55] : memref<288xf32, #tpu.memory_space<smem>>
    %375 = vector.broadcast %374 : f32 to vector<16x16xf32>
    %376 = arith.mulf %375, %369 : vector<16x16xf32>
    %377 = arith.addf %359, %376 : vector<16x16xf32>
    %c91 = arith.constant 91 : index
    %378 = memref.load %arg1[%c91] : memref<288xf32, #tpu.memory_space<smem>>
    %379 = vector.broadcast %378 : f32 to vector<16x16xf32>
    %380 = arith.mulf %379, %369 : vector<16x16xf32>
    %381 = arith.addf %363, %380 : vector<16x16xf32>
    %c127 = arith.constant 127 : index
    %382 = memref.load %arg1[%c127] : memref<288xf32, #tpu.memory_space<smem>>
    %383 = vector.broadcast %382 : f32 to vector<16x16xf32>
    %384 = arith.mulf %383, %369 : vector<16x16xf32>
    %385 = arith.addf %367, %384 : vector<16x16xf32>
    %c2_95 = arith.constant 2 : index
    %c0_96 = arith.constant 0 : index
    %c2_97 = arith.constant 2 : index
    %386 = vector.load %arg5[%c2_95, %c0_96, %c2_97] : memref<4x18x18xf32, #tpu.memory_space<vmem>>, vector<1x16x16xf32>
    %387 = vector.shape_cast %386 : vector<1x16x16xf32> to vector<16x16xf32>
    %c20 = arith.constant 20 : index
    %388 = memref.load %arg1[%c20] : memref<288xf32, #tpu.memory_space<smem>>
    %389 = vector.broadcast %388 : f32 to vector<16x16xf32>
    %390 = arith.mulf %389, %387 : vector<16x16xf32>
    %391 = arith.addf %373, %390 : vector<16x16xf32>
    %c56 = arith.constant 56 : index
    %392 = memref.load %arg1[%c56] : memref<288xf32, #tpu.memory_space<smem>>
    %393 = vector.broadcast %392 : f32 to vector<16x16xf32>
    %394 = arith.mulf %393, %387 : vector<16x16xf32>
    %395 = arith.addf %377, %394 : vector<16x16xf32>
    %c92 = arith.constant 92 : index
    %396 = memref.load %arg1[%c92] : memref<288xf32, #tpu.memory_space<smem>>
    %397 = vector.broadcast %396 : f32 to vector<16x16xf32>
    %398 = arith.mulf %397, %387 : vector<16x16xf32>
    %399 = arith.addf %381, %398 : vector<16x16xf32>
    %c128 = arith.constant 128 : index
    %400 = memref.load %arg1[%c128] : memref<288xf32, #tpu.memory_space<smem>>
    %401 = vector.broadcast %400 : f32 to vector<16x16xf32>
    %402 = arith.mulf %401, %387 : vector<16x16xf32>
    %403 = arith.addf %385, %402 : vector<16x16xf32>
    %c2_98 = arith.constant 2 : index
    %c1_99 = arith.constant 1 : index
    %c0_100 = arith.constant 0 : index
    %404 = vector.load %arg5[%c2_98, %c1_99, %c0_100] : memref<4x18x18xf32, #tpu.memory_space<vmem>>, vector<1x16x16xf32>
    %405 = vector.shape_cast %404 : vector<1x16x16xf32> to vector<16x16xf32>
    %c21 = arith.constant 21 : index
    %406 = memref.load %arg1[%c21] : memref<288xf32, #tpu.memory_space<smem>>
    %407 = vector.broadcast %406 : f32 to vector<16x16xf32>
    %408 = arith.mulf %407, %405 : vector<16x16xf32>
    %409 = arith.addf %391, %408 : vector<16x16xf32>
    %c57 = arith.constant 57 : index
    %410 = memref.load %arg1[%c57] : memref<288xf32, #tpu.memory_space<smem>>
    %411 = vector.broadcast %410 : f32 to vector<16x16xf32>
    %412 = arith.mulf %411, %405 : vector<16x16xf32>
    %413 = arith.addf %395, %412 : vector<16x16xf32>
    %c93 = arith.constant 93 : index
    %414 = memref.load %arg1[%c93] : memref<288xf32, #tpu.memory_space<smem>>
    %415 = vector.broadcast %414 : f32 to vector<16x16xf32>
    %416 = arith.mulf %415, %405 : vector<16x16xf32>
    %417 = arith.addf %399, %416 : vector<16x16xf32>
    %c129 = arith.constant 129 : index
    %418 = memref.load %arg1[%c129] : memref<288xf32, #tpu.memory_space<smem>>
    %419 = vector.broadcast %418 : f32 to vector<16x16xf32>
    %420 = arith.mulf %419, %405 : vector<16x16xf32>
    %421 = arith.addf %403, %420 : vector<16x16xf32>
    %c2_101 = arith.constant 2 : index
    %c1_102 = arith.constant 1 : index
    %c1_103 = arith.constant 1 : index
    %422 = vector.load %arg5[%c2_101, %c1_102, %c1_103] : memref<4x18x18xf32, #tpu.memory_space<vmem>>, vector<1x16x16xf32>
    %423 = vector.shape_cast %422 : vector<1x16x16xf32> to vector<16x16xf32>
    %c22 = arith.constant 22 : index
    %424 = memref.load %arg1[%c22] : memref<288xf32, #tpu.memory_space<smem>>
    %425 = vector.broadcast %424 : f32 to vector<16x16xf32>
    %426 = arith.mulf %425, %423 : vector<16x16xf32>
    %427 = arith.addf %409, %426 : vector<16x16xf32>
    %c58 = arith.constant 58 : index
    %428 = memref.load %arg1[%c58] : memref<288xf32, #tpu.memory_space<smem>>
    %429 = vector.broadcast %428 : f32 to vector<16x16xf32>
    %430 = arith.mulf %429, %423 : vector<16x16xf32>
    %431 = arith.addf %413, %430 : vector<16x16xf32>
    %c94 = arith.constant 94 : index
    %432 = memref.load %arg1[%c94] : memref<288xf32, #tpu.memory_space<smem>>
    %433 = vector.broadcast %432 : f32 to vector<16x16xf32>
    %434 = arith.mulf %433, %423 : vector<16x16xf32>
    %435 = arith.addf %417, %434 : vector<16x16xf32>
    %c130 = arith.constant 130 : index
    %436 = memref.load %arg1[%c130] : memref<288xf32, #tpu.memory_space<smem>>
    %437 = vector.broadcast %436 : f32 to vector<16x16xf32>
    %438 = arith.mulf %437, %423 : vector<16x16xf32>
    %439 = arith.addf %421, %438 : vector<16x16xf32>
    %c2_104 = arith.constant 2 : index
    %c1_105 = arith.constant 1 : index
    %c2_106 = arith.constant 2 : index
    %440 = vector.load %arg5[%c2_104, %c1_105, %c2_106] : memref<4x18x18xf32, #tpu.memory_space<vmem>>, vector<1x16x16xf32>
    %441 = vector.shape_cast %440 : vector<1x16x16xf32> to vector<16x16xf32>
    %c23 = arith.constant 23 : index
    %442 = memref.load %arg1[%c23] : memref<288xf32, #tpu.memory_space<smem>>
    %443 = vector.broadcast %442 : f32 to vector<16x16xf32>
    %444 = arith.mulf %443, %441 : vector<16x16xf32>
    %445 = arith.addf %427, %444 : vector<16x16xf32>
    %c59 = arith.constant 59 : index
    %446 = memref.load %arg1[%c59] : memref<288xf32, #tpu.memory_space<smem>>
    %447 = vector.broadcast %446 : f32 to vector<16x16xf32>
    %448 = arith.mulf %447, %441 : vector<16x16xf32>
    %449 = arith.addf %431, %448 : vector<16x16xf32>
    %c95 = arith.constant 95 : index
    %450 = memref.load %arg1[%c95] : memref<288xf32, #tpu.memory_space<smem>>
    %451 = vector.broadcast %450 : f32 to vector<16x16xf32>
    %452 = arith.mulf %451, %441 : vector<16x16xf32>
    %453 = arith.addf %435, %452 : vector<16x16xf32>
    %c131 = arith.constant 131 : index
    %454 = memref.load %arg1[%c131] : memref<288xf32, #tpu.memory_space<smem>>
    %455 = vector.broadcast %454 : f32 to vector<16x16xf32>
    %456 = arith.mulf %455, %441 : vector<16x16xf32>
    %457 = arith.addf %439, %456 : vector<16x16xf32>
    %c2_107 = arith.constant 2 : index
    %c2_108 = arith.constant 2 : index
    %c0_109 = arith.constant 0 : index
    %458 = vector.load %arg5[%c2_107, %c2_108, %c0_109] : memref<4x18x18xf32, #tpu.memory_space<vmem>>, vector<1x16x16xf32>
    %459 = vector.shape_cast %458 : vector<1x16x16xf32> to vector<16x16xf32>
    %c24 = arith.constant 24 : index
    %460 = memref.load %arg1[%c24] : memref<288xf32, #tpu.memory_space<smem>>
    %461 = vector.broadcast %460 : f32 to vector<16x16xf32>
    %462 = arith.mulf %461, %459 : vector<16x16xf32>
    %463 = arith.addf %445, %462 : vector<16x16xf32>
    %c60 = arith.constant 60 : index
    %464 = memref.load %arg1[%c60] : memref<288xf32, #tpu.memory_space<smem>>
    %465 = vector.broadcast %464 : f32 to vector<16x16xf32>
    %466 = arith.mulf %465, %459 : vector<16x16xf32>
    %467 = arith.addf %449, %466 : vector<16x16xf32>
    %c96 = arith.constant 96 : index
    %468 = memref.load %arg1[%c96] : memref<288xf32, #tpu.memory_space<smem>>
    %469 = vector.broadcast %468 : f32 to vector<16x16xf32>
    %470 = arith.mulf %469, %459 : vector<16x16xf32>
    %471 = arith.addf %453, %470 : vector<16x16xf32>
    %c132 = arith.constant 132 : index
    %472 = memref.load %arg1[%c132] : memref<288xf32, #tpu.memory_space<smem>>
    %473 = vector.broadcast %472 : f32 to vector<16x16xf32>
    %474 = arith.mulf %473, %459 : vector<16x16xf32>
    %475 = arith.addf %457, %474 : vector<16x16xf32>
    %c2_110 = arith.constant 2 : index
    %c2_111 = arith.constant 2 : index
    %c1_112 = arith.constant 1 : index
    %476 = vector.load %arg5[%c2_110, %c2_111, %c1_112] : memref<4x18x18xf32, #tpu.memory_space<vmem>>, vector<1x16x16xf32>
    %477 = vector.shape_cast %476 : vector<1x16x16xf32> to vector<16x16xf32>
    %c25 = arith.constant 25 : index
    %478 = memref.load %arg1[%c25] : memref<288xf32, #tpu.memory_space<smem>>
    %479 = vector.broadcast %478 : f32 to vector<16x16xf32>
    %480 = arith.mulf %479, %477 : vector<16x16xf32>
    %481 = arith.addf %463, %480 : vector<16x16xf32>
    %c61 = arith.constant 61 : index
    %482 = memref.load %arg1[%c61] : memref<288xf32, #tpu.memory_space<smem>>
    %483 = vector.broadcast %482 : f32 to vector<16x16xf32>
    %484 = arith.mulf %483, %477 : vector<16x16xf32>
    %485 = arith.addf %467, %484 : vector<16x16xf32>
    %c97 = arith.constant 97 : index
    %486 = memref.load %arg1[%c97] : memref<288xf32, #tpu.memory_space<smem>>
    %487 = vector.broadcast %486 : f32 to vector<16x16xf32>
    %488 = arith.mulf %487, %477 : vector<16x16xf32>
    %489 = arith.addf %471, %488 : vector<16x16xf32>
    %c133 = arith.constant 133 : index
    %490 = memref.load %arg1[%c133] : memref<288xf32, #tpu.memory_space<smem>>
    %491 = vector.broadcast %490 : f32 to vector<16x16xf32>
    %492 = arith.mulf %491, %477 : vector<16x16xf32>
    %493 = arith.addf %475, %492 : vector<16x16xf32>
    %c2_113 = arith.constant 2 : index
    %c2_114 = arith.constant 2 : index
    %c2_115 = arith.constant 2 : index
    %494 = vector.load %arg5[%c2_113, %c2_114, %c2_115] : memref<4x18x18xf32, #tpu.memory_space<vmem>>, vector<1x16x16xf32>
    %495 = vector.shape_cast %494 : vector<1x16x16xf32> to vector<16x16xf32>
    %c26 = arith.constant 26 : index
    %496 = memref.load %arg1[%c26] : memref<288xf32, #tpu.memory_space<smem>>
    %497 = vector.broadcast %496 : f32 to vector<16x16xf32>
    %498 = arith.mulf %497, %495 : vector<16x16xf32>
    %499 = arith.addf %481, %498 : vector<16x16xf32>
    %c62 = arith.constant 62 : index
    %500 = memref.load %arg1[%c62] : memref<288xf32, #tpu.memory_space<smem>>
    %501 = vector.broadcast %500 : f32 to vector<16x16xf32>
    %502 = arith.mulf %501, %495 : vector<16x16xf32>
    %503 = arith.addf %485, %502 : vector<16x16xf32>
    %c98 = arith.constant 98 : index
    %504 = memref.load %arg1[%c98] : memref<288xf32, #tpu.memory_space<smem>>
    %505 = vector.broadcast %504 : f32 to vector<16x16xf32>
    %506 = arith.mulf %505, %495 : vector<16x16xf32>
    %507 = arith.addf %489, %506 : vector<16x16xf32>
    %c134 = arith.constant 134 : index
    %508 = memref.load %arg1[%c134] : memref<288xf32, #tpu.memory_space<smem>>
    %509 = vector.broadcast %508 : f32 to vector<16x16xf32>
    %510 = arith.mulf %509, %495 : vector<16x16xf32>
    %511 = arith.addf %493, %510 : vector<16x16xf32>
    %c3_116 = arith.constant 3 : index
    %c0_117 = arith.constant 0 : index
    %c0_118 = arith.constant 0 : index
    %512 = vector.load %arg5[%c3_116, %c0_117, %c0_118] : memref<4x18x18xf32, #tpu.memory_space<vmem>>, vector<1x16x16xf32>
    %513 = vector.shape_cast %512 : vector<1x16x16xf32> to vector<16x16xf32>
    %c27 = arith.constant 27 : index
    %514 = memref.load %arg1[%c27] : memref<288xf32, #tpu.memory_space<smem>>
    %515 = vector.broadcast %514 : f32 to vector<16x16xf32>
    %516 = arith.mulf %515, %513 : vector<16x16xf32>
    %517 = arith.addf %499, %516 : vector<16x16xf32>
    %c63 = arith.constant 63 : index
    %518 = memref.load %arg1[%c63] : memref<288xf32, #tpu.memory_space<smem>>
    %519 = vector.broadcast %518 : f32 to vector<16x16xf32>
    %520 = arith.mulf %519, %513 : vector<16x16xf32>
    %521 = arith.addf %503, %520 : vector<16x16xf32>
    %c99 = arith.constant 99 : index
    %522 = memref.load %arg1[%c99] : memref<288xf32, #tpu.memory_space<smem>>
    %523 = vector.broadcast %522 : f32 to vector<16x16xf32>
    %524 = arith.mulf %523, %513 : vector<16x16xf32>
    %525 = arith.addf %507, %524 : vector<16x16xf32>
    %c135 = arith.constant 135 : index
    %526 = memref.load %arg1[%c135] : memref<288xf32, #tpu.memory_space<smem>>
    %527 = vector.broadcast %526 : f32 to vector<16x16xf32>
    %528 = arith.mulf %527, %513 : vector<16x16xf32>
    %529 = arith.addf %511, %528 : vector<16x16xf32>
    %c3_119 = arith.constant 3 : index
    %c0_120 = arith.constant 0 : index
    %c1_121 = arith.constant 1 : index
    %530 = vector.load %arg5[%c3_119, %c0_120, %c1_121] : memref<4x18x18xf32, #tpu.memory_space<vmem>>, vector<1x16x16xf32>
    %531 = vector.shape_cast %530 : vector<1x16x16xf32> to vector<16x16xf32>
    %c28 = arith.constant 28 : index
    %532 = memref.load %arg1[%c28] : memref<288xf32, #tpu.memory_space<smem>>
    %533 = vector.broadcast %532 : f32 to vector<16x16xf32>
    %534 = arith.mulf %533, %531 : vector<16x16xf32>
    %535 = arith.addf %517, %534 : vector<16x16xf32>
    %c64 = arith.constant 64 : index
    %536 = memref.load %arg1[%c64] : memref<288xf32, #tpu.memory_space<smem>>
    %537 = vector.broadcast %536 : f32 to vector<16x16xf32>
    %538 = arith.mulf %537, %531 : vector<16x16xf32>
    %539 = arith.addf %521, %538 : vector<16x16xf32>
    %c100 = arith.constant 100 : index
    %540 = memref.load %arg1[%c100] : memref<288xf32, #tpu.memory_space<smem>>
    %541 = vector.broadcast %540 : f32 to vector<16x16xf32>
    %542 = arith.mulf %541, %531 : vector<16x16xf32>
    %543 = arith.addf %525, %542 : vector<16x16xf32>
    %c136 = arith.constant 136 : index
    %544 = memref.load %arg1[%c136] : memref<288xf32, #tpu.memory_space<smem>>
    %545 = vector.broadcast %544 : f32 to vector<16x16xf32>
    %546 = arith.mulf %545, %531 : vector<16x16xf32>
    %547 = arith.addf %529, %546 : vector<16x16xf32>
    %c3_122 = arith.constant 3 : index
    %c0_123 = arith.constant 0 : index
    %c2_124 = arith.constant 2 : index
    %548 = vector.load %arg5[%c3_122, %c0_123, %c2_124] : memref<4x18x18xf32, #tpu.memory_space<vmem>>, vector<1x16x16xf32>
    %549 = vector.shape_cast %548 : vector<1x16x16xf32> to vector<16x16xf32>
    %c29 = arith.constant 29 : index
    %550 = memref.load %arg1[%c29] : memref<288xf32, #tpu.memory_space<smem>>
    %551 = vector.broadcast %550 : f32 to vector<16x16xf32>
    %552 = arith.mulf %551, %549 : vector<16x16xf32>
    %553 = arith.addf %535, %552 : vector<16x16xf32>
    %c65 = arith.constant 65 : index
    %554 = memref.load %arg1[%c65] : memref<288xf32, #tpu.memory_space<smem>>
    %555 = vector.broadcast %554 : f32 to vector<16x16xf32>
    %556 = arith.mulf %555, %549 : vector<16x16xf32>
    %557 = arith.addf %539, %556 : vector<16x16xf32>
    %c101 = arith.constant 101 : index
    %558 = memref.load %arg1[%c101] : memref<288xf32, #tpu.memory_space<smem>>
    %559 = vector.broadcast %558 : f32 to vector<16x16xf32>
    %560 = arith.mulf %559, %549 : vector<16x16xf32>
    %561 = arith.addf %543, %560 : vector<16x16xf32>
    %c137 = arith.constant 137 : index
    %562 = memref.load %arg1[%c137] : memref<288xf32, #tpu.memory_space<smem>>
    %563 = vector.broadcast %562 : f32 to vector<16x16xf32>
    %564 = arith.mulf %563, %549 : vector<16x16xf32>
    %565 = arith.addf %547, %564 : vector<16x16xf32>
    %c3_125 = arith.constant 3 : index
    %c1_126 = arith.constant 1 : index
    %c0_127 = arith.constant 0 : index
    %566 = vector.load %arg5[%c3_125, %c1_126, %c0_127] : memref<4x18x18xf32, #tpu.memory_space<vmem>>, vector<1x16x16xf32>
    %567 = vector.shape_cast %566 : vector<1x16x16xf32> to vector<16x16xf32>
    %c30 = arith.constant 30 : index
    %568 = memref.load %arg1[%c30] : memref<288xf32, #tpu.memory_space<smem>>
    %569 = vector.broadcast %568 : f32 to vector<16x16xf32>
    %570 = arith.mulf %569, %567 : vector<16x16xf32>
    %571 = arith.addf %553, %570 : vector<16x16xf32>
    %c66 = arith.constant 66 : index
    %572 = memref.load %arg1[%c66] : memref<288xf32, #tpu.memory_space<smem>>
    %573 = vector.broadcast %572 : f32 to vector<16x16xf32>
    %574 = arith.mulf %573, %567 : vector<16x16xf32>
    %575 = arith.addf %557, %574 : vector<16x16xf32>
    %c102 = arith.constant 102 : index
    %576 = memref.load %arg1[%c102] : memref<288xf32, #tpu.memory_space<smem>>
    %577 = vector.broadcast %576 : f32 to vector<16x16xf32>
    %578 = arith.mulf %577, %567 : vector<16x16xf32>
    %579 = arith.addf %561, %578 : vector<16x16xf32>
    %c138 = arith.constant 138 : index
    %580 = memref.load %arg1[%c138] : memref<288xf32, #tpu.memory_space<smem>>
    %581 = vector.broadcast %580 : f32 to vector<16x16xf32>
    %582 = arith.mulf %581, %567 : vector<16x16xf32>
    %583 = arith.addf %565, %582 : vector<16x16xf32>
    %c3_128 = arith.constant 3 : index
    %c1_129 = arith.constant 1 : index
    %c1_130 = arith.constant 1 : index
    %584 = vector.load %arg5[%c3_128, %c1_129, %c1_130] : memref<4x18x18xf32, #tpu.memory_space<vmem>>, vector<1x16x16xf32>
    %585 = vector.shape_cast %584 : vector<1x16x16xf32> to vector<16x16xf32>
    %c31 = arith.constant 31 : index
    %586 = memref.load %arg1[%c31] : memref<288xf32, #tpu.memory_space<smem>>
    %587 = vector.broadcast %586 : f32 to vector<16x16xf32>
    %588 = arith.mulf %587, %585 : vector<16x16xf32>
    %589 = arith.addf %571, %588 : vector<16x16xf32>
    %c67 = arith.constant 67 : index
    %590 = memref.load %arg1[%c67] : memref<288xf32, #tpu.memory_space<smem>>
    %591 = vector.broadcast %590 : f32 to vector<16x16xf32>
    %592 = arith.mulf %591, %585 : vector<16x16xf32>
    %593 = arith.addf %575, %592 : vector<16x16xf32>
    %c103 = arith.constant 103 : index
    %594 = memref.load %arg1[%c103] : memref<288xf32, #tpu.memory_space<smem>>
    %595 = vector.broadcast %594 : f32 to vector<16x16xf32>
    %596 = arith.mulf %595, %585 : vector<16x16xf32>
    %597 = arith.addf %579, %596 : vector<16x16xf32>
    %c139 = arith.constant 139 : index
    %598 = memref.load %arg1[%c139] : memref<288xf32, #tpu.memory_space<smem>>
    %599 = vector.broadcast %598 : f32 to vector<16x16xf32>
    %600 = arith.mulf %599, %585 : vector<16x16xf32>
    %601 = arith.addf %583, %600 : vector<16x16xf32>
    %c3_131 = arith.constant 3 : index
    %c1_132 = arith.constant 1 : index
    %c2_133 = arith.constant 2 : index
    %602 = vector.load %arg5[%c3_131, %c1_132, %c2_133] : memref<4x18x18xf32, #tpu.memory_space<vmem>>, vector<1x16x16xf32>
    %603 = vector.shape_cast %602 : vector<1x16x16xf32> to vector<16x16xf32>
    %c32 = arith.constant 32 : index
    %604 = memref.load %arg1[%c32] : memref<288xf32, #tpu.memory_space<smem>>
    %605 = vector.broadcast %604 : f32 to vector<16x16xf32>
    %606 = arith.mulf %605, %603 : vector<16x16xf32>
    %607 = arith.addf %589, %606 : vector<16x16xf32>
    %c68 = arith.constant 68 : index
    %608 = memref.load %arg1[%c68] : memref<288xf32, #tpu.memory_space<smem>>
    %609 = vector.broadcast %608 : f32 to vector<16x16xf32>
    %610 = arith.mulf %609, %603 : vector<16x16xf32>
    %611 = arith.addf %593, %610 : vector<16x16xf32>
    %c104 = arith.constant 104 : index
    %612 = memref.load %arg1[%c104] : memref<288xf32, #tpu.memory_space<smem>>
    %613 = vector.broadcast %612 : f32 to vector<16x16xf32>
    %614 = arith.mulf %613, %603 : vector<16x16xf32>
    %615 = arith.addf %597, %614 : vector<16x16xf32>
    %c140 = arith.constant 140 : index
    %616 = memref.load %arg1[%c140] : memref<288xf32, #tpu.memory_space<smem>>
    %617 = vector.broadcast %616 : f32 to vector<16x16xf32>
    %618 = arith.mulf %617, %603 : vector<16x16xf32>
    %619 = arith.addf %601, %618 : vector<16x16xf32>
    %c3_134 = arith.constant 3 : index
    %c2_135 = arith.constant 2 : index
    %c0_136 = arith.constant 0 : index
    %620 = vector.load %arg5[%c3_134, %c2_135, %c0_136] : memref<4x18x18xf32, #tpu.memory_space<vmem>>, vector<1x16x16xf32>
    %621 = vector.shape_cast %620 : vector<1x16x16xf32> to vector<16x16xf32>
    %c33 = arith.constant 33 : index
    %622 = memref.load %arg1[%c33] : memref<288xf32, #tpu.memory_space<smem>>
    %623 = vector.broadcast %622 : f32 to vector<16x16xf32>
    %624 = arith.mulf %623, %621 : vector<16x16xf32>
    %625 = arith.addf %607, %624 : vector<16x16xf32>
    %c69 = arith.constant 69 : index
    %626 = memref.load %arg1[%c69] : memref<288xf32, #tpu.memory_space<smem>>
    %627 = vector.broadcast %626 : f32 to vector<16x16xf32>
    %628 = arith.mulf %627, %621 : vector<16x16xf32>
    %629 = arith.addf %611, %628 : vector<16x16xf32>
    %c105 = arith.constant 105 : index
    %630 = memref.load %arg1[%c105] : memref<288xf32, #tpu.memory_space<smem>>
    %631 = vector.broadcast %630 : f32 to vector<16x16xf32>
    %632 = arith.mulf %631, %621 : vector<16x16xf32>
    %633 = arith.addf %615, %632 : vector<16x16xf32>
    %c141 = arith.constant 141 : index
    %634 = memref.load %arg1[%c141] : memref<288xf32, #tpu.memory_space<smem>>
    %635 = vector.broadcast %634 : f32 to vector<16x16xf32>
    %636 = arith.mulf %635, %621 : vector<16x16xf32>
    %637 = arith.addf %619, %636 : vector<16x16xf32>
    %c3_137 = arith.constant 3 : index
    %c2_138 = arith.constant 2 : index
    %c1_139 = arith.constant 1 : index
    %638 = vector.load %arg5[%c3_137, %c2_138, %c1_139] : memref<4x18x18xf32, #tpu.memory_space<vmem>>, vector<1x16x16xf32>
    %639 = vector.shape_cast %638 : vector<1x16x16xf32> to vector<16x16xf32>
    %c34 = arith.constant 34 : index
    %640 = memref.load %arg1[%c34] : memref<288xf32, #tpu.memory_space<smem>>
    %641 = vector.broadcast %640 : f32 to vector<16x16xf32>
    %642 = arith.mulf %641, %639 : vector<16x16xf32>
    %643 = arith.addf %625, %642 : vector<16x16xf32>
    %c70 = arith.constant 70 : index
    %644 = memref.load %arg1[%c70] : memref<288xf32, #tpu.memory_space<smem>>
    %645 = vector.broadcast %644 : f32 to vector<16x16xf32>
    %646 = arith.mulf %645, %639 : vector<16x16xf32>
    %647 = arith.addf %629, %646 : vector<16x16xf32>
    %c106 = arith.constant 106 : index
    %648 = memref.load %arg1[%c106] : memref<288xf32, #tpu.memory_space<smem>>
    %649 = vector.broadcast %648 : f32 to vector<16x16xf32>
    %650 = arith.mulf %649, %639 : vector<16x16xf32>
    %651 = arith.addf %633, %650 : vector<16x16xf32>
    %c142 = arith.constant 142 : index
    %652 = memref.load %arg1[%c142] : memref<288xf32, #tpu.memory_space<smem>>
    %653 = vector.broadcast %652 : f32 to vector<16x16xf32>
    %654 = arith.mulf %653, %639 : vector<16x16xf32>
    %655 = arith.addf %637, %654 : vector<16x16xf32>
    %c3_140 = arith.constant 3 : index
    %c2_141 = arith.constant 2 : index
    %c2_142 = arith.constant 2 : index
    %656 = vector.load %arg5[%c3_140, %c2_141, %c2_142] : memref<4x18x18xf32, #tpu.memory_space<vmem>>, vector<1x16x16xf32>
    %657 = vector.shape_cast %656 : vector<1x16x16xf32> to vector<16x16xf32>
    %c35 = arith.constant 35 : index
    %658 = memref.load %arg1[%c35] : memref<288xf32, #tpu.memory_space<smem>>
    %659 = vector.broadcast %658 : f32 to vector<16x16xf32>
    %660 = arith.mulf %659, %657 : vector<16x16xf32>
    %661 = arith.addf %643, %660 : vector<16x16xf32>
    %c71 = arith.constant 71 : index
    %662 = memref.load %arg1[%c71] : memref<288xf32, #tpu.memory_space<smem>>
    %663 = vector.broadcast %662 : f32 to vector<16x16xf32>
    %664 = arith.mulf %663, %657 : vector<16x16xf32>
    %665 = arith.addf %647, %664 : vector<16x16xf32>
    %c107 = arith.constant 107 : index
    %666 = memref.load %arg1[%c107] : memref<288xf32, #tpu.memory_space<smem>>
    %667 = vector.broadcast %666 : f32 to vector<16x16xf32>
    %668 = arith.mulf %667, %657 : vector<16x16xf32>
    %669 = arith.addf %651, %668 : vector<16x16xf32>
    %c143 = arith.constant 143 : index
    %670 = memref.load %arg1[%c143] : memref<288xf32, #tpu.memory_space<smem>>
    %671 = vector.broadcast %670 : f32 to vector<16x16xf32>
    %672 = arith.mulf %671, %657 : vector<16x16xf32>
    %673 = arith.addf %655, %672 : vector<16x16xf32>
    %c0_143 = arith.constant 0 : index
    %674 = memref.load %arg2[%c0_143] : memref<8xf32, #tpu.memory_space<smem>>
    %675 = vector.broadcast %674 : f32 to vector<16x16xf32>
    %676 = arith.addf %661, %675 : vector<16x16xf32>
    %cst_144 = arith.constant 0.000000e+00 : f32
    %677 = vector.broadcast %cst_144 : f32 to vector<16x16xf32>
    %678 = arith.maximumf %676, %677 : vector<16x16xf32>
    %c0_145 = arith.constant 0 : index
    %c1_146 = arith.constant 1 : index
    %c1_147 = arith.constant 1 : index
    %679 = vector.load %arg5[%c0_145, %c1_146, %c1_147] : memref<4x18x18xf32, #tpu.memory_space<vmem>>, vector<1x16x16xf32>
    %680 = vector.shape_cast %679 : vector<1x16x16xf32> to vector<16x16xf32>
    %681 = vector.shape_cast %678 : vector<16x16xf32> to vector<1x16x16xf32>
    tpu.vector_store %arg5[%c0_145, %c1_146, %c1_147], %681 {strides = array<i32>} : memref<4x18x18xf32, #tpu.memory_space<vmem>>, vector<1x16x16xf32>,
    %c1_148 = arith.constant 1 : index
    %682 = memref.load %arg2[%c1_148] : memref<8xf32, #tpu.memory_space<smem>>
    %683 = vector.broadcast %682 : f32 to vector<16x16xf32>
    %684 = arith.addf %665, %683 : vector<16x16xf32>
    %cst_149 = arith.constant 0.000000e+00 : f32
    %685 = vector.broadcast %cst_149 : f32 to vector<16x16xf32>
    %686 = arith.maximumf %684, %685 : vector<16x16xf32>
    %c1_150 = arith.constant 1 : index
    %c1_151 = arith.constant 1 : index
    %c1_152 = arith.constant 1 : index
    %687 = vector.load %arg5[%c1_150, %c1_151, %c1_152] : memref<4x18x18xf32, #tpu.memory_space<vmem>>, vector<1x16x16xf32>
    %688 = vector.shape_cast %687 : vector<1x16x16xf32> to vector<16x16xf32>
    %689 = vector.shape_cast %686 : vector<16x16xf32> to vector<1x16x16xf32>
    tpu.vector_store %arg5[%c1_150, %c1_151, %c1_152], %689 {strides = array<i32>} : memref<4x18x18xf32, #tpu.memory_space<vmem>>, vector<1x16x16xf32>,
    %c2_153 = arith.constant 2 : index
    %690 = memref.load %arg2[%c2_153] : memref<8xf32, #tpu.memory_space<smem>>
    %691 = vector.broadcast %690 : f32 to vector<16x16xf32>
    %692 = arith.addf %669, %691 : vector<16x16xf32>
    %cst_154 = arith.constant 0.000000e+00 : f32
    %693 = vector.broadcast %cst_154 : f32 to vector<16x16xf32>
    %694 = arith.maximumf %692, %693 : vector<16x16xf32>
    %c2_155 = arith.constant 2 : index
    %c1_156 = arith.constant 1 : index
    %c1_157 = arith.constant 1 : index
    %695 = vector.load %arg5[%c2_155, %c1_156, %c1_157] : memref<4x18x18xf32, #tpu.memory_space<vmem>>, vector<1x16x16xf32>
    %696 = vector.shape_cast %695 : vector<1x16x16xf32> to vector<16x16xf32>
    %697 = vector.shape_cast %694 : vector<16x16xf32> to vector<1x16x16xf32>
    tpu.vector_store %arg5[%c2_155, %c1_156, %c1_157], %697 {strides = array<i32>} : memref<4x18x18xf32, #tpu.memory_space<vmem>>, vector<1x16x16xf32>,
    %c3_158 = arith.constant 3 : index
    %698 = memref.load %arg2[%c3_158] : memref<8xf32, #tpu.memory_space<smem>>
    %699 = vector.broadcast %698 : f32 to vector<16x16xf32>
    %700 = arith.addf %673, %699 : vector<16x16xf32>
    %cst_159 = arith.constant 0.000000e+00 : f32
    %701 = vector.broadcast %cst_159 : f32 to vector<16x16xf32>
    %702 = arith.maximumf %700, %701 : vector<16x16xf32>
    %c3_160 = arith.constant 3 : index
    %c1_161 = arith.constant 1 : index
    %c1_162 = arith.constant 1 : index
    %703 = vector.load %arg5[%c3_160, %c1_161, %c1_162] : memref<4x18x18xf32, #tpu.memory_space<vmem>>, vector<1x16x16xf32>
    %704 = vector.shape_cast %703 : vector<1x16x16xf32> to vector<16x16xf32>
    %705 = vector.shape_cast %702 : vector<16x16xf32> to vector<1x16x16xf32>
    tpu.vector_store %arg5[%c3_160, %c1_161, %c1_162], %705 {strides = array<i32>} : memref<4x18x18xf32, #tpu.memory_space<vmem>>, vector<1x16x16xf32>,
    %cst_163 = arith.constant 0.000000e+00 : f32
    %706 = vector.broadcast %cst_163 : f32 to vector<16x16xf32>
    %cst_164 = arith.constant 0.000000e+00 : f32
    %707 = vector.broadcast %cst_164 : f32 to vector<16x16xf32>
    %cst_165 = arith.constant 0.000000e+00 : f32
    %708 = vector.broadcast %cst_165 : f32 to vector<16x16xf32>
    %cst_166 = arith.constant 0.000000e+00 : f32
    %709 = vector.broadcast %cst_166 : f32 to vector<16x16xf32>
    %c0_167 = arith.constant 0 : index
    %c0_168 = arith.constant 0 : index
    %c0_169 = arith.constant 0 : index
    %710 = vector.load %arg5[%c0_167, %c0_168, %c0_169] : memref<4x18x18xf32, #tpu.memory_space<vmem>>, vector<1x16x16xf32>
    %711 = vector.shape_cast %710 : vector<1x16x16xf32> to vector<16x16xf32>
    %c144 = arith.constant 144 : index
    %712 = memref.load %arg1[%c144] : memref<288xf32, #tpu.memory_space<smem>>
    %713 = vector.broadcast %712 : f32 to vector<16x16xf32>
    %714 = arith.mulf %713, %711 : vector<16x16xf32>
    %715 = arith.addf %706, %714 : vector<16x16xf32>
    %c180 = arith.constant 180 : index
    %716 = memref.load %arg1[%c180] : memref<288xf32, #tpu.memory_space<smem>>
    %717 = vector.broadcast %716 : f32 to vector<16x16xf32>
    %718 = arith.mulf %717, %711 : vector<16x16xf32>
    %719 = arith.addf %707, %718 : vector<16x16xf32>
    %c216 = arith.constant 216 : index
    %720 = memref.load %arg1[%c216] : memref<288xf32, #tpu.memory_space<smem>>
    %721 = vector.broadcast %720 : f32 to vector<16x16xf32>
    %722 = arith.mulf %721, %711 : vector<16x16xf32>
    %723 = arith.addf %708, %722 : vector<16x16xf32>
    %c252 = arith.constant 252 : index
    %724 = memref.load %arg1[%c252] : memref<288xf32, #tpu.memory_space<smem>>
    %725 = vector.broadcast %724 : f32 to vector<16x16xf32>
    %726 = arith.mulf %725, %711 : vector<16x16xf32>
    %727 = arith.addf %709, %726 : vector<16x16xf32>
    %c0_170 = arith.constant 0 : index
    %c0_171 = arith.constant 0 : index
    %c1_172 = arith.constant 1 : index
    %728 = vector.load %arg5[%c0_170, %c0_171, %c1_172] : memref<4x18x18xf32, #tpu.memory_space<vmem>>, vector<1x16x16xf32>
    %729 = vector.shape_cast %728 : vector<1x16x16xf32> to vector<16x16xf32>
    %c145 = arith.constant 145 : index
    %730 = memref.load %arg1[%c145] : memref<288xf32, #tpu.memory_space<smem>>
    %731 = vector.broadcast %730 : f32 to vector<16x16xf32>
    %732 = arith.mulf %731, %729 : vector<16x16xf32>
    %733 = arith.addf %715, %732 : vector<16x16xf32>
    %c181 = arith.constant 181 : index
    %734 = memref.load %arg1[%c181] : memref<288xf32, #tpu.memory_space<smem>>
    %735 = vector.broadcast %734 : f32 to vector<16x16xf32>
    %736 = arith.mulf %735, %729 : vector<16x16xf32>
    %737 = arith.addf %719, %736 : vector<16x16xf32>
    %c217 = arith.constant 217 : index
    %738 = memref.load %arg1[%c217] : memref<288xf32, #tpu.memory_space<smem>>
    %739 = vector.broadcast %738 : f32 to vector<16x16xf32>
    %740 = arith.mulf %739, %729 : vector<16x16xf32>
    %741 = arith.addf %723, %740 : vector<16x16xf32>
    %c253 = arith.constant 253 : index
    %742 = memref.load %arg1[%c253] : memref<288xf32, #tpu.memory_space<smem>>
    %743 = vector.broadcast %742 : f32 to vector<16x16xf32>
    %744 = arith.mulf %743, %729 : vector<16x16xf32>
    %745 = arith.addf %727, %744 : vector<16x16xf32>
    %c0_173 = arith.constant 0 : index
    %c0_174 = arith.constant 0 : index
    %c2_175 = arith.constant 2 : index
    %746 = vector.load %arg5[%c0_173, %c0_174, %c2_175] : memref<4x18x18xf32, #tpu.memory_space<vmem>>, vector<1x16x16xf32>
    %747 = vector.shape_cast %746 : vector<1x16x16xf32> to vector<16x16xf32>
    %c146 = arith.constant 146 : index
    %748 = memref.load %arg1[%c146] : memref<288xf32, #tpu.memory_space<smem>>
    %749 = vector.broadcast %748 : f32 to vector<16x16xf32>
    %750 = arith.mulf %749, %747 : vector<16x16xf32>
    %751 = arith.addf %733, %750 : vector<16x16xf32>
    %c182 = arith.constant 182 : index
    %752 = memref.load %arg1[%c182] : memref<288xf32, #tpu.memory_space<smem>>
    %753 = vector.broadcast %752 : f32 to vector<16x16xf32>
    %754 = arith.mulf %753, %747 : vector<16x16xf32>
    %755 = arith.addf %737, %754 : vector<16x16xf32>
    %c218 = arith.constant 218 : index
    %756 = memref.load %arg1[%c218] : memref<288xf32, #tpu.memory_space<smem>>
    %757 = vector.broadcast %756 : f32 to vector<16x16xf32>
    %758 = arith.mulf %757, %747 : vector<16x16xf32>
    %759 = arith.addf %741, %758 : vector<16x16xf32>
    %c254 = arith.constant 254 : index
    %760 = memref.load %arg1[%c254] : memref<288xf32, #tpu.memory_space<smem>>
    %761 = vector.broadcast %760 : f32 to vector<16x16xf32>
    %762 = arith.mulf %761, %747 : vector<16x16xf32>
    %763 = arith.addf %745, %762 : vector<16x16xf32>
    %c0_176 = arith.constant 0 : index
    %c1_177 = arith.constant 1 : index
    %c0_178 = arith.constant 0 : index
    %764 = vector.load %arg5[%c0_176, %c1_177, %c0_178] : memref<4x18x18xf32, #tpu.memory_space<vmem>>, vector<1x16x16xf32>
    %765 = vector.shape_cast %764 : vector<1x16x16xf32> to vector<16x16xf32>
    %c147 = arith.constant 147 : index
    %766 = memref.load %arg1[%c147] : memref<288xf32, #tpu.memory_space<smem>>
    %767 = vector.broadcast %766 : f32 to vector<16x16xf32>
    %768 = arith.mulf %767, %765 : vector<16x16xf32>
    %769 = arith.addf %751, %768 : vector<16x16xf32>
    %c183 = arith.constant 183 : index
    %770 = memref.load %arg1[%c183] : memref<288xf32, #tpu.memory_space<smem>>
    %771 = vector.broadcast %770 : f32 to vector<16x16xf32>
    %772 = arith.mulf %771, %765 : vector<16x16xf32>
    %773 = arith.addf %755, %772 : vector<16x16xf32>
    %c219 = arith.constant 219 : index
    %774 = memref.load %arg1[%c219] : memref<288xf32, #tpu.memory_space<smem>>
    %775 = vector.broadcast %774 : f32 to vector<16x16xf32>
    %776 = arith.mulf %775, %765 : vector<16x16xf32>
    %777 = arith.addf %759, %776 : vector<16x16xf32>
    %c255 = arith.constant 255 : index
    %778 = memref.load %arg1[%c255] : memref<288xf32, #tpu.memory_space<smem>>
    %779 = vector.broadcast %778 : f32 to vector<16x16xf32>
    %780 = arith.mulf %779, %765 : vector<16x16xf32>
    %781 = arith.addf %763, %780 : vector<16x16xf32>
    %c0_179 = arith.constant 0 : index
    %c1_180 = arith.constant 1 : index
    %c1_181 = arith.constant 1 : index
    %782 = vector.load %arg5[%c0_179, %c1_180, %c1_181] : memref<4x18x18xf32, #tpu.memory_space<vmem>>, vector<1x16x16xf32>
    %783 = vector.shape_cast %782 : vector<1x16x16xf32> to vector<16x16xf32>
    %c148 = arith.constant 148 : index
    %784 = memref.load %arg1[%c148] : memref<288xf32, #tpu.memory_space<smem>>
    %785 = vector.broadcast %784 : f32 to vector<16x16xf32>
    %786 = arith.mulf %785, %783 : vector<16x16xf32>
    %787 = arith.addf %769, %786 : vector<16x16xf32>
    %c184 = arith.constant 184 : index
    %788 = memref.load %arg1[%c184] : memref<288xf32, #tpu.memory_space<smem>>
    %789 = vector.broadcast %788 : f32 to vector<16x16xf32>
    %790 = arith.mulf %789, %783 : vector<16x16xf32>
    %791 = arith.addf %773, %790 : vector<16x16xf32>
    %c220 = arith.constant 220 : index
    %792 = memref.load %arg1[%c220] : memref<288xf32, #tpu.memory_space<smem>>
    %793 = vector.broadcast %792 : f32 to vector<16x16xf32>
    %794 = arith.mulf %793, %783 : vector<16x16xf32>
    %795 = arith.addf %777, %794 : vector<16x16xf32>
    %c256 = arith.constant 256 : index
    %796 = memref.load %arg1[%c256] : memref<288xf32, #tpu.memory_space<smem>>
    %797 = vector.broadcast %796 : f32 to vector<16x16xf32>
    %798 = arith.mulf %797, %783 : vector<16x16xf32>
    %799 = arith.addf %781, %798 : vector<16x16xf32>
    %c0_182 = arith.constant 0 : index
    %c1_183 = arith.constant 1 : index
    %c2_184 = arith.constant 2 : index
    %800 = vector.load %arg5[%c0_182, %c1_183, %c2_184] : memref<4x18x18xf32, #tpu.memory_space<vmem>>, vector<1x16x16xf32>
    %801 = vector.shape_cast %800 : vector<1x16x16xf32> to vector<16x16xf32>
    %c149 = arith.constant 149 : index
    %802 = memref.load %arg1[%c149] : memref<288xf32, #tpu.memory_space<smem>>
    %803 = vector.broadcast %802 : f32 to vector<16x16xf32>
    %804 = arith.mulf %803, %801 : vector<16x16xf32>
    %805 = arith.addf %787, %804 : vector<16x16xf32>
    %c185 = arith.constant 185 : index
    %806 = memref.load %arg1[%c185] : memref<288xf32, #tpu.memory_space<smem>>
    %807 = vector.broadcast %806 : f32 to vector<16x16xf32>
    %808 = arith.mulf %807, %801 : vector<16x16xf32>
    %809 = arith.addf %791, %808 : vector<16x16xf32>
    %c221 = arith.constant 221 : index
    %810 = memref.load %arg1[%c221] : memref<288xf32, #tpu.memory_space<smem>>
    %811 = vector.broadcast %810 : f32 to vector<16x16xf32>
    %812 = arith.mulf %811, %801 : vector<16x16xf32>
    %813 = arith.addf %795, %812 : vector<16x16xf32>
    %c257 = arith.constant 257 : index
    %814 = memref.load %arg1[%c257] : memref<288xf32, #tpu.memory_space<smem>>
    %815 = vector.broadcast %814 : f32 to vector<16x16xf32>
    %816 = arith.mulf %815, %801 : vector<16x16xf32>
    %817 = arith.addf %799, %816 : vector<16x16xf32>
    %c0_185 = arith.constant 0 : index
    %c2_186 = arith.constant 2 : index
    %c0_187 = arith.constant 0 : index
    %818 = vector.load %arg5[%c0_185, %c2_186, %c0_187] : memref<4x18x18xf32, #tpu.memory_space<vmem>>, vector<1x16x16xf32>
    %819 = vector.shape_cast %818 : vector<1x16x16xf32> to vector<16x16xf32>
    %c150 = arith.constant 150 : index
    %820 = memref.load %arg1[%c150] : memref<288xf32, #tpu.memory_space<smem>>
    %821 = vector.broadcast %820 : f32 to vector<16x16xf32>
    %822 = arith.mulf %821, %819 : vector<16x16xf32>
    %823 = arith.addf %805, %822 : vector<16x16xf32>
    %c186 = arith.constant 186 : index
    %824 = memref.load %arg1[%c186] : memref<288xf32, #tpu.memory_space<smem>>
    %825 = vector.broadcast %824 : f32 to vector<16x16xf32>
    %826 = arith.mulf %825, %819 : vector<16x16xf32>
    %827 = arith.addf %809, %826 : vector<16x16xf32>
    %c222 = arith.constant 222 : index
    %828 = memref.load %arg1[%c222] : memref<288xf32, #tpu.memory_space<smem>>
    %829 = vector.broadcast %828 : f32 to vector<16x16xf32>
    %830 = arith.mulf %829, %819 : vector<16x16xf32>
    %831 = arith.addf %813, %830 : vector<16x16xf32>
    %c258 = arith.constant 258 : index
    %832 = memref.load %arg1[%c258] : memref<288xf32, #tpu.memory_space<smem>>
    %833 = vector.broadcast %832 : f32 to vector<16x16xf32>
    %834 = arith.mulf %833, %819 : vector<16x16xf32>
    %835 = arith.addf %817, %834 : vector<16x16xf32>
    %c0_188 = arith.constant 0 : index
    %c2_189 = arith.constant 2 : index
    %c1_190 = arith.constant 1 : index
    %836 = vector.load %arg5[%c0_188, %c2_189, %c1_190] : memref<4x18x18xf32, #tpu.memory_space<vmem>>, vector<1x16x16xf32>
    %837 = vector.shape_cast %836 : vector<1x16x16xf32> to vector<16x16xf32>
    %c151 = arith.constant 151 : index
    %838 = memref.load %arg1[%c151] : memref<288xf32, #tpu.memory_space<smem>>
    %839 = vector.broadcast %838 : f32 to vector<16x16xf32>
    %840 = arith.mulf %839, %837 : vector<16x16xf32>
    %841 = arith.addf %823, %840 : vector<16x16xf32>
    %c187 = arith.constant 187 : index
    %842 = memref.load %arg1[%c187] : memref<288xf32, #tpu.memory_space<smem>>
    %843 = vector.broadcast %842 : f32 to vector<16x16xf32>
    %844 = arith.mulf %843, %837 : vector<16x16xf32>
    %845 = arith.addf %827, %844 : vector<16x16xf32>
    %c223 = arith.constant 223 : index
    %846 = memref.load %arg1[%c223] : memref<288xf32, #tpu.memory_space<smem>>
    %847 = vector.broadcast %846 : f32 to vector<16x16xf32>
    %848 = arith.mulf %847, %837 : vector<16x16xf32>
    %849 = arith.addf %831, %848 : vector<16x16xf32>
    %c259 = arith.constant 259 : index
    %850 = memref.load %arg1[%c259] : memref<288xf32, #tpu.memory_space<smem>>
    %851 = vector.broadcast %850 : f32 to vector<16x16xf32>
    %852 = arith.mulf %851, %837 : vector<16x16xf32>
    %853 = arith.addf %835, %852 : vector<16x16xf32>
    %c0_191 = arith.constant 0 : index
    %c2_192 = arith.constant 2 : index
    %c2_193 = arith.constant 2 : index
    %854 = vector.load %arg5[%c0_191, %c2_192, %c2_193] : memref<4x18x18xf32, #tpu.memory_space<vmem>>, vector<1x16x16xf32>
    %855 = vector.shape_cast %854 : vector<1x16x16xf32> to vector<16x16xf32>
    %c152 = arith.constant 152 : index
    %856 = memref.load %arg1[%c152] : memref<288xf32, #tpu.memory_space<smem>>
    %857 = vector.broadcast %856 : f32 to vector<16x16xf32>
    %858 = arith.mulf %857, %855 : vector<16x16xf32>
    %859 = arith.addf %841, %858 : vector<16x16xf32>
    %c188 = arith.constant 188 : index
    %860 = memref.load %arg1[%c188] : memref<288xf32, #tpu.memory_space<smem>>
    %861 = vector.broadcast %860 : f32 to vector<16x16xf32>
    %862 = arith.mulf %861, %855 : vector<16x16xf32>
    %863 = arith.addf %845, %862 : vector<16x16xf32>
    %c224 = arith.constant 224 : index
    %864 = memref.load %arg1[%c224] : memref<288xf32, #tpu.memory_space<smem>>
    %865 = vector.broadcast %864 : f32 to vector<16x16xf32>
    %866 = arith.mulf %865, %855 : vector<16x16xf32>
    %867 = arith.addf %849, %866 : vector<16x16xf32>
    %c260 = arith.constant 260 : index
    %868 = memref.load %arg1[%c260] : memref<288xf32, #tpu.memory_space<smem>>
    %869 = vector.broadcast %868 : f32 to vector<16x16xf32>
    %870 = arith.mulf %869, %855 : vector<16x16xf32>
    %871 = arith.addf %853, %870 : vector<16x16xf32>
    %c1_194 = arith.constant 1 : index
    %c0_195 = arith.constant 0 : index
    %c0_196 = arith.constant 0 : index
    %872 = vector.load %arg5[%c1_194, %c0_195, %c0_196] : memref<4x18x18xf32, #tpu.memory_space<vmem>>, vector<1x16x16xf32>
    %873 = vector.shape_cast %872 : vector<1x16x16xf32> to vector<16x16xf32>
    %c153 = arith.constant 153 : index
    %874 = memref.load %arg1[%c153] : memref<288xf32, #tpu.memory_space<smem>>
    %875 = vector.broadcast %874 : f32 to vector<16x16xf32>
    %876 = arith.mulf %875, %873 : vector<16x16xf32>
    %877 = arith.addf %859, %876 : vector<16x16xf32>
    %c189 = arith.constant 189 : index
    %878 = memref.load %arg1[%c189] : memref<288xf32, #tpu.memory_space<smem>>
    %879 = vector.broadcast %878 : f32 to vector<16x16xf32>
    %880 = arith.mulf %879, %873 : vector<16x16xf32>
    %881 = arith.addf %863, %880 : vector<16x16xf32>
    %c225 = arith.constant 225 : index
    %882 = memref.load %arg1[%c225] : memref<288xf32, #tpu.memory_space<smem>>
    %883 = vector.broadcast %882 : f32 to vector<16x16xf32>
    %884 = arith.mulf %883, %873 : vector<16x16xf32>
    %885 = arith.addf %867, %884 : vector<16x16xf32>
    %c261 = arith.constant 261 : index
    %886 = memref.load %arg1[%c261] : memref<288xf32, #tpu.memory_space<smem>>
    %887 = vector.broadcast %886 : f32 to vector<16x16xf32>
    %888 = arith.mulf %887, %873 : vector<16x16xf32>
    %889 = arith.addf %871, %888 : vector<16x16xf32>
    %c1_197 = arith.constant 1 : index
    %c0_198 = arith.constant 0 : index
    %c1_199 = arith.constant 1 : index
    %890 = vector.load %arg5[%c1_197, %c0_198, %c1_199] : memref<4x18x18xf32, #tpu.memory_space<vmem>>, vector<1x16x16xf32>
    %891 = vector.shape_cast %890 : vector<1x16x16xf32> to vector<16x16xf32>
    %c154 = arith.constant 154 : index
    %892 = memref.load %arg1[%c154] : memref<288xf32, #tpu.memory_space<smem>>
    %893 = vector.broadcast %892 : f32 to vector<16x16xf32>
    %894 = arith.mulf %893, %891 : vector<16x16xf32>
    %895 = arith.addf %877, %894 : vector<16x16xf32>
    %c190 = arith.constant 190 : index
    %896 = memref.load %arg1[%c190] : memref<288xf32, #tpu.memory_space<smem>>
    %897 = vector.broadcast %896 : f32 to vector<16x16xf32>
    %898 = arith.mulf %897, %891 : vector<16x16xf32>
    %899 = arith.addf %881, %898 : vector<16x16xf32>
    %c226 = arith.constant 226 : index
    %900 = memref.load %arg1[%c226] : memref<288xf32, #tpu.memory_space<smem>>
    %901 = vector.broadcast %900 : f32 to vector<16x16xf32>
    %902 = arith.mulf %901, %891 : vector<16x16xf32>
    %903 = arith.addf %885, %902 : vector<16x16xf32>
    %c262 = arith.constant 262 : index
    %904 = memref.load %arg1[%c262] : memref<288xf32, #tpu.memory_space<smem>>
    %905 = vector.broadcast %904 : f32 to vector<16x16xf32>
    %906 = arith.mulf %905, %891 : vector<16x16xf32>
    %907 = arith.addf %889, %906 : vector<16x16xf32>
    %c1_200 = arith.constant 1 : index
    %c0_201 = arith.constant 0 : index
    %c2_202 = arith.constant 2 : index
    %908 = vector.load %arg5[%c1_200, %c0_201, %c2_202] : memref<4x18x18xf32, #tpu.memory_space<vmem>>, vector<1x16x16xf32>
    %909 = vector.shape_cast %908 : vector<1x16x16xf32> to vector<16x16xf32>
    %c155 = arith.constant 155 : index
    %910 = memref.load %arg1[%c155] : memref<288xf32, #tpu.memory_space<smem>>
    %911 = vector.broadcast %910 : f32 to vector<16x16xf32>
    %912 = arith.mulf %911, %909 : vector<16x16xf32>
    %913 = arith.addf %895, %912 : vector<16x16xf32>
    %c191 = arith.constant 191 : index
    %914 = memref.load %arg1[%c191] : memref<288xf32, #tpu.memory_space<smem>>
    %915 = vector.broadcast %914 : f32 to vector<16x16xf32>
    %916 = arith.mulf %915, %909 : vector<16x16xf32>
    %917 = arith.addf %899, %916 : vector<16x16xf32>
    %c227 = arith.constant 227 : index
    %918 = memref.load %arg1[%c227] : memref<288xf32, #tpu.memory_space<smem>>
    %919 = vector.broadcast %918 : f32 to vector<16x16xf32>
    %920 = arith.mulf %919, %909 : vector<16x16xf32>
    %921 = arith.addf %903, %920 : vector<16x16xf32>
    %c263 = arith.constant 263 : index
    %922 = memref.load %arg1[%c263] : memref<288xf32, #tpu.memory_space<smem>>
    %923 = vector.broadcast %922 : f32 to vector<16x16xf32>
    %924 = arith.mulf %923, %909 : vector<16x16xf32>
    %925 = arith.addf %907, %924 : vector<16x16xf32>
    %c1_203 = arith.constant 1 : index
    %c1_204 = arith.constant 1 : index
    %c0_205 = arith.constant 0 : index
    %926 = vector.load %arg5[%c1_203, %c1_204, %c0_205] : memref<4x18x18xf32, #tpu.memory_space<vmem>>, vector<1x16x16xf32>
    %927 = vector.shape_cast %926 : vector<1x16x16xf32> to vector<16x16xf32>
    %c156 = arith.constant 156 : index
    %928 = memref.load %arg1[%c156] : memref<288xf32, #tpu.memory_space<smem>>
    %929 = vector.broadcast %928 : f32 to vector<16x16xf32>
    %930 = arith.mulf %929, %927 : vector<16x16xf32>
    %931 = arith.addf %913, %930 : vector<16x16xf32>
    %c192 = arith.constant 192 : index
    %932 = memref.load %arg1[%c192] : memref<288xf32, #tpu.memory_space<smem>>
    %933 = vector.broadcast %932 : f32 to vector<16x16xf32>
    %934 = arith.mulf %933, %927 : vector<16x16xf32>
    %935 = arith.addf %917, %934 : vector<16x16xf32>
    %c228 = arith.constant 228 : index
    %936 = memref.load %arg1[%c228] : memref<288xf32, #tpu.memory_space<smem>>
    %937 = vector.broadcast %936 : f32 to vector<16x16xf32>
    %938 = arith.mulf %937, %927 : vector<16x16xf32>
    %939 = arith.addf %921, %938 : vector<16x16xf32>
    %c264 = arith.constant 264 : index
    %940 = memref.load %arg1[%c264] : memref<288xf32, #tpu.memory_space<smem>>
    %941 = vector.broadcast %940 : f32 to vector<16x16xf32>
    %942 = arith.mulf %941, %927 : vector<16x16xf32>
    %943 = arith.addf %925, %942 : vector<16x16xf32>
    %c1_206 = arith.constant 1 : index
    %c1_207 = arith.constant 1 : index
    %c1_208 = arith.constant 1 : index
    %944 = vector.load %arg5[%c1_206, %c1_207, %c1_208] : memref<4x18x18xf32, #tpu.memory_space<vmem>>, vector<1x16x16xf32>
    %945 = vector.shape_cast %944 : vector<1x16x16xf32> to vector<16x16xf32>
    %c157 = arith.constant 157 : index
    %946 = memref.load %arg1[%c157] : memref<288xf32, #tpu.memory_space<smem>>
    %947 = vector.broadcast %946 : f32 to vector<16x16xf32>
    %948 = arith.mulf %947, %945 : vector<16x16xf32>
    %949 = arith.addf %931, %948 : vector<16x16xf32>
    %c193 = arith.constant 193 : index
    %950 = memref.load %arg1[%c193] : memref<288xf32, #tpu.memory_space<smem>>
    %951 = vector.broadcast %950 : f32 to vector<16x16xf32>
    %952 = arith.mulf %951, %945 : vector<16x16xf32>
    %953 = arith.addf %935, %952 : vector<16x16xf32>
    %c229 = arith.constant 229 : index
    %954 = memref.load %arg1[%c229] : memref<288xf32, #tpu.memory_space<smem>>
    %955 = vector.broadcast %954 : f32 to vector<16x16xf32>
    %956 = arith.mulf %955, %945 : vector<16x16xf32>
    %957 = arith.addf %939, %956 : vector<16x16xf32>
    %c265 = arith.constant 265 : index
    %958 = memref.load %arg1[%c265] : memref<288xf32, #tpu.memory_space<smem>>
    %959 = vector.broadcast %958 : f32 to vector<16x16xf32>
    %960 = arith.mulf %959, %945 : vector<16x16xf32>
    %961 = arith.addf %943, %960 : vector<16x16xf32>
    %c1_209 = arith.constant 1 : index
    %c1_210 = arith.constant 1 : index
    %c2_211 = arith.constant 2 : index
    %962 = vector.load %arg5[%c1_209, %c1_210, %c2_211] : memref<4x18x18xf32, #tpu.memory_space<vmem>>, vector<1x16x16xf32>
    %963 = vector.shape_cast %962 : vector<1x16x16xf32> to vector<16x16xf32>
    %c158 = arith.constant 158 : index
    %964 = memref.load %arg1[%c158] : memref<288xf32, #tpu.memory_space<smem>>
    %965 = vector.broadcast %964 : f32 to vector<16x16xf32>
    %966 = arith.mulf %965, %963 : vector<16x16xf32>
    %967 = arith.addf %949, %966 : vector<16x16xf32>
    %c194 = arith.constant 194 : index
    %968 = memref.load %arg1[%c194] : memref<288xf32, #tpu.memory_space<smem>>
    %969 = vector.broadcast %968 : f32 to vector<16x16xf32>
    %970 = arith.mulf %969, %963 : vector<16x16xf32>
    %971 = arith.addf %953, %970 : vector<16x16xf32>
    %c230 = arith.constant 230 : index
    %972 = memref.load %arg1[%c230] : memref<288xf32, #tpu.memory_space<smem>>
    %973 = vector.broadcast %972 : f32 to vector<16x16xf32>
    %974 = arith.mulf %973, %963 : vector<16x16xf32>
    %975 = arith.addf %957, %974 : vector<16x16xf32>
    %c266 = arith.constant 266 : index
    %976 = memref.load %arg1[%c266] : memref<288xf32, #tpu.memory_space<smem>>
    %977 = vector.broadcast %976 : f32 to vector<16x16xf32>
    %978 = arith.mulf %977, %963 : vector<16x16xf32>
    %979 = arith.addf %961, %978 : vector<16x16xf32>
    %c1_212 = arith.constant 1 : index
    %c2_213 = arith.constant 2 : index
    %c0_214 = arith.constant 0 : index
    %980 = vector.load %arg5[%c1_212, %c2_213, %c0_214] : memref<4x18x18xf32, #tpu.memory_space<vmem>>, vector<1x16x16xf32>
    %981 = vector.shape_cast %980 : vector<1x16x16xf32> to vector<16x16xf32>
    %c159 = arith.constant 159 : index
    %982 = memref.load %arg1[%c159] : memref<288xf32, #tpu.memory_space<smem>>
    %983 = vector.broadcast %982 : f32 to vector<16x16xf32>
    %984 = arith.mulf %983, %981 : vector<16x16xf32>
    %985 = arith.addf %967, %984 : vector<16x16xf32>
    %c195 = arith.constant 195 : index
    %986 = memref.load %arg1[%c195] : memref<288xf32, #tpu.memory_space<smem>>
    %987 = vector.broadcast %986 : f32 to vector<16x16xf32>
    %988 = arith.mulf %987, %981 : vector<16x16xf32>
    %989 = arith.addf %971, %988 : vector<16x16xf32>
    %c231 = arith.constant 231 : index
    %990 = memref.load %arg1[%c231] : memref<288xf32, #tpu.memory_space<smem>>
    %991 = vector.broadcast %990 : f32 to vector<16x16xf32>
    %992 = arith.mulf %991, %981 : vector<16x16xf32>
    %993 = arith.addf %975, %992 : vector<16x16xf32>
    %c267 = arith.constant 267 : index
    %994 = memref.load %arg1[%c267] : memref<288xf32, #tpu.memory_space<smem>>
    %995 = vector.broadcast %994 : f32 to vector<16x16xf32>
    %996 = arith.mulf %995, %981 : vector<16x16xf32>
    %997 = arith.addf %979, %996 : vector<16x16xf32>
    %c1_215 = arith.constant 1 : index
    %c2_216 = arith.constant 2 : index
    %c1_217 = arith.constant 1 : index
    %998 = vector.load %arg5[%c1_215, %c2_216, %c1_217] : memref<4x18x18xf32, #tpu.memory_space<vmem>>, vector<1x16x16xf32>
    %999 = vector.shape_cast %998 : vector<1x16x16xf32> to vector<16x16xf32>
    %c160 = arith.constant 160 : index
    %1000 = memref.load %arg1[%c160] : memref<288xf32, #tpu.memory_space<smem>>
    %1001 = vector.broadcast %1000 : f32 to vector<16x16xf32>
    %1002 = arith.mulf %1001, %999 : vector<16x16xf32>
    %1003 = arith.addf %985, %1002 : vector<16x16xf32>
    %c196 = arith.constant 196 : index
    %1004 = memref.load %arg1[%c196] : memref<288xf32, #tpu.memory_space<smem>>
    %1005 = vector.broadcast %1004 : f32 to vector<16x16xf32>
    %1006 = arith.mulf %1005, %999 : vector<16x16xf32>
    %1007 = arith.addf %989, %1006 : vector<16x16xf32>
    %c232 = arith.constant 232 : index
    %1008 = memref.load %arg1[%c232] : memref<288xf32, #tpu.memory_space<smem>>
    %1009 = vector.broadcast %1008 : f32 to vector<16x16xf32>
    %1010 = arith.mulf %1009, %999 : vector<16x16xf32>
    %1011 = arith.addf %993, %1010 : vector<16x16xf32>
    %c268 = arith.constant 268 : index
    %1012 = memref.load %arg1[%c268] : memref<288xf32, #tpu.memory_space<smem>>
    %1013 = vector.broadcast %1012 : f32 to vector<16x16xf32>
    %1014 = arith.mulf %1013, %999 : vector<16x16xf32>
    %1015 = arith.addf %997, %1014 : vector<16x16xf32>
    %c1_218 = arith.constant 1 : index
    %c2_219 = arith.constant 2 : index
    %c2_220 = arith.constant 2 : index
    %1016 = vector.load %arg5[%c1_218, %c2_219, %c2_220] : memref<4x18x18xf32, #tpu.memory_space<vmem>>, vector<1x16x16xf32>
    %1017 = vector.shape_cast %1016 : vector<1x16x16xf32> to vector<16x16xf32>
    %c161 = arith.constant 161 : index
    %1018 = memref.load %arg1[%c161] : memref<288xf32, #tpu.memory_space<smem>>
    %1019 = vector.broadcast %1018 : f32 to vector<16x16xf32>
    %1020 = arith.mulf %1019, %1017 : vector<16x16xf32>
    %1021 = arith.addf %1003, %1020 : vector<16x16xf32>
    %c197 = arith.constant 197 : index
    %1022 = memref.load %arg1[%c197] : memref<288xf32, #tpu.memory_space<smem>>
    %1023 = vector.broadcast %1022 : f32 to vector<16x16xf32>
    %1024 = arith.mulf %1023, %1017 : vector<16x16xf32>
    %1025 = arith.addf %1007, %1024 : vector<16x16xf32>
    %c233 = arith.constant 233 : index
    %1026 = memref.load %arg1[%c233] : memref<288xf32, #tpu.memory_space<smem>>
    %1027 = vector.broadcast %1026 : f32 to vector<16x16xf32>
    %1028 = arith.mulf %1027, %1017 : vector<16x16xf32>
    %1029 = arith.addf %1011, %1028 : vector<16x16xf32>
    %c269 = arith.constant 269 : index
    %1030 = memref.load %arg1[%c269] : memref<288xf32, #tpu.memory_space<smem>>
    %1031 = vector.broadcast %1030 : f32 to vector<16x16xf32>
    %1032 = arith.mulf %1031, %1017 : vector<16x16xf32>
    %1033 = arith.addf %1015, %1032 : vector<16x16xf32>
    %c2_221 = arith.constant 2 : index
    %c0_222 = arith.constant 0 : index
    %c0_223 = arith.constant 0 : index
    %1034 = vector.load %arg5[%c2_221, %c0_222, %c0_223] : memref<4x18x18xf32, #tpu.memory_space<vmem>>, vector<1x16x16xf32>
    %1035 = vector.shape_cast %1034 : vector<1x16x16xf32> to vector<16x16xf32>
    %c162 = arith.constant 162 : index
    %1036 = memref.load %arg1[%c162] : memref<288xf32, #tpu.memory_space<smem>>
    %1037 = vector.broadcast %1036 : f32 to vector<16x16xf32>
    %1038 = arith.mulf %1037, %1035 : vector<16x16xf32>
    %1039 = arith.addf %1021, %1038 : vector<16x16xf32>
    %c198 = arith.constant 198 : index
    %1040 = memref.load %arg1[%c198] : memref<288xf32, #tpu.memory_space<smem>>
    %1041 = vector.broadcast %1040 : f32 to vector<16x16xf32>
    %1042 = arith.mulf %1041, %1035 : vector<16x16xf32>
    %1043 = arith.addf %1025, %1042 : vector<16x16xf32>
    %c234 = arith.constant 234 : index
    %1044 = memref.load %arg1[%c234] : memref<288xf32, #tpu.memory_space<smem>>
    %1045 = vector.broadcast %1044 : f32 to vector<16x16xf32>
    %1046 = arith.mulf %1045, %1035 : vector<16x16xf32>
    %1047 = arith.addf %1029, %1046 : vector<16x16xf32>
    %c270 = arith.constant 270 : index
    %1048 = memref.load %arg1[%c270] : memref<288xf32, #tpu.memory_space<smem>>
    %1049 = vector.broadcast %1048 : f32 to vector<16x16xf32>
    %1050 = arith.mulf %1049, %1035 : vector<16x16xf32>
    %1051 = arith.addf %1033, %1050 : vector<16x16xf32>
    %c2_224 = arith.constant 2 : index
    %c0_225 = arith.constant 0 : index
    %c1_226 = arith.constant 1 : index
    %1052 = vector.load %arg5[%c2_224, %c0_225, %c1_226] : memref<4x18x18xf32, #tpu.memory_space<vmem>>, vector<1x16x16xf32>
    %1053 = vector.shape_cast %1052 : vector<1x16x16xf32> to vector<16x16xf32>
    %c163 = arith.constant 163 : index
    %1054 = memref.load %arg1[%c163] : memref<288xf32, #tpu.memory_space<smem>>
    %1055 = vector.broadcast %1054 : f32 to vector<16x16xf32>
    %1056 = arith.mulf %1055, %1053 : vector<16x16xf32>
    %1057 = arith.addf %1039, %1056 : vector<16x16xf32>
    %c199 = arith.constant 199 : index
    %1058 = memref.load %arg1[%c199] : memref<288xf32, #tpu.memory_space<smem>>
    %1059 = vector.broadcast %1058 : f32 to vector<16x16xf32>
    %1060 = arith.mulf %1059, %1053 : vector<16x16xf32>
    %1061 = arith.addf %1043, %1060 : vector<16x16xf32>
    %c235 = arith.constant 235 : index
    %1062 = memref.load %arg1[%c235] : memref<288xf32, #tpu.memory_space<smem>>
    %1063 = vector.broadcast %1062 : f32 to vector<16x16xf32>
    %1064 = arith.mulf %1063, %1053 : vector<16x16xf32>
    %1065 = arith.addf %1047, %1064 : vector<16x16xf32>
    %c271 = arith.constant 271 : index
    %1066 = memref.load %arg1[%c271] : memref<288xf32, #tpu.memory_space<smem>>
    %1067 = vector.broadcast %1066 : f32 to vector<16x16xf32>
    %1068 = arith.mulf %1067, %1053 : vector<16x16xf32>
    %1069 = arith.addf %1051, %1068 : vector<16x16xf32>
    %c2_227 = arith.constant 2 : index
    %c0_228 = arith.constant 0 : index
    %c2_229 = arith.constant 2 : index
    %1070 = vector.load %arg5[%c2_227, %c0_228, %c2_229] : memref<4x18x18xf32, #tpu.memory_space<vmem>>, vector<1x16x16xf32>
    %1071 = vector.shape_cast %1070 : vector<1x16x16xf32> to vector<16x16xf32>
    %c164 = arith.constant 164 : index
    %1072 = memref.load %arg1[%c164] : memref<288xf32, #tpu.memory_space<smem>>
    %1073 = vector.broadcast %1072 : f32 to vector<16x16xf32>
    %1074 = arith.mulf %1073, %1071 : vector<16x16xf32>
    %1075 = arith.addf %1057, %1074 : vector<16x16xf32>
    %c200 = arith.constant 200 : index
    %1076 = memref.load %arg1[%c200] : memref<288xf32, #tpu.memory_space<smem>>
    %1077 = vector.broadcast %1076 : f32 to vector<16x16xf32>
    %1078 = arith.mulf %1077, %1071 : vector<16x16xf32>
    %1079 = arith.addf %1061, %1078 : vector<16x16xf32>
    %c236 = arith.constant 236 : index
    %1080 = memref.load %arg1[%c236] : memref<288xf32, #tpu.memory_space<smem>>
    %1081 = vector.broadcast %1080 : f32 to vector<16x16xf32>
    %1082 = arith.mulf %1081, %1071 : vector<16x16xf32>
    %1083 = arith.addf %1065, %1082 : vector<16x16xf32>
    %c272 = arith.constant 272 : index
    %1084 = memref.load %arg1[%c272] : memref<288xf32, #tpu.memory_space<smem>>
    %1085 = vector.broadcast %1084 : f32 to vector<16x16xf32>
    %1086 = arith.mulf %1085, %1071 : vector<16x16xf32>
    %1087 = arith.addf %1069, %1086 : vector<16x16xf32>
    %c2_230 = arith.constant 2 : index
    %c1_231 = arith.constant 1 : index
    %c0_232 = arith.constant 0 : index
    %1088 = vector.load %arg5[%c2_230, %c1_231, %c0_232] : memref<4x18x18xf32, #tpu.memory_space<vmem>>, vector<1x16x16xf32>
    %1089 = vector.shape_cast %1088 : vector<1x16x16xf32> to vector<16x16xf32>
    %c165 = arith.constant 165 : index
    %1090 = memref.load %arg1[%c165] : memref<288xf32, #tpu.memory_space<smem>>
    %1091 = vector.broadcast %1090 : f32 to vector<16x16xf32>
    %1092 = arith.mulf %1091, %1089 : vector<16x16xf32>
    %1093 = arith.addf %1075, %1092 : vector<16x16xf32>
    %c201 = arith.constant 201 : index
    %1094 = memref.load %arg1[%c201] : memref<288xf32, #tpu.memory_space<smem>>
    %1095 = vector.broadcast %1094 : f32 to vector<16x16xf32>
    %1096 = arith.mulf %1095, %1089 : vector<16x16xf32>
    %1097 = arith.addf %1079, %1096 : vector<16x16xf32>
    %c237 = arith.constant 237 : index
    %1098 = memref.load %arg1[%c237] : memref<288xf32, #tpu.memory_space<smem>>
    %1099 = vector.broadcast %1098 : f32 to vector<16x16xf32>
    %1100 = arith.mulf %1099, %1089 : vector<16x16xf32>
    %1101 = arith.addf %1083, %1100 : vector<16x16xf32>
    %c273 = arith.constant 273 : index
    %1102 = memref.load %arg1[%c273] : memref<288xf32, #tpu.memory_space<smem>>
    %1103 = vector.broadcast %1102 : f32 to vector<16x16xf32>
    %1104 = arith.mulf %1103, %1089 : vector<16x16xf32>
    %1105 = arith.addf %1087, %1104 : vector<16x16xf32>
    %c2_233 = arith.constant 2 : index
    %c1_234 = arith.constant 1 : index
    %c1_235 = arith.constant 1 : index
    %1106 = vector.load %arg5[%c2_233, %c1_234, %c1_235] : memref<4x18x18xf32, #tpu.memory_space<vmem>>, vector<1x16x16xf32>
    %1107 = vector.shape_cast %1106 : vector<1x16x16xf32> to vector<16x16xf32>
    %c166 = arith.constant 166 : index
    %1108 = memref.load %arg1[%c166] : memref<288xf32, #tpu.memory_space<smem>>
    %1109 = vector.broadcast %1108 : f32 to vector<16x16xf32>
    %1110 = arith.mulf %1109, %1107 : vector<16x16xf32>
    %1111 = arith.addf %1093, %1110 : vector<16x16xf32>
    %c202 = arith.constant 202 : index
    %1112 = memref.load %arg1[%c202] : memref<288xf32, #tpu.memory_space<smem>>
    %1113 = vector.broadcast %1112 : f32 to vector<16x16xf32>
    %1114 = arith.mulf %1113, %1107 : vector<16x16xf32>
    %1115 = arith.addf %1097, %1114 : vector<16x16xf32>
    %c238 = arith.constant 238 : index
    %1116 = memref.load %arg1[%c238] : memref<288xf32, #tpu.memory_space<smem>>
    %1117 = vector.broadcast %1116 : f32 to vector<16x16xf32>
    %1118 = arith.mulf %1117, %1107 : vector<16x16xf32>
    %1119 = arith.addf %1101, %1118 : vector<16x16xf32>
    %c274 = arith.constant 274 : index
    %1120 = memref.load %arg1[%c274] : memref<288xf32, #tpu.memory_space<smem>>
    %1121 = vector.broadcast %1120 : f32 to vector<16x16xf32>
    %1122 = arith.mulf %1121, %1107 : vector<16x16xf32>
    %1123 = arith.addf %1105, %1122 : vector<16x16xf32>
    %c2_236 = arith.constant 2 : index
    %c1_237 = arith.constant 1 : index
    %c2_238 = arith.constant 2 : index
    %1124 = vector.load %arg5[%c2_236, %c1_237, %c2_238] : memref<4x18x18xf32, #tpu.memory_space<vmem>>, vector<1x16x16xf32>
    %1125 = vector.shape_cast %1124 : vector<1x16x16xf32> to vector<16x16xf32>
    %c167 = arith.constant 167 : index
    %1126 = memref.load %arg1[%c167] : memref<288xf32, #tpu.memory_space<smem>>
    %1127 = vector.broadcast %1126 : f32 to vector<16x16xf32>
    %1128 = arith.mulf %1127, %1125 : vector<16x16xf32>
    %1129 = arith.addf %1111, %1128 : vector<16x16xf32>
    %c203 = arith.constant 203 : index
    %1130 = memref.load %arg1[%c203] : memref<288xf32, #tpu.memory_space<smem>>
    %1131 = vector.broadcast %1130 : f32 to vector<16x16xf32>
    %1132 = arith.mulf %1131, %1125 : vector<16x16xf32>
    %1133 = arith.addf %1115, %1132 : vector<16x16xf32>
    %c239 = arith.constant 239 : index
    %1134 = memref.load %arg1[%c239] : memref<288xf32, #tpu.memory_space<smem>>
    %1135 = vector.broadcast %1134 : f32 to vector<16x16xf32>
    %1136 = arith.mulf %1135, %1125 : vector<16x16xf32>
    %1137 = arith.addf %1119, %1136 : vector<16x16xf32>
    %c275 = arith.constant 275 : index
    %1138 = memref.load %arg1[%c275] : memref<288xf32, #tpu.memory_space<smem>>
    %1139 = vector.broadcast %1138 : f32 to vector<16x16xf32>
    %1140 = arith.mulf %1139, %1125 : vector<16x16xf32>
    %1141 = arith.addf %1123, %1140 : vector<16x16xf32>
    %c2_239 = arith.constant 2 : index
    %c2_240 = arith.constant 2 : index
    %c0_241 = arith.constant 0 : index
    %1142 = vector.load %arg5[%c2_239, %c2_240, %c0_241] : memref<4x18x18xf32, #tpu.memory_space<vmem>>, vector<1x16x16xf32>
    %1143 = vector.shape_cast %1142 : vector<1x16x16xf32> to vector<16x16xf32>
    %c168 = arith.constant 168 : index
    %1144 = memref.load %arg1[%c168] : memref<288xf32, #tpu.memory_space<smem>>
    %1145 = vector.broadcast %1144 : f32 to vector<16x16xf32>
    %1146 = arith.mulf %1145, %1143 : vector<16x16xf32>
    %1147 = arith.addf %1129, %1146 : vector<16x16xf32>
    %c204 = arith.constant 204 : index
    %1148 = memref.load %arg1[%c204] : memref<288xf32, #tpu.memory_space<smem>>
    %1149 = vector.broadcast %1148 : f32 to vector<16x16xf32>
    %1150 = arith.mulf %1149, %1143 : vector<16x16xf32>
    %1151 = arith.addf %1133, %1150 : vector<16x16xf32>
    %c240 = arith.constant 240 : index
    %1152 = memref.load %arg1[%c240] : memref<288xf32, #tpu.memory_space<smem>>
    %1153 = vector.broadcast %1152 : f32 to vector<16x16xf32>
    %1154 = arith.mulf %1153, %1143 : vector<16x16xf32>
    %1155 = arith.addf %1137, %1154 : vector<16x16xf32>
    %c276 = arith.constant 276 : index
    %1156 = memref.load %arg1[%c276] : memref<288xf32, #tpu.memory_space<smem>>
    %1157 = vector.broadcast %1156 : f32 to vector<16x16xf32>
    %1158 = arith.mulf %1157, %1143 : vector<16x16xf32>
    %1159 = arith.addf %1141, %1158 : vector<16x16xf32>
    %c2_242 = arith.constant 2 : index
    %c2_243 = arith.constant 2 : index
    %c1_244 = arith.constant 1 : index
    %1160 = vector.load %arg5[%c2_242, %c2_243, %c1_244] : memref<4x18x18xf32, #tpu.memory_space<vmem>>, vector<1x16x16xf32>
    %1161 = vector.shape_cast %1160 : vector<1x16x16xf32> to vector<16x16xf32>
    %c169 = arith.constant 169 : index
    %1162 = memref.load %arg1[%c169] : memref<288xf32, #tpu.memory_space<smem>>
    %1163 = vector.broadcast %1162 : f32 to vector<16x16xf32>
    %1164 = arith.mulf %1163, %1161 : vector<16x16xf32>
    %1165 = arith.addf %1147, %1164 : vector<16x16xf32>
    %c205 = arith.constant 205 : index
    %1166 = memref.load %arg1[%c205] : memref<288xf32, #tpu.memory_space<smem>>
    %1167 = vector.broadcast %1166 : f32 to vector<16x16xf32>
    %1168 = arith.mulf %1167, %1161 : vector<16x16xf32>
    %1169 = arith.addf %1151, %1168 : vector<16x16xf32>
    %c241 = arith.constant 241 : index
    %1170 = memref.load %arg1[%c241] : memref<288xf32, #tpu.memory_space<smem>>
    %1171 = vector.broadcast %1170 : f32 to vector<16x16xf32>
    %1172 = arith.mulf %1171, %1161 : vector<16x16xf32>
    %1173 = arith.addf %1155, %1172 : vector<16x16xf32>
    %c277 = arith.constant 277 : index
    %1174 = memref.load %arg1[%c277] : memref<288xf32, #tpu.memory_space<smem>>
    %1175 = vector.broadcast %1174 : f32 to vector<16x16xf32>
    %1176 = arith.mulf %1175, %1161 : vector<16x16xf32>
    %1177 = arith.addf %1159, %1176 : vector<16x16xf32>
    %c2_245 = arith.constant 2 : index
    %c2_246 = arith.constant 2 : index
    %c2_247 = arith.constant 2 : index
    %1178 = vector.load %arg5[%c2_245, %c2_246, %c2_247] : memref<4x18x18xf32, #tpu.memory_space<vmem>>, vector<1x16x16xf32>
    %1179 = vector.shape_cast %1178 : vector<1x16x16xf32> to vector<16x16xf32>
    %c170 = arith.constant 170 : index
    %1180 = memref.load %arg1[%c170] : memref<288xf32, #tpu.memory_space<smem>>
    %1181 = vector.broadcast %1180 : f32 to vector<16x16xf32>
    %1182 = arith.mulf %1181, %1179 : vector<16x16xf32>
    %1183 = arith.addf %1165, %1182 : vector<16x16xf32>
    %c206 = arith.constant 206 : index
    %1184 = memref.load %arg1[%c206] : memref<288xf32, #tpu.memory_space<smem>>
    %1185 = vector.broadcast %1184 : f32 to vector<16x16xf32>
    %1186 = arith.mulf %1185, %1179 : vector<16x16xf32>
    %1187 = arith.addf %1169, %1186 : vector<16x16xf32>
    %c242 = arith.constant 242 : index
    %1188 = memref.load %arg1[%c242] : memref<288xf32, #tpu.memory_space<smem>>
    %1189 = vector.broadcast %1188 : f32 to vector<16x16xf32>
    %1190 = arith.mulf %1189, %1179 : vector<16x16xf32>
    %1191 = arith.addf %1173, %1190 : vector<16x16xf32>
    %c278 = arith.constant 278 : index
    %1192 = memref.load %arg1[%c278] : memref<288xf32, #tpu.memory_space<smem>>
    %1193 = vector.broadcast %1192 : f32 to vector<16x16xf32>
    %1194 = arith.mulf %1193, %1179 : vector<16x16xf32>
    %1195 = arith.addf %1177, %1194 : vector<16x16xf32>
    %c3_248 = arith.constant 3 : index
    %c0_249 = arith.constant 0 : index
    %c0_250 = arith.constant 0 : index
    %1196 = vector.load %arg5[%c3_248, %c0_249, %c0_250] : memref<4x18x18xf32, #tpu.memory_space<vmem>>, vector<1x16x16xf32>
    %1197 = vector.shape_cast %1196 : vector<1x16x16xf32> to vector<16x16xf32>
    %c171 = arith.constant 171 : index
    %1198 = memref.load %arg1[%c171] : memref<288xf32, #tpu.memory_space<smem>>
    %1199 = vector.broadcast %1198 : f32 to vector<16x16xf32>
    %1200 = arith.mulf %1199, %1197 : vector<16x16xf32>
    %1201 = arith.addf %1183, %1200 : vector<16x16xf32>
    %c207 = arith.constant 207 : index
    %1202 = memref.load %arg1[%c207] : memref<288xf32, #tpu.memory_space<smem>>
    %1203 = vector.broadcast %1202 : f32 to vector<16x16xf32>
    %1204 = arith.mulf %1203, %1197 : vector<16x16xf32>
    %1205 = arith.addf %1187, %1204 : vector<16x16xf32>
    %c243 = arith.constant 243 : index
    %1206 = memref.load %arg1[%c243] : memref<288xf32, #tpu.memory_space<smem>>
    %1207 = vector.broadcast %1206 : f32 to vector<16x16xf32>
    %1208 = arith.mulf %1207, %1197 : vector<16x16xf32>
    %1209 = arith.addf %1191, %1208 : vector<16x16xf32>
    %c279 = arith.constant 279 : index
    %1210 = memref.load %arg1[%c279] : memref<288xf32, #tpu.memory_space<smem>>
    %1211 = vector.broadcast %1210 : f32 to vector<16x16xf32>
    %1212 = arith.mulf %1211, %1197 : vector<16x16xf32>
    %1213 = arith.addf %1195, %1212 : vector<16x16xf32>
    %c3_251 = arith.constant 3 : index
    %c0_252 = arith.constant 0 : index
    %c1_253 = arith.constant 1 : index
    %1214 = vector.load %arg5[%c3_251, %c0_252, %c1_253] : memref<4x18x18xf32, #tpu.memory_space<vmem>>, vector<1x16x16xf32>
    %1215 = vector.shape_cast %1214 : vector<1x16x16xf32> to vector<16x16xf32>
    %c172 = arith.constant 172 : index
    %1216 = memref.load %arg1[%c172] : memref<288xf32, #tpu.memory_space<smem>>
    %1217 = vector.broadcast %1216 : f32 to vector<16x16xf32>
    %1218 = arith.mulf %1217, %1215 : vector<16x16xf32>
    %1219 = arith.addf %1201, %1218 : vector<16x16xf32>
    %c208 = arith.constant 208 : index
    %1220 = memref.load %arg1[%c208] : memref<288xf32, #tpu.memory_space<smem>>
    %1221 = vector.broadcast %1220 : f32 to vector<16x16xf32>
    %1222 = arith.mulf %1221, %1215 : vector<16x16xf32>
    %1223 = arith.addf %1205, %1222 : vector<16x16xf32>
    %c244 = arith.constant 244 : index
    %1224 = memref.load %arg1[%c244] : memref<288xf32, #tpu.memory_space<smem>>
    %1225 = vector.broadcast %1224 : f32 to vector<16x16xf32>
    %1226 = arith.mulf %1225, %1215 : vector<16x16xf32>
    %1227 = arith.addf %1209, %1226 : vector<16x16xf32>
    %c280 = arith.constant 280 : index
    %1228 = memref.load %arg1[%c280] : memref<288xf32, #tpu.memory_space<smem>>
    %1229 = vector.broadcast %1228 : f32 to vector<16x16xf32>
    %1230 = arith.mulf %1229, %1215 : vector<16x16xf32>
    %1231 = arith.addf %1213, %1230 : vector<16x16xf32>
    %c3_254 = arith.constant 3 : index
    %c0_255 = arith.constant 0 : index
    %c2_256 = arith.constant 2 : index
    %1232 = vector.load %arg5[%c3_254, %c0_255, %c2_256] : memref<4x18x18xf32, #tpu.memory_space<vmem>>, vector<1x16x16xf32>
    %1233 = vector.shape_cast %1232 : vector<1x16x16xf32> to vector<16x16xf32>
    %c173 = arith.constant 173 : index
    %1234 = memref.load %arg1[%c173] : memref<288xf32, #tpu.memory_space<smem>>
    %1235 = vector.broadcast %1234 : f32 to vector<16x16xf32>
    %1236 = arith.mulf %1235, %1233 : vector<16x16xf32>
    %1237 = arith.addf %1219, %1236 : vector<16x16xf32>
    %c209 = arith.constant 209 : index
    %1238 = memref.load %arg1[%c209] : memref<288xf32, #tpu.memory_space<smem>>
    %1239 = vector.broadcast %1238 : f32 to vector<16x16xf32>
    %1240 = arith.mulf %1239, %1233 : vector<16x16xf32>
    %1241 = arith.addf %1223, %1240 : vector<16x16xf32>
    %c245 = arith.constant 245 : index
    %1242 = memref.load %arg1[%c245] : memref<288xf32, #tpu.memory_space<smem>>
    %1243 = vector.broadcast %1242 : f32 to vector<16x16xf32>
    %1244 = arith.mulf %1243, %1233 : vector<16x16xf32>
    %1245 = arith.addf %1227, %1244 : vector<16x16xf32>
    %c281 = arith.constant 281 : index
    %1246 = memref.load %arg1[%c281] : memref<288xf32, #tpu.memory_space<smem>>
    %1247 = vector.broadcast %1246 : f32 to vector<16x16xf32>
    %1248 = arith.mulf %1247, %1233 : vector<16x16xf32>
    %1249 = arith.addf %1231, %1248 : vector<16x16xf32>
    %c3_257 = arith.constant 3 : index
    %c1_258 = arith.constant 1 : index
    %c0_259 = arith.constant 0 : index
    %1250 = vector.load %arg5[%c3_257, %c1_258, %c0_259] : memref<4x18x18xf32, #tpu.memory_space<vmem>>, vector<1x16x16xf32>
    %1251 = vector.shape_cast %1250 : vector<1x16x16xf32> to vector<16x16xf32>
    %c174 = arith.constant 174 : index
    %1252 = memref.load %arg1[%c174] : memref<288xf32, #tpu.memory_space<smem>>
    %1253 = vector.broadcast %1252 : f32 to vector<16x16xf32>
    %1254 = arith.mulf %1253, %1251 : vector<16x16xf32>
    %1255 = arith.addf %1237, %1254 : vector<16x16xf32>
    %c210 = arith.constant 210 : index
    %1256 = memref.load %arg1[%c210] : memref<288xf32, #tpu.memory_space<smem>>
    %1257 = vector.broadcast %1256 : f32 to vector<16x16xf32>
    %1258 = arith.mulf %1257, %1251 : vector<16x16xf32>
    %1259 = arith.addf %1241, %1258 : vector<16x16xf32>
    %c246 = arith.constant 246 : index
    %1260 = memref.load %arg1[%c246] : memref<288xf32, #tpu.memory_space<smem>>
    %1261 = vector.broadcast %1260 : f32 to vector<16x16xf32>
    %1262 = arith.mulf %1261, %1251 : vector<16x16xf32>
    %1263 = arith.addf %1245, %1262 : vector<16x16xf32>
    %c282 = arith.constant 282 : index
    %1264 = memref.load %arg1[%c282] : memref<288xf32, #tpu.memory_space<smem>>
    %1265 = vector.broadcast %1264 : f32 to vector<16x16xf32>
    %1266 = arith.mulf %1265, %1251 : vector<16x16xf32>
    %1267 = arith.addf %1249, %1266 : vector<16x16xf32>
    %c3_260 = arith.constant 3 : index
    %c1_261 = arith.constant 1 : index
    %c1_262 = arith.constant 1 : index
    %1268 = vector.load %arg5[%c3_260, %c1_261, %c1_262] : memref<4x18x18xf32, #tpu.memory_space<vmem>>, vector<1x16x16xf32>
    %1269 = vector.shape_cast %1268 : vector<1x16x16xf32> to vector<16x16xf32>
    %c175 = arith.constant 175 : index
    %1270 = memref.load %arg1[%c175] : memref<288xf32, #tpu.memory_space<smem>>
    %1271 = vector.broadcast %1270 : f32 to vector<16x16xf32>
    %1272 = arith.mulf %1271, %1269 : vector<16x16xf32>
    %1273 = arith.addf %1255, %1272 : vector<16x16xf32>
    %c211 = arith.constant 211 : index
    %1274 = memref.load %arg1[%c211] : memref<288xf32, #tpu.memory_space<smem>>
    %1275 = vector.broadcast %1274 : f32 to vector<16x16xf32>
    %1276 = arith.mulf %1275, %1269 : vector<16x16xf32>
    %1277 = arith.addf %1259, %1276 : vector<16x16xf32>
    %c247 = arith.constant 247 : index
    %1278 = memref.load %arg1[%c247] : memref<288xf32, #tpu.memory_space<smem>>
    %1279 = vector.broadcast %1278 : f32 to vector<16x16xf32>
    %1280 = arith.mulf %1279, %1269 : vector<16x16xf32>
    %1281 = arith.addf %1263, %1280 : vector<16x16xf32>
    %c283 = arith.constant 283 : index
    %1282 = memref.load %arg1[%c283] : memref<288xf32, #tpu.memory_space<smem>>
    %1283 = vector.broadcast %1282 : f32 to vector<16x16xf32>
    %1284 = arith.mulf %1283, %1269 : vector<16x16xf32>
    %1285 = arith.addf %1267, %1284 : vector<16x16xf32>
    %c3_263 = arith.constant 3 : index
    %c1_264 = arith.constant 1 : index
    %c2_265 = arith.constant 2 : index
    %1286 = vector.load %arg5[%c3_263, %c1_264, %c2_265] : memref<4x18x18xf32, #tpu.memory_space<vmem>>, vector<1x16x16xf32>
    %1287 = vector.shape_cast %1286 : vector<1x16x16xf32> to vector<16x16xf32>
    %c176 = arith.constant 176 : index
    %1288 = memref.load %arg1[%c176] : memref<288xf32, #tpu.memory_space<smem>>
    %1289 = vector.broadcast %1288 : f32 to vector<16x16xf32>
    %1290 = arith.mulf %1289, %1287 : vector<16x16xf32>
    %1291 = arith.addf %1273, %1290 : vector<16x16xf32>
    %c212 = arith.constant 212 : index
    %1292 = memref.load %arg1[%c212] : memref<288xf32, #tpu.memory_space<smem>>
    %1293 = vector.broadcast %1292 : f32 to vector<16x16xf32>
    %1294 = arith.mulf %1293, %1287 : vector<16x16xf32>
    %1295 = arith.addf %1277, %1294 : vector<16x16xf32>
    %c248 = arith.constant 248 : index
    %1296 = memref.load %arg1[%c248] : memref<288xf32, #tpu.memory_space<smem>>
    %1297 = vector.broadcast %1296 : f32 to vector<16x16xf32>
    %1298 = arith.mulf %1297, %1287 : vector<16x16xf32>
    %1299 = arith.addf %1281, %1298 : vector<16x16xf32>
    %c284 = arith.constant 284 : index
    %1300 = memref.load %arg1[%c284] : memref<288xf32, #tpu.memory_space<smem>>
    %1301 = vector.broadcast %1300 : f32 to vector<16x16xf32>
    %1302 = arith.mulf %1301, %1287 : vector<16x16xf32>
    %1303 = arith.addf %1285, %1302 : vector<16x16xf32>
    %c3_266 = arith.constant 3 : index
    %c2_267 = arith.constant 2 : index
    %c0_268 = arith.constant 0 : index
    %1304 = vector.load %arg5[%c3_266, %c2_267, %c0_268] : memref<4x18x18xf32, #tpu.memory_space<vmem>>, vector<1x16x16xf32>
    %1305 = vector.shape_cast %1304 : vector<1x16x16xf32> to vector<16x16xf32>
    %c177 = arith.constant 177 : index
    %1306 = memref.load %arg1[%c177] : memref<288xf32, #tpu.memory_space<smem>>
    %1307 = vector.broadcast %1306 : f32 to vector<16x16xf32>
    %1308 = arith.mulf %1307, %1305 : vector<16x16xf32>
    %1309 = arith.addf %1291, %1308 : vector<16x16xf32>
    %c213 = arith.constant 213 : index
    %1310 = memref.load %arg1[%c213] : memref<288xf32, #tpu.memory_space<smem>>
    %1311 = vector.broadcast %1310 : f32 to vector<16x16xf32>
    %1312 = arith.mulf %1311, %1305 : vector<16x16xf32>
    %1313 = arith.addf %1295, %1312 : vector<16x16xf32>
    %c249 = arith.constant 249 : index
    %1314 = memref.load %arg1[%c249] : memref<288xf32, #tpu.memory_space<smem>>
    %1315 = vector.broadcast %1314 : f32 to vector<16x16xf32>
    %1316 = arith.mulf %1315, %1305 : vector<16x16xf32>
    %1317 = arith.addf %1299, %1316 : vector<16x16xf32>
    %c285 = arith.constant 285 : index
    %1318 = memref.load %arg1[%c285] : memref<288xf32, #tpu.memory_space<smem>>
    %1319 = vector.broadcast %1318 : f32 to vector<16x16xf32>
    %1320 = arith.mulf %1319, %1305 : vector<16x16xf32>
    %1321 = arith.addf %1303, %1320 : vector<16x16xf32>
    %c3_269 = arith.constant 3 : index
    %c2_270 = arith.constant 2 : index
    %c1_271 = arith.constant 1 : index
    %1322 = vector.load %arg5[%c3_269, %c2_270, %c1_271] : memref<4x18x18xf32, #tpu.memory_space<vmem>>, vector<1x16x16xf32>
    %1323 = vector.shape_cast %1322 : vector<1x16x16xf32> to vector<16x16xf32>
    %c178 = arith.constant 178 : index
    %1324 = memref.load %arg1[%c178] : memref<288xf32, #tpu.memory_space<smem>>
    %1325 = vector.broadcast %1324 : f32 to vector<16x16xf32>
    %1326 = arith.mulf %1325, %1323 : vector<16x16xf32>
    %1327 = arith.addf %1309, %1326 : vector<16x16xf32>
    %c214 = arith.constant 214 : index
    %1328 = memref.load %arg1[%c214] : memref<288xf32, #tpu.memory_space<smem>>
    %1329 = vector.broadcast %1328 : f32 to vector<16x16xf32>
    %1330 = arith.mulf %1329, %1323 : vector<16x16xf32>
    %1331 = arith.addf %1313, %1330 : vector<16x16xf32>
    %c250 = arith.constant 250 : index
    %1332 = memref.load %arg1[%c250] : memref<288xf32, #tpu.memory_space<smem>>
    %1333 = vector.broadcast %1332 : f32 to vector<16x16xf32>
    %1334 = arith.mulf %1333, %1323 : vector<16x16xf32>
    %1335 = arith.addf %1317, %1334 : vector<16x16xf32>
    %c286 = arith.constant 286 : index
    %1336 = memref.load %arg1[%c286] : memref<288xf32, #tpu.memory_space<smem>>
    %1337 = vector.broadcast %1336 : f32 to vector<16x16xf32>
    %1338 = arith.mulf %1337, %1323 : vector<16x16xf32>
    %1339 = arith.addf %1321, %1338 : vector<16x16xf32>
    %c3_272 = arith.constant 3 : index
    %c2_273 = arith.constant 2 : index
    %c2_274 = arith.constant 2 : index
    %1340 = vector.load %arg5[%c3_272, %c2_273, %c2_274] : memref<4x18x18xf32, #tpu.memory_space<vmem>>, vector<1x16x16xf32>
    %1341 = vector.shape_cast %1340 : vector<1x16x16xf32> to vector<16x16xf32>
    %c179 = arith.constant 179 : index
    %1342 = memref.load %arg1[%c179] : memref<288xf32, #tpu.memory_space<smem>>
    %1343 = vector.broadcast %1342 : f32 to vector<16x16xf32>
    %1344 = arith.mulf %1343, %1341 : vector<16x16xf32>
    %1345 = arith.addf %1327, %1344 : vector<16x16xf32>
    %c215 = arith.constant 215 : index
    %1346 = memref.load %arg1[%c215] : memref<288xf32, #tpu.memory_space<smem>>
    %1347 = vector.broadcast %1346 : f32 to vector<16x16xf32>
    %1348 = arith.mulf %1347, %1341 : vector<16x16xf32>
    %1349 = arith.addf %1331, %1348 : vector<16x16xf32>
    %c251 = arith.constant 251 : index
    %1350 = memref.load %arg1[%c251] : memref<288xf32, #tpu.memory_space<smem>>
    %1351 = vector.broadcast %1350 : f32 to vector<16x16xf32>
    %1352 = arith.mulf %1351, %1341 : vector<16x16xf32>
    %1353 = arith.addf %1335, %1352 : vector<16x16xf32>
    %c287 = arith.constant 287 : index
    %1354 = memref.load %arg1[%c287] : memref<288xf32, #tpu.memory_space<smem>>
    %1355 = vector.broadcast %1354 : f32 to vector<16x16xf32>
    %1356 = arith.mulf %1355, %1341 : vector<16x16xf32>
    %1357 = arith.addf %1339, %1356 : vector<16x16xf32>
    %c0_275 = arith.constant 0 : index
    %c0_276 = arith.constant 0 : index
    %c0_277 = arith.constant 0 : index
    %c0_278 = arith.constant 0 : index
    %1358 = vector.load %arg3[%c0_275, %c0_276, %c0_277, %c0_278] : memref<1x4x16x16xf32, #tpu.memory_space<vmem>>, vector<1x1x16x16xf32>
    %1359 = vector.shape_cast %1358 : vector<1x1x16x16xf32> to vector<16x16xf32>
    %c4_279 = arith.constant 4 : index
    %1360 = memref.load %arg2[%c4_279] : memref<8xf32, #tpu.memory_space<smem>>
    %1361 = vector.broadcast %1360 : f32 to vector<16x16xf32>
    %1362 = arith.addf %1345, %1361 : vector<16x16xf32>
    %1363 = arith.addf %1362, %1359 : vector<16x16xf32>
    %cst_280 = arith.constant 0.000000e+00 : f32
    %1364 = vector.broadcast %cst_280 : f32 to vector<16x16xf32>
    %1365 = arith.maximumf %1363, %1364 : vector<16x16xf32>
    %c0_281 = arith.constant 0 : index
    %c0_282 = arith.constant 0 : index
    %c0_283 = arith.constant 0 : index
    %c0_284 = arith.constant 0 : index
    %1366 = vector.load %arg4[%c0_281, %c0_282, %c0_283, %c0_284] : memref<1x4x16x16xf32, #tpu.memory_space<vmem>>, vector<1x1x16x16xf32>
    %1367 = vector.shape_cast %1366 : vector<1x1x16x16xf32> to vector<16x16xf32>
    %1368 = vector.shape_cast %1365 : vector<16x16xf32> to vector<1x1x16x16xf32>
    tpu.vector_store %arg4[%c0_281, %c0_282, %c0_283, %c0_284], %1368 {strides = array<i32>} : memref<1x4x16x16xf32, #tpu.memory_space<vmem>>, vector<1x1x16x16xf32>,
    %c0_285 = arith.constant 0 : index
    %c1_286 = arith.constant 1 : index
    %c0_287 = arith.constant 0 : index
    %c0_288 = arith.constant 0 : index
    %1369 = vector.load %arg3[%c0_285, %c1_286, %c0_287, %c0_288] : memref<1x4x16x16xf32, #tpu.memory_space<vmem>>, vector<1x1x16x16xf32>
    %1370 = vector.shape_cast %1369 : vector<1x1x16x16xf32> to vector<16x16xf32>
    %c5_289 = arith.constant 5 : index
    %1371 = memref.load %arg2[%c5_289] : memref<8xf32, #tpu.memory_space<smem>>
    %1372 = vector.broadcast %1371 : f32 to vector<16x16xf32>
    %1373 = arith.addf %1349, %1372 : vector<16x16xf32>
    %1374 = arith.addf %1373, %1370 : vector<16x16xf32>
    %cst_290 = arith.constant 0.000000e+00 : f32
    %1375 = vector.broadcast %cst_290 : f32 to vector<16x16xf32>
    %1376 = arith.maximumf %1374, %1375 : vector<16x16xf32>
    %c0_291 = arith.constant 0 : index
    %c1_292 = arith.constant 1 : index
    %c0_293 = arith.constant 0 : index
    %c0_294 = arith.constant 0 : index
    %1377 = vector.load %arg4[%c0_291, %c1_292, %c0_293, %c0_294] : memref<1x4x16x16xf32, #tpu.memory_space<vmem>>, vector<1x1x16x16xf32>
    %1378 = vector.shape_cast %1377 : vector<1x1x16x16xf32> to vector<16x16xf32>
    %1379 = vector.shape_cast %1376 : vector<16x16xf32> to vector<1x1x16x16xf32>
    tpu.vector_store %arg4[%c0_291, %c1_292, %c0_293, %c0_294], %1379 {strides = array<i32>} : memref<1x4x16x16xf32, #tpu.memory_space<vmem>>, vector<1x1x16x16xf32>,
    %c0_295 = arith.constant 0 : index
    %c2_296 = arith.constant 2 : index
    %c0_297 = arith.constant 0 : index
    %c0_298 = arith.constant 0 : index
    %1380 = vector.load %arg3[%c0_295, %c2_296, %c0_297, %c0_298] : memref<1x4x16x16xf32, #tpu.memory_space<vmem>>, vector<1x1x16x16xf32>
    %1381 = vector.shape_cast %1380 : vector<1x1x16x16xf32> to vector<16x16xf32>
    %c6_299 = arith.constant 6 : index
    %1382 = memref.load %arg2[%c6_299] : memref<8xf32, #tpu.memory_space<smem>>
    %1383 = vector.broadcast %1382 : f32 to vector<16x16xf32>
    %1384 = arith.addf %1353, %1383 : vector<16x16xf32>
    %1385 = arith.addf %1384, %1381 : vector<16x16xf32>
    %cst_300 = arith.constant 0.000000e+00 : f32
    %1386 = vector.broadcast %cst_300 : f32 to vector<16x16xf32>
    %1387 = arith.maximumf %1385, %1386 : vector<16x16xf32>
    %c0_301 = arith.constant 0 : index
    %c2_302 = arith.constant 2 : index
    %c0_303 = arith.constant 0 : index
    %c0_304 = arith.constant 0 : index
    %1388 = vector.load %arg4[%c0_301, %c2_302, %c0_303, %c0_304] : memref<1x4x16x16xf32, #tpu.memory_space<vmem>>, vector<1x1x16x16xf32>
    %1389 = vector.shape_cast %1388 : vector<1x1x16x16xf32> to vector<16x16xf32>
    %1390 = vector.shape_cast %1387 : vector<16x16xf32> to vector<1x1x16x16xf32>
    tpu.vector_store %arg4[%c0_301, %c2_302, %c0_303, %c0_304], %1390 {strides = array<i32>} : memref<1x4x16x16xf32, #tpu.memory_space<vmem>>, vector<1x1x16x16xf32>,
    %c0_305 = arith.constant 0 : index
    %c3_306 = arith.constant 3 : index
    %c0_307 = arith.constant 0 : index
    %c0_308 = arith.constant 0 : index
    %1391 = vector.load %arg3[%c0_305, %c3_306, %c0_307, %c0_308] : memref<1x4x16x16xf32, #tpu.memory_space<vmem>>, vector<1x1x16x16xf32>
    %1392 = vector.shape_cast %1391 : vector<1x1x16x16xf32> to vector<16x16xf32>
    %c7_309 = arith.constant 7 : index
    %1393 = memref.load %arg2[%c7_309] : memref<8xf32, #tpu.memory_space<smem>>
    %1394 = vector.broadcast %1393 : f32 to vector<16x16xf32>
    %1395 = arith.addf %1357, %1394 : vector<16x16xf32>
    %1396 = arith.addf %1395, %1392 : vector<16x16xf32>
    %cst_310 = arith.constant 0.000000e+00 : f32
    %1397 = vector.broadcast %cst_310 : f32 to vector<16x16xf32>
    %1398 = arith.maximumf %1396, %1397 : vector<16x16xf32>
    %c0_311 = arith.constant 0 : index
    %c3_312 = arith.constant 3 : index
    %c0_313 = arith.constant 0 : index
    %c0_314 = arith.constant 0 : index
    %1399 = vector.load %arg4[%c0_311, %c3_312, %c0_313, %c0_314] : memref<1x4x16x16xf32, #tpu.memory_space<vmem>>, vector<1x1x16x16xf32>
    %1400 = vector.shape_cast %1399 : vector<1x1x16x16xf32> to vector<16x16xf32>
    %1401 = vector.shape_cast %1398 : vector<16x16xf32> to vector<1x1x16x16xf32>
    tpu.vector_store %arg4[%c0_311, %c3_312, %c0_313, %c0_314], %1401 {strides = array<i32>} : memref<1x4x16x16xf32, #tpu.memory_space<vmem>>, vector<1x1x16x16xf32>,
    return
  }
  func.func @transform_0(%arg0: i32, %arg1: memref<288xf32, #tpu.memory_space<smem>>, %arg2: memref<8xf32, #tpu.memory_space<smem>>) -> (i32, i32, i32, i32) {
    %c0_i32 = arith.constant 0 : i32
    %c0_i32_0 = arith.constant 0 : i32
    %c0_i32_1 = arith.constant 0 : i32
    %c0_i32_2 = arith.constant 0 : i32
    return %arg0, %c0_i32, %c0_i32_0, %c0_i32_1 : i32, i32, i32, i32
  }
  func.func @transform_1(%arg0: i32, %arg1: memref<288xf32, #tpu.memory_space<smem>>, %arg2: memref<8xf32, #tpu.memory_space<smem>>) -> (i32, i32, i32, i32) {
    %c0_i32 = arith.constant 0 : i32
    %c0_i32_0 = arith.constant 0 : i32
    %c0_i32_1 = arith.constant 0 : i32
    %c0_i32_2 = arith.constant 0 : i32
    return %arg0, %c0_i32, %c0_i32_0, %c0_i32_1 : i32, i32, i32, i32
  }
}

</mosaic_0001>

<llo_original>
// kernel: tpu_custom_call.1
$region0: #{tpu_custom_call.1}
  #allocation0 [shape = 'u32[]', space=smem, size = 0x4, offset = 0x4, fixed_abs, tag = 'smem constant byte address 0x4 - core index']
  #allocation1 [shape = 'u32[144,128]{1,0:T(1,128)}', space=vmem, size = 0x12000, scoped, tag = 'internal scratch']
  #allocation2 [shape = 'f32[4,18,18]{2,1,0:T(8,128)}', space=vmem, size = 0xc000, scoped, tag = 'scratch operand']
  #allocation3 [shape = 's32[1]{0}', space=sflag, size = 0x4, scoped, tag = 'scoped memory for tpu_custom_call.1']
  #allocation4 [shape = 'u8[1536]{0}', space=smem, size = 0x600, scoped, tag = 'prefetched SMEM operand 0']
  #allocation5 [shape = 'u8[512]{0}', space=smem, size = 0x200, scoped, tag = 'prefetched SMEM operand 1']
  %s0 = inlined_call_operand.hbm [shape: f32[288], index: 0, kind: input, shape index: {}]
  %s1 = inlined_call_operand.hbm [shape: f32[8], index: 1, kind: input, shape index: {}]
  %s2 = inlined_call_operand.hbm [shape: f32[2,4,16,16], index: 2, kind: input, shape index: {}]
  %s3 = inlined_call_operand.hbm [shape: f32[2,4,16,16], index: 3, kind: output, shape index: {}]
  %s4 = sld [smem:[#allocation0]]
  $region41: #{tpu_custom_call.1} parent=0
    _
  %s6 = ssub.s32 1, %s4
  %s7 = scalar_select 0, %s6, %s4
  %9 = dma.hbm_to_smem %s0, 48, [#allocation4], [#allocation3]
  %11 = dma.hbm_to_smem %s1, 16, [#allocation5], [#allocation3]
  %12 = dma.done [#allocation3], 64
  %13 = sfence
  $region1: #{tpu_custom_call.1} parent=0
    #allocation6 [shape = 'u8[65536]{0}', space=vmem, size = 0x10000, scoped, tag = 'input window, operand 2']
    #allocation7 [shape = 's32[2]{0}', space=sflag, size = 0x8, scoped, tag = 'scoped memory for tpu_custom_call.1']
    #allocation8 [shape = 's32[2]{0}', space=sflag, size = 0x8, scoped, tag = 'scoped memory for tpu_custom_call.1']
    #allocation9 [shape = 'u8[65536]{0}', space=vmem, size = 0x10000, scoped, tag = 'output window, operand 0']
    %14 = vsyncpa [#allocation7], 0
    %s15 = scalar_lea.sflag [#allocation7], 1
    %16 = vsyncpa %s15, 0
    %17 = vsyncpa [#allocation8], 0
    %s18 = scalar_lea.sflag [#allocation8], 1
    %19 = vsyncpa %s18, 0
    loop: start=0, step=1, limit=4
    $region2: #{tpu_custom_call.1} parent=1 // loop_pre_header
      _
    $region3: #{tpu_custom_call.1} parent=1 // loop_header
      %s21 = sphi 0, %s25
      %p22 = scmp.ge.s32.totalorder %s21, 4
      %s31 = sphi 0, %s33
      %s34 = sphi 0, %s31
      %s35 = sphi 0, %s34
      %s51 = sphi 0, %s35
      %s57 = sphi 0, %s59
      %s60 = sphi 0, %s57
      %s61 = sphi 0, %s60
      %s77 = sphi 0, %s61
    $region4: #{tpu_custom_call.1} parent=1 // loop_header_branch
      %24 = sbr.rel (%p22) target = $region8
    $region5: #{tpu_custom_call.1} parent=1 // loop_body
      %s26 = ssub.s32 %s21, 1
      %s27 = ssub.s32 %s21, 2
      %s28 = sadd.s32 %s21, 1
      %s29 = ssub.s32 %s21, %s28
      %p30 = scmp.eq.s32.totalorder %s29, 0
      %s32 = sadd.s32 %s31, 1
      %s33 = scalar_select %p30, %s31, %s32
      %p36 = pneg %p30
      %p37 = scmp.eq.s32.totalorder %s21, 1
      %p38 = por %p36, %p37
      %p39 = scmp.ne.s32.totalorder %s31, %s34
      %p40 = scmp.eq.s32.totalorder %s21, 0
      %p41 = por %p39, %p40
      %p42 = scmp.ne.s32.totalorder %s31, %s34
      %p43 = scmp.eq.s32.totalorder %s26, 1
      %p44 = por %p42, %p43
      %p45 = scmp.ne.s32.totalorder %s34, %s35
      %p46 = scmp.eq.s32.totalorder %s26, 0
      %p47 = por %p45, %p46
      %p48 = scmp.ne.s32.totalorder %s34, %s35
      %p49 = scmp.eq.s32.totalorder %s27, 1
      %p50 = por %p48, %p49
      %p52 = scmp.ne.s32.totalorder %s35, %s51
      %p53 = scmp.eq.s32.totalorder %s27, 0
      %p54 = por %p52, %p53
      %s55 = ssub.s32 %s21, %s28
      %p56 = scmp.eq.s32.totalorder %s55, 0
      %s58 = sadd.s32 %s57, 1
      %s59 = scalar_select %p56, %s57, %s58
      %p62 = pneg %p56
      %p63 = scmp.eq.s32.totalorder %s21, 1
      %p64 = por %p62, %p63
      %p65 = scmp.ne.s32.totalorder %s57, %s60
      %p66 = scmp.eq.s32.totalorder %s21, 0
      %p67 = por %p65, %p66
      %p68 = scmp.ne.s32.totalorder %s57, %s60
      %p69 = scmp.eq.s32.totalorder %s26, 1
      %p70 = por %p68, %p69
      %p71 = scmp.ne.s32.totalorder %s60, %s61
      %p72 = scmp.eq.s32.totalorder %s26, 0
      %p73 = por %p71, %p72
      %p74 = scmp.ne.s32.totalorder %s60, %s61
      %p75 = scmp.eq.s32.totalorder %s27, 1
      %p76 = por %p74, %p75
      %p78 = scmp.ne.s32.totalorder %s61, %s77
      %p79 = scmp.eq.s32.totalorder %s27, 0
      %p80 = por %p78, %p79
      %p81 = scmp.le.s32.totalorder 1, %s21
      %p82 = scmp.lt.s32.totalorder %s21, 3
      %p83 = pnand %p81, %p82
      %p84 = pneg %p83
      // Predicated region
      $region9: #{tpu_custom_call.1} parent=5 // pred_check
        _
      $region10: #{tpu_custom_call.1} parent=5 // pred_check_branch
        %86 = sbr.rel (%p83) target = $region12
      $region11: #{tpu_custom_call.1} parent=5 // pred_region
        %s87 = ssub.s32 %s21, 1
      $region12: #{tpu_custom_call.1} parent=5 // pred_fallthru
        _
      %p88 = scmp.lt.s32.totalorder %s21, 2
      // Predicated region
      $region13: #{tpu_custom_call.1} parent=5 // pred_check
        %p89 = pneg %p88
      $region14: #{tpu_custom_call.1} parent=5 // pred_check_branch
        %91 = sbr.rel (%p89) target = $region16
      $region15: #{tpu_custom_call.1} parent=5 // pred_region
        // Predicated region
        $region17: #{tpu_custom_call.1} parent=15 // pred_check
          %p92 = pneg %p41
        $region18: #{tpu_custom_call.1} parent=15 // pred_check_branch
          %94 = sbr.rel (%p92) target = $region20
        $region19: #{tpu_custom_call.1} parent=15 // pred_region
          %s95 = sand.u32 %s31, 1
          %s96 = scalar_lea.sflag [#allocation7], %s95
          %s97 = sand.u32 %s31, 1
          %s98 = smul.addr %s97, 64
          %s99 = scalar_lea.vmem [#allocation6], %s98
          %s101 = ssub.s32 1024, 1024
          %102 = vsyncadd %s96, %s101
          %s103 = smul.addr %s21, 8
          %s104 = smul.addr %s103, 128
          %s105 = scalar_lea.hbm %s2, %s104
          %s106 = sshll.u32 %s99, 4
          %s107 = int_to_ptr.vmem [resolvable:$true] %s106
          %112 = dma.hbm_to_vmem [thread:$0]  %s105, 1024, %s107, %s96, 128, 128, 8
        $region20: #{tpu_custom_call.1} parent=15 // pred_fallthru
          _
      $region16: #{tpu_custom_call.1} parent=5 // pred_fallthru
        _
      %p113 = scmp.le.s32.totalorder 1, %s21
      %p114 = scmp.lt.s32.totalorder %s21, 3
      %p115 = pnand %p113, %p114
      %p116 = pneg %p115
      // Predicated region
      $region21: #{tpu_custom_call.1} parent=5 // pred_check
        _
      $region22: #{tpu_custom_call.1} parent=5 // pred_check_branch
        %118 = sbr.rel (%p115) target = $region24
      $region23: #{tpu_custom_call.1} parent=5 // pred_region
        %s119 = ssub.s32 %s21, 1
        %s120 = sand.u32 %s34, 1
        %s121 = scalar_lea.sflag [#allocation7], %s120
        %s122 = sand.u32 %s34, 1
        %s123 = smul.addr %s122, 64
        %s124 = scalar_lea.vmem [#allocation6], %s123
        // Predicated region
        $region25: #{tpu_custom_call.1} parent=23 // pred_check
          %p125 = pneg %p47
        $region26: #{tpu_custom_call.1} parent=23 // pred_check_branch
          %127 = sbr.rel (%p125) target = $region28
        $region27: #{tpu_custom_call.1} parent=23 // pred_region
          %128 = dma.done %s121, 1024
        $region28: #{tpu_custom_call.1} parent=23 // pred_fallthru
          _
        %s129 = sand.u32 %s34, 1
        %s130 = scalar_lea.sflag [#allocation7], %s129
        %s131 = sand.u32 %s34, 1
        %s132 = smul.addr %s131, 64
        %s133 = scalar_lea.vmem [#allocation6], %s132
        %p134 = pneg %p47
        %p135 = pneg %p44
        %p136 = pneg %p73
        %p137 = pneg %p70
        %s138 = sand.u32 %s60, 1
        %s139 = scalar_lea.sflag [#allocation8], %s138
        %s140 = sand.u32 %s60, 1
        %s141 = smul.addr %s140, 64
        %s142 = scalar_lea.vmem [#allocation9], %s141
        %vm143 = vcmask 146432
        %144 = vst.msk [vmem:[#allocation2] sm:$0xff] %vm143, 0.0
        %145 = vst.msk [vmem:[#allocation2 + $0x8] sm:$0xff] %vm143, 0.0
        %vm146 = vcmask 140288
        %147 = vst.msk [vmem:[#allocation2 + $0x10] sm:$0x3] %vm146, 0.0
        %148 = vst.msk [vmem:[#allocation2 + $0x18] sm:$0xff] %vm143, 0.0
        %149 = vst.msk [vmem:[#allocation2 + $0x20] sm:$0xff] %vm143, 0.0
        %150 = vst.msk [vmem:[#allocation2 + $0x28] sm:$0x3] %vm146, 0.0
        %151 = vst.msk [vmem:[#allocation2 + $0x30] sm:$0xff] %vm143, 0.0
        %152 = vst.msk [vmem:[#allocation2 + $0x38] sm:$0xff] %vm143, 0.0
        %153 = vst.msk [vmem:[#allocation2 + $0x40] sm:$0x3] %vm146, 0.0
        %154 = vst.msk [vmem:[#allocation2 + $0x48] sm:$0xff] %vm143, 0.0
        %155 = vst.msk [vmem:[#allocation2 + $0x50] sm:$0xff] %vm143, 0.0
        %156 = vst.msk [vmem:[#allocation2 + $0x58] sm:$0x3] %vm146, 0.0
        %v157 = vld [vmem:[%s124] sm:$0xff]
        %v158 = vld [vmem:[%s124 + $0x8] sm:$0xff]
        %161 = vrot.lane.b32.xlu0 %v157, 1
        %v162 = vpop.permute.xlu0 %161
        %163 = vrot.lane.b32.xlu0 %v158, 1
        %v164 = vpop.permute.xlu0 %163
        %vm167 = vcmask 138248
        %168 = vst.msk [vmem:[#allocation2 + $0x1] sm:$0xff] %vm167, %v162
        %169 = vst.msk [vmem:[#allocation2 + $0x9] sm:$0xff] %vm167, %v164
        %s170 = scalar_lea.vmem %s124, 16 [#allocation6]
        %v171 = vld [vmem:[%s170] sm:$0xff]
        %v172 = vld [vmem:[%s170 + $0x8] sm:$0xff]
        %175 = vrot.lane.b32.xlu0 %v171, 1
        %v176 = vpop.permute.xlu0 %175
        %177 = vrot.lane.b32.xlu0 %v172, 1
        %v178 = vpop.permute.xlu0 %177
        %s181 = scalar_lea.vmem [#allocation2], 24
        %182 = vst.msk [vmem:[%s181 + $0x1] sm:$0xff] %vm167, %v176
        %183 = vst.msk [vmem:[%s181 + $0x9] sm:$0xff] %vm167, %v178
        %s184 = scalar_lea.vmem %s124, 32 [#allocation6]
        %v185 = vld [vmem:[%s184] sm:$0xff]
        %v186 = vld [vmem:[%s184 + $0x8] sm:$0xff]
        %189 = vrot.lane.b32.xlu0 %v185, 1
        %v190 = vpop.permute.xlu0 %189
        %191 = vrot.lane.b32.xlu0 %v186, 1
        %v192 = vpop.permute.xlu0 %191
        %s195 = scalar_lea.vmem [#allocation2], 48
        %196 = vst.msk [vmem:[%s195 + $0x1] sm:$0xff] %vm167, %v190
        %197 = vst.msk [vmem:[%s195 + $0x9] sm:$0xff] %vm167, %v192
        %s198 = scalar_lea.vmem %s124, 48 [#allocation6]
        %v199 = vld [vmem:[%s198] sm:$0xff]
        %v200 = vld [vmem:[%s198 + $0x8] sm:$0xff]
        %203 = vrot.lane.b32.xlu0 %v199, 1
        %v204 = vpop.permute.xlu0 %203
        %205 = vrot.lane.b32.xlu0 %v200, 1
        %v206 = vpop.permute.xlu0 %205
        %s209 = scalar_lea.vmem [#allocation2], 72
        %210 = vst.msk [vmem:[%s209 + $0x1] sm:$0xff] %vm167, %v204
        %211 = vst.msk [vmem:[%s209 + $0x9] sm:$0xff] %vm167, %v206
        %v212 = vld [vmem:[#allocation2] sm:$0xff]
        %v213 = vld [vmem:[#allocation2 + $0x8] sm:$0xff]
        %s214 = sld [smem:[#allocation4]]
        %v215 = vstv %s214
        %v216 = vmul.f32 %v215, %v212
        %v217 = vmul.f32 %v215, %v213
        %v218 = vadd.f32 %v216, 0.0
        %v219 = vadd.f32 %v217, 0.0
        %s220 = sld [smem:[#allocation4 + $0x24]]
        %v221 = vstv %s220
        %v222 = vmul.f32 %v221, %v212
        %v223 = vmul.f32 %v221, %v213
        %v224 = vadd.f32 %v222, 0.0
        %v225 = vadd.f32 %v223, 0.0
        %s226 = sld [smem:[#allocation4 + $0x48]]
        %v227 = vstv %s226
        %v228 = vmul.f32 %v227, %v212
        %v229 = vmul.f32 %v227, %v213
        %v230 = vadd.f32 %v228, 0.0
        %v231 = vadd.f32 %v229, 0.0
        %s232 = sld [smem:[#allocation4 + $0x6c]]
        %v233 = vstv %s232
        %v234 = vmul.f32 %v233, %v212
        %v235 = vmul.f32 %v233, %v213
        %v236 = vadd.f32 %v234, 0.0
        %v237 = vadd.f32 %v235, 0.0
        %s238 = sld [smem:[#allocation4 + $0x1]]
        %v239 = vstv %s238
        %v240 = vmul.f32 %v239, %v212
        %v241 = vmul.f32 %v239, %v213
        %244 = vrot.lane.b32.xlu0 %v240, 127
        %v245 = vpop.permute.xlu0 %244
        %246 = vrot.lane.b32.xlu0 %v241, 127
        %v247 = vpop.permute.xlu0 %246
        %v250 = vadd.f32 %v218, %v245
        %v251 = vadd.f32 %v219, %v247
        %s252 = sld [smem:[#allocation4 + $0x25]]
        %v253 = vstv %s252
        %v254 = vmul.f32 %v253, %v212
        %v255 = vmul.f32 %v253, %v213
        %258 = vrot.lane.b32.xlu0 %v254, 127
        %v259 = vpop.permute.xlu0 %258
        %260 = vrot.lane.b32.xlu0 %v255, 127
        %v261 = vpop.permute.xlu0 %260
        %v264 = vadd.f32 %v224, %v259
        %v265 = vadd.f32 %v225, %v261
        %s266 = sld [smem:[#allocation4 + $0x49]]
        %v267 = vstv %s266
        %v268 = vmul.f32 %v267, %v212
        %v269 = vmul.f32 %v267, %v213
        %272 = vrot.lane.b32.xlu0 %v268, 127
        %v273 = vpop.permute.xlu0 %272
        %274 = vrot.lane.b32.xlu0 %v269, 127
        %v275 = vpop.permute.xlu0 %274
        %v278 = vadd.f32 %v230, %v273
        %v279 = vadd.f32 %v231, %v275
        %s280 = sld [smem:[#allocation4 + $0x6d]]
        %v281 = vstv %s280
        %v282 = vmul.f32 %v281, %v212
        %v283 = vmul.f32 %v281, %v213
        %286 = vrot.lane.b32.xlu0 %v282, 127
        %v287 = vpop.permute.xlu0 %286
        %288 = vrot.lane.b32.xlu0 %v283, 127
        %v289 = vpop.permute.xlu0 %288
        %v292 = vadd.f32 %v236, %v287
        %v293 = vadd.f32 %v237, %v289
        %s294 = sld [smem:[#allocation4 + $0x2]]
        %v295 = vstv %s294
        %v296 = vmul.f32 %v295, %v212
        %v297 = vmul.f32 %v295, %v213
        %300 = vrot.lane.b32.xlu0 %v296, 126
        %v301 = vpop.permute.xlu0 %300
        %302 = vrot.lane.b32.xlu0 %v297, 126
        %v303 = vpop.permute.xlu0 %302
        %v306 = vadd.f32 %v250, %v301
        %v307 = vadd.f32 %v251, %v303
        %s308 = sld [smem:[#allocation4 + $0x26]]
        %v309 = vstv %s308
        %v310 = vmul.f32 %v309, %v212
        %v311 = vmul.f32 %v309, %v213
        %314 = vrot.lane.b32.xlu0 %v310, 126
        %v315 = vpop.permute.xlu0 %314
        %316 = vrot.lane.b32.xlu0 %v311, 126
        %v317 = vpop.permute.xlu0 %316
        %v320 = vadd.f32 %v264, %v315
        %v321 = vadd.f32 %v265, %v317
        %s322 = sld [smem:[#allocation4 + $0x4a]]
        %v323 = vstv %s322
        %v324 = vmul.f32 %v323, %v212
        %v325 = vmul.f32 %v323, %v213
        %328 = vrot.lane.b32.xlu0 %v324, 126
        %v329 = vpop.permute.xlu0 %328
        %330 = vrot.lane.b32.xlu0 %v325, 126
        %v331 = vpop.permute.xlu0 %330
        %v334 = vadd.f32 %v278, %v329
        %v335 = vadd.f32 %v279, %v331
        %s336 = sld [smem:[#allocation4 + $0x6e]]
        %v337 = vstv %s336
        %v338 = vmul.f32 %v337, %v212
        %v339 = vmul.f32 %v337, %v213
        %342 = vrot.lane.b32.xlu0 %v338, 126
        %v343 = vpop.permute.xlu0 %342
        %344 = vrot.lane.b32.xlu0 %v339, 126
        %v345 = vpop.permute.xlu0 %344
        %v348 = vadd.f32 %v292, %v343
        %v349 = vadd.f32 %v293, %v345
        %v350 = vld [vmem:[#allocation2 + $0x1] sm:$0xff]
        %v351 = vld [vmem:[#allocation2 + $0x9] sm:$0xff]
        %s352 = sld [smem:[#allocation4 + $0x3]]
        %v353 = vstv %s352
        %v354 = vmul.f32 %v353, %v350
        %v355 = vmul.f32 %v353, %v351
        %v356 = vadd.f32 %v306, %v354
        %v357 = vadd.f32 %v307, %v355
        %s358 = sld [smem:[#allocation4 + $0x27]]
        %v359 = vstv %s358
        %v360 = vmul.f32 %v359, %v350
        %v361 = vmul.f32 %v359, %v351
        %v362 = vadd.f32 %v320, %v360
        %v363 = vadd.f32 %v321, %v361
        %s364 = sld [smem:[#allocation4 + $0x4b]]
        %v365 = vstv %s364
        %v366 = vmul.f32 %v365, %v350
        %v367 = vmul.f32 %v365, %v351
        %v368 = vadd.f32 %v334, %v366
        %v369 = vadd.f32 %v335, %v367
        %s370 = sld [smem:[#allocation4 + $0x6f]]
        %v371 = vstv %s370
        %v372 = vmul.f32 %v371, %v350
        %v373 = vmul.f32 %v371, %v351
        %v374 = vadd.f32 %v348, %v372
        %v375 = vadd.f32 %v349, %v373
        %s376 = sld [smem:[#allocation4 + $0x4]]
        %v377 = vstv %s376
        %v378 = vmul.f32 %v377, %v350
        %v379 = vmul.f32 %v377, %v351
        %382 = vrot.lane.b32.xlu0 %v378, 127
        %v383 = vpop.permute.xlu0 %382
        %384 = vrot.lane.b32.xlu0 %v379, 127
        %v385 = vpop.permute.xlu0 %384
        %v388 = vadd.f32 %v356, %v383
        %v389 = vadd.f32 %v357, %v385
        %s390 = sld [smem:[#allocation4 + $0x28]]
        %v391 = vstv %s390
        %v392 = vmul.f32 %v391, %v350
        %v393 = vmul.f32 %v391, %v351
        %396 = vrot.lane.b32.xlu0 %v392, 127
        %v397 = vpop.permute.xlu0 %396
        %398 = vrot.lane.b32.xlu0 %v393, 127
        %v399 = vpop.permute.xlu0 %398
        %v402 = vadd.f32 %v362, %v397
        %v403 = vadd.f32 %v363, %v399
        %s404 = sld [smem:[#allocation4 + $0x4c]]
        %v405 = vstv %s404
        %v406 = vmul.f32 %v405, %v350
        %v407 = vmul.f32 %v405, %v351
        %410 = vrot.lane.b32.xlu0 %v406, 127
        %v411 = vpop.permute.xlu0 %410
        %412 = vrot.lane.b32.xlu0 %v407, 127
        %v413 = vpop.permute.xlu0 %412
        %v416 = vadd.f32 %v368, %v411
        %v417 = vadd.f32 %v369, %v413
        %s418 = sld [smem:[#allocation4 + $0x70]]
        %v419 = vstv %s418
        %v420 = vmul.f32 %v419, %v350
        %v421 = vmul.f32 %v419, %v351
        %424 = vrot.lane.b32.xlu0 %v420, 127
        %v425 = vpop.permute.xlu0 %424
        %426 = vrot.lane.b32.xlu0 %v421, 127
        %v427 = vpop.permute.xlu0 %426
        %v430 = vadd.f32 %v374, %v425
        %v431 = vadd.f32 %v375, %v427
        %s432 = sld [smem:[#allocation4 + $0x5]]
        %v433 = vstv %s432
        %v434 = vmul.f32 %v433, %v350
        %v435 = vmul.f32 %v433, %v351
        %438 = vrot.lane.b32.xlu0 %v434, 126
        %v439 = vpop.permute.xlu0 %438
        %440 = vrot.lane.b32.xlu0 %v435, 126
        %v441 = vpop.permute.xlu0 %440
        %v444 = vadd.f32 %v388, %v439
        %v445 = vadd.f32 %v389, %v441
        %s446 = sld [smem:[#allocation4 + $0x29]]
        %v447 = vstv %s446
        %v448 = vmul.f32 %v447, %v350
        %v449 = vmul.f32 %v447, %v351
        %452 = vrot.lane.b32.xlu0 %v448, 126
        %v453 = vpop.permute.xlu0 %452
        %454 = vrot.lane.b32.xlu0 %v449, 126
        %v455 = vpop.permute.xlu0 %454
        %v458 = vadd.f32 %v402, %v453
        %v459 = vadd.f32 %v403, %v455
        %s460 = sld [smem:[#allocation4 + $0x4d]]
        %v461 = vstv %s460
        %v462 = vmul.f32 %v461, %v350
        %v463 = vmul.f32 %v461, %v351
        %466 = vrot.lane.b32.xlu0 %v462, 126
        %v467 = vpop.permute.xlu0 %466
        %468 = vrot.lane.b32.xlu0 %v463, 126
        %v469 = vpop.permute.xlu0 %468
        %v472 = vadd.f32 %v416, %v467
        %v473 = vadd.f32 %v417, %v469
        %s474 = sld [smem:[#allocation4 + $0x71]]
        %v475 = vstv %s474
        %v476 = vmul.f32 %v475, %v350
        %v477 = vmul.f32 %v475, %v351
        %480 = vrot.lane.b32.xlu0 %v476, 126
        %v481 = vpop.permute.xlu0 %480
        %482 = vrot.lane.b32.xlu0 %v477, 126
        %v483 = vpop.permute.xlu0 %482
        %v486 = vadd.f32 %v430, %v481
        %v487 = vadd.f32 %v431, %v483
        %v488 = vld [vmem:[#allocation2 + $0x2] sm:$0xff]
        %v489 = vld [vmem:[#allocation2 + $0xa] sm:$0xff]
        %s490 = sld [smem:[#allocation4 + $0x6]]
        %v491 = vstv %s490
        %v492 = vmul.f32 %v491, %v488
        %v493 = vmul.f32 %v491, %v489
        %v494 = vadd.f32 %v444, %v492
        %v495 = vadd.f32 %v445, %v493
        %s496 = sld [smem:[#allocation4 + $0x2a]]
        %v497 = vstv %s496
        %v498 = vmul.f32 %v497, %v488
        %v499 = vmul.f32 %v497, %v489
        %v500 = vadd.f32 %v458, %v498
        %v501 = vadd.f32 %v459, %v499
        %s502 = sld [smem:[#allocation4 + $0x4e]]
        %v503 = vstv %s502
        %v504 = vmul.f32 %v503, %v488
        %v505 = vmul.f32 %v503, %v489
        %v506 = vadd.f32 %v472, %v504
        %v507 = vadd.f32 %v473, %v505
        %s508 = sld [smem:[#allocation4 + $0x72]]
        %v509 = vstv %s508
        %v510 = vmul.f32 %v509, %v488
        %v511 = vmul.f32 %v509, %v489
        %v512 = vadd.f32 %v486, %v510
        %v513 = vadd.f32 %v487, %v511
        %s514 = sld [smem:[#allocation4 + $0x7]]
        %v515 = vstv %s514
        %v516 = vmul.f32 %v515, %v488
        %v517 = vmul.f32 %v515, %v489
        %520 = vrot.lane.b32.xlu0 %v516, 127
        %v521 = vpop.permute.xlu0 %520
        %522 = vrot.lane.b32.xlu0 %v517, 127
        %v523 = vpop.permute.xlu0 %522
        %v526 = vadd.f32 %v494, %v521
        %v527 = vadd.f32 %v495, %v523
        %s528 = sld [smem:[#allocation4 + $0x2b]]
        %v529 = vstv %s528
        %v530 = vmul.f32 %v529, %v488
        %v531 = vmul.f32 %v529, %v489
        %534 = vrot.lane.b32.xlu0 %v530, 127
        %v535 = vpop.permute.xlu0 %534
        %536 = vrot.lane.b32.xlu0 %v531, 127
        %v537 = vpop.permute.xlu0 %536
        %v540 = vadd.f32 %v500, %v535
        %v541 = vadd.f32 %v501, %v537
        %s542 = sld [smem:[#allocation4 + $0x4f]]
        %v543 = vstv %s542
        %v544 = vmul.f32 %v543, %v488
        %v545 = vmul.f32 %v543, %v489
        %548 = vrot.lane.b32.xlu0 %v544, 127
        %v549 = vpop.permute.xlu0 %548
        %550 = vrot.lane.b32.xlu0 %v545, 127
        %v551 = vpop.permute.xlu0 %550
        %v554 = vadd.f32 %v506, %v549
        %v555 = vadd.f32 %v507, %v551
        %s556 = sld [smem:[#allocation4 + $0x73]]
        %v557 = vstv %s556
        %v558 = vmul.f32 %v557, %v488
        %v559 = vmul.f32 %v557, %v489
        %562 = vrot.lane.b32.xlu0 %v558, 127
        %v563 = vpop.permute.xlu0 %562
        %564 = vrot.lane.b32.xlu0 %v559, 127
        %v565 = vpop.permute.xlu0 %564
        %v568 = vadd.f32 %v512, %v563
        %v569 = vadd.f32 %v513, %v565
        %s570 = sld [smem:[#allocation4 + $0x8]]
        %v571 = vstv %s570
        %v572 = vmul.f32 %v571, %v488
        %v573 = vmul.f32 %v571, %v489
        %576 = vrot.lane.b32.xlu0 %v572, 126
        %v577 = vpop.permute.xlu0 %576
        %578 = vrot.lane.b32.xlu0 %v573, 126
        %v579 = vpop.permute.xlu0 %578
        %v582 = vadd.f32 %v526, %v577
        %v583 = vadd.f32 %v527, %v579
        %s584 = sld [smem:[#allocation4 + $0x2c]]
        %v585 = vstv %s584
        %v586 = vmul.f32 %v585, %v488
        %v587 = vmul.f32 %v585, %v489
        %590 = vrot.lane.b32.xlu0 %v586, 126
        %v591 = vpop.permute.xlu0 %590
        %592 = vrot.lane.b32.xlu0 %v587, 126
        %v593 = vpop.permute.xlu0 %592
        %v596 = vadd.f32 %v540, %v591
        %v597 = vadd.f32 %v541, %v593
        %s598 = sld [smem:[#allocation4 + $0x50]]
        %v599 = vstv %s598
        %v600 = vmul.f32 %v599, %v488
        %v601 = vmul.f32 %v599, %v489
        %604 = vrot.lane.b32.xlu0 %v600, 126
        %v605 = vpop.permute.xlu0 %604
        %606 = vrot.lane.b32.xlu0 %v601, 126
        %v607 = vpop.permute.xlu0 %606
        %v610 = vadd.f32 %v554, %v605
        %v611 = vadd.f32 %v555, %v607
        %s612 = sld [smem:[#allocation4 + $0x74]]
        %v613 = vstv %s612
        %v614 = vmul.f32 %v613, %v488
        %v615 = vmul.f32 %v613, %v489
        %618 = vrot.lane.b32.xlu0 %v614, 126
        %v619 = vpop.permute.xlu0 %618
        %620 = vrot.lane.b32.xlu0 %v615, 126
        %v621 = vpop.permute.xlu0 %620
        %v624 = vadd.f32 %v568, %v619
        %v625 = vadd.f32 %v569, %v621
        %v626 = vld [vmem:[%s181] sm:$0xff]
        %v627 = vld [vmem:[%s181 + $0x8] sm:$0xff]
        %s628 = sld [smem:[#allocation4 + $0x9]]
        %v629 = vstv %s628
        %v630 = vmul.f32 %v629, %v626
        %v631 = vmul.f32 %v629, %v627
        %v632 = vadd.f32 %v582, %v630
        %v633 = vadd.f32 %v583, %v631
        %s634 = sld [smem:[#allocation4 + $0x2d]]
        %v635 = vstv %s634
        %v636 = vmul.f32 %v635, %v626
        %v637 = vmul.f32 %v635, %v627
        %v638 = vadd.f32 %v596, %v636
        %v639 = vadd.f32 %v597, %v637
        %s640 = sld [smem:[#allocation4 + $0x51]]
        %v641 = vstv %s640
        %v642 = vmul.f32 %v641, %v626
        %v643 = vmul.f32 %v641, %v627
        %v644 = vadd.f32 %v610, %v642
        %v645 = vadd.f32 %v611, %v643
        %s646 = sld [smem:[#allocation4 + $0x75]]
        %v647 = vstv %s646
        %v648 = vmul.f32 %v647, %v626
        %v649 = vmul.f32 %v647, %v627
        %v650 = vadd.f32 %v624, %v648
        %v651 = vadd.f32 %v625, %v649
        %s652 = sld [smem:[#allocation4 + $0xa]]
        %v653 = vstv %s652
        %v654 = vmul.f32 %v653, %v626
        %v655 = vmul.f32 %v653, %v627
        %658 = vrot.lane.b32.xlu0 %v654, 127
        %v659 = vpop.permute.xlu0 %658
        %660 = vrot.lane.b32.xlu0 %v655, 127
        %v661 = vpop.permute.xlu0 %660
        %v664 = vadd.f32 %v632, %v659
        %v665 = vadd.f32 %v633, %v661
        %s666 = sld [smem:[#allocation4 + $0x2e]]
        %v667 = vstv %s666
        %v668 = vmul.f32 %v667, %v626
        %v669 = vmul.f32 %v667, %v627
        %672 = vrot.lane.b32.xlu0 %v668, 127
        %v673 = vpop.permute.xlu0 %672
        %674 = vrot.lane.b32.xlu0 %v669, 127
        %v675 = vpop.permute.xlu0 %674
        %v678 = vadd.f32 %v638, %v673
        %v679 = vadd.f32 %v639, %v675
        %s680 = sld [smem:[#allocation4 + $0x52]]
        %v681 = vstv %s680
        %v682 = vmul.f32 %v681, %v626
        %v683 = vmul.f32 %v681, %v627
        %686 = vrot.lane.b32.xlu0 %v682, 127
        %v687 = vpop.permute.xlu0 %686
        %688 = vrot.lane.b32.xlu0 %v683, 127
        %v689 = vpop.permute.xlu0 %688
        %v692 = vadd.f32 %v644, %v687
        %v693 = vadd.f32 %v645, %v689
        %s694 = sld [smem:[#allocation4 + $0x76]]
        %v695 = vstv %s694
        %v696 = vmul.f32 %v695, %v626
        %v697 = vmul.f32 %v695, %v627
        %700 = vrot.lane.b32.xlu0 %v696, 127
        %v701 = vpop.permute.xlu0 %700
        %702 = vrot.lane.b32.xlu0 %v697, 127
        %v703 = vpop.permute.xlu0 %702
        %v706 = vadd.f32 %v650, %v701
        %v707 = vadd.f32 %v651, %v703
        %s708 = sld [smem:[#allocation4 + $0xb]]
        %v709 = vstv %s708
        %v710 = vmul.f32 %v709, %v626
        %v711 = vmul.f32 %v709, %v627
        %714 = vrot.lane.b32.xlu0 %v710, 126
        %v715 = vpop.permute.xlu0 %714
        %716 = vrot.lane.b32.xlu0 %v711, 126
        %v717 = vpop.permute.xlu0 %716
        %v720 = vadd.f32 %v664, %v715
        %v721 = vadd.f32 %v665, %v717
        %s722 = sld [smem:[#allocation4 + $0x2f]]
        %v723 = vstv %s722
        %v724 = vmul.f32 %v723, %v626
        %v725 = vmul.f32 %v723, %v627
        %728 = vrot.lane.b32.xlu0 %v724, 126
        %v729 = vpop.permute.xlu0 %728
        %730 = vrot.lane.b32.xlu0 %v725, 126
        %v731 = vpop.permute.xlu0 %730
        %v734 = vadd.f32 %v678, %v729
        %v735 = vadd.f32 %v679, %v731
        %s736 = sld [smem:[#allocation4 + $0x53]]
        %v737 = vstv %s736
        %v738 = vmul.f32 %v737, %v626
        %v739 = vmul.f32 %v737, %v627
        %742 = vrot.lane.b32.xlu0 %v738, 126
        %v743 = vpop.permute.xlu0 %742
        %744 = vrot.lane.b32.xlu0 %v739, 126
        %v745 = vpop.permute.xlu0 %744
        %v748 = vadd.f32 %v692, %v743
        %v749 = vadd.f32 %v693, %v745
        %s750 = sld [smem:[#allocation4 + $0x77]]
        %v751 = vstv %s750
        %v752 = vmul.f32 %v751, %v626
        %v753 = vmul.f32 %v751, %v627
        %756 = vrot.lane.b32.xlu0 %v752, 126
        %v757 = vpop.permute.xlu0 %756
        %758 = vrot.lane.b32.xlu0 %v753, 126
        %v759 = vpop.permute.xlu0 %758
        %v762 = vadd.f32 %v706, %v757
        %v763 = vadd.f32 %v707, %v759
        %v764 = vld [vmem:[%s181 + $0x1] sm:$0xff]
        %v765 = vld [vmem:[%s181 + $0x9] sm:$0xff]
        %s766 = sld [smem:[#allocation4 + $0xc]]
        %v767 = vstv %s766
        %v768 = vmul.f32 %v767, %v764
        %v769 = vmul.f32 %v767, %v765
        %v770 = vadd.f32 %v720, %v768
        %v771 = vadd.f32 %v721, %v769
        %s772 = sld [smem:[#allocation4 + $0x30]]
        %v773 = vstv %s772
        %v774 = vmul.f32 %v773, %v764
        %v775 = vmul.f32 %v773, %v765
        %v776 = vadd.f32 %v734, %v774
        %v777 = vadd.f32 %v735, %v775
        %s778 = sld [smem:[#allocation4 + $0x54]]
        %v779 = vstv %s778
        %v780 = vmul.f32 %v779, %v764
        %v781 = vmul.f32 %v779, %v765
        %v782 = vadd.f32 %v748, %v780
        %v783 = vadd.f32 %v749, %v781
        %s784 = sld [smem:[#allocation4 + $0x78]]
        %v785 = vstv %s784
        %v786 = vmul.f32 %v785, %v764
        %v787 = vmul.f32 %v785, %v765
        %v788 = vadd.f32 %v762, %v786
        %v789 = vadd.f32 %v763, %v787
        %s790 = sld [smem:[#allocation4 + $0xd]]
        %v791 = vstv %s790
        %v792 = vmul.f32 %v791, %v764
        %v793 = vmul.f32 %v791, %v765
        %796 = vrot.lane.b32.xlu0 %v792, 127
        %v797 = vpop.permute.xlu0 %796
        %798 = vrot.lane.b32.xlu0 %v793, 127
        %v799 = vpop.permute.xlu0 %798
        %v802 = vadd.f32 %v770, %v797
        %v803 = vadd.f32 %v771, %v799
        %s804 = sld [smem:[#allocation4 + $0x31]]
        %v805 = vstv %s804
        %v806 = vmul.f32 %v805, %v764
        %v807 = vmul.f32 %v805, %v765
        %810 = vrot.lane.b32.xlu0 %v806, 127
        %v811 = vpop.permute.xlu0 %810
        %812 = vrot.lane.b32.xlu0 %v807, 127
        %v813 = vpop.permute.xlu0 %812
        %v816 = vadd.f32 %v776, %v811
        %v817 = vadd.f32 %v777, %v813
        %s818 = sld [smem:[#allocation4 + $0x55]]
        %v819 = vstv %s818
        %v820 = vmul.f32 %v819, %v764
        %v821 = vmul.f32 %v819, %v765
        %824 = vrot.lane.b32.xlu0 %v820, 127
        %v825 = vpop.permute.xlu0 %824
        %826 = vrot.lane.b32.xlu0 %v821, 127
        %v827 = vpop.permute.xlu0 %826
        %v830 = vadd.f32 %v782, %v825
        %v831 = vadd.f32 %v783, %v827
        %s832 = sld [smem:[#allocation4 + $0x79]]
        %v833 = vstv %s832
        %v834 = vmul.f32 %v833, %v764
        %v835 = vmul.f32 %v833, %v765
        %838 = vrot.lane.b32.xlu0 %v834, 127
        %v839 = vpop.permute.xlu0 %838
        %840 = vrot.lane.b32.xlu0 %v835, 127
        %v841 = vpop.permute.xlu0 %840
        %v844 = vadd.f32 %v788, %v839
        %v845 = vadd.f32 %v789, %v841
        %s846 = sld [smem:[#allocation4 + $0xe]]
        %v847 = vstv %s846
        %v848 = vmul.f32 %v847, %v764
        %v849 = vmul.f32 %v847, %v765
        %852 = vrot.lane.b32.xlu0 %v848, 126
        %v853 = vpop.permute.xlu0 %852
        %854 = vrot.lane.b32.xlu0 %v849, 126
        %v855 = vpop.permute.xlu0 %854
        %v858 = vadd.f32 %v802, %v853
        %v859 = vadd.f32 %v803, %v855
        %s860 = sld [smem:[#allocation4 + $0x32]]
        %v861 = vstv %s860
        %v862 = vmul.f32 %v861, %v764
        %v863 = vmul.f32 %v861, %v765
        %866 = vrot.lane.b32.xlu0 %v862, 126
        %v867 = vpop.permute.xlu0 %866
        %868 = vrot.lane.b32.xlu0 %v863, 126
        %v869 = vpop.permute.xlu0 %868
        %v872 = vadd.f32 %v816, %v867
        %v873 = vadd.f32 %v817, %v869
        %s874 = sld [smem:[#allocation4 + $0x56]]
        %v875 = vstv %s874
        %v876 = vmul.f32 %v875, %v764
        %v877 = vmul.f32 %v875, %v765
        %880 = vrot.lane.b32.xlu0 %v876, 126
        %v881 = vpop.permute.xlu0 %880
        %882 = vrot.lane.b32.xlu0 %v877, 126
        %v883 = vpop.permute.xlu0 %882
        %v886 = vadd.f32 %v830, %v881
        %v887 = vadd.f32 %v831, %v883
        %s888 = sld [smem:[#allocation4 + $0x7a]]
        %v889 = vstv %s888
        %v890 = vmul.f32 %v889, %v764
        %v891 = vmul.f32 %v889, %v765
        %894 = vrot.lane.b32.xlu0 %v890, 126
        %v895 = vpop.permute.xlu0 %894
        %896 = vrot.lane.b32.xlu0 %v891, 126
        %v897 = vpop.permute.xlu0 %896
        %v900 = vadd.f32 %v844, %v895
        %v901 = vadd.f32 %v845, %v897
        %v902 = vld [vmem:[%s181 + $0x2] sm:$0xff]
        %v903 = vld [vmem:[%s181 + $0xa] sm:$0xff]
        %s904 = sld [smem:[#allocation4 + $0xf]]
        %v905 = vstv %s904
        %v906 = vmul.f32 %v905, %v902
        %v907 = vmul.f32 %v905, %v903
        %v908 = vadd.f32 %v858, %v906
        %v909 = vadd.f32 %v859, %v907
        %s910 = sld [smem:[#allocation4 + $0x33]]
        %v911 = vstv %s910
        %v912 = vmul.f32 %v911, %v902
        %v913 = vmul.f32 %v911, %v903
        %v914 = vadd.f32 %v872, %v912
        %v915 = vadd.f32 %v873, %v913
        %s916 = sld [smem:[#allocation4 + $0x57]]
        %v917 = vstv %s916
        %v918 = vmul.f32 %v917, %v902
        %v919 = vmul.f32 %v917, %v903
        %v920 = vadd.f32 %v886, %v918
        %v921 = vadd.f32 %v887, %v919
        %s922 = sld [smem:[#allocation4 + $0x7b]]
        %v923 = vstv %s922
        %v924 = vmul.f32 %v923, %v902
        %v925 = vmul.f32 %v923, %v903
        %v926 = vadd.f32 %v900, %v924
        %v927 = vadd.f32 %v901, %v925
        %s928 = sld [smem:[#allocation4 + $0x10]]
        %v929 = vstv %s928
        %v930 = vmul.f32 %v929, %v902
        %v931 = vmul.f32 %v929, %v903
        %934 = vrot.lane.b32.xlu0 %v930, 127
        %v935 = vpop.permute.xlu0 %934
        %936 = vrot.lane.b32.xlu0 %v931, 127
        %v937 = vpop.permute.xlu0 %936
        %v940 = vadd.f32 %v908, %v935
        %v941 = vadd.f32 %v909, %v937
        %s942 = sld [smem:[#allocation4 + $0x34]]
        %v943 = vstv %s942
        %v944 = vmul.f32 %v943, %v902
        %v945 = vmul.f32 %v943, %v903
        %948 = vrot.lane.b32.xlu0 %v944, 127
        %v949 = vpop.permute.xlu0 %948
        %950 = vrot.lane.b32.xlu0 %v945, 127
        %v951 = vpop.permute.xlu0 %950
        %v954 = vadd.f32 %v914, %v949
        %v955 = vadd.f32 %v915, %v951
        %s956 = sld [smem:[#allocation4 + $0x58]]
        %v957 = vstv %s956
        %v958 = vmul.f32 %v957, %v902
        %v959 = vmul.f32 %v957, %v903
        %962 = vrot.lane.b32.xlu0 %v958, 127
        %v963 = vpop.permute.xlu0 %962
        %964 = vrot.lane.b32.xlu0 %v959, 127
        %v965 = vpop.permute.xlu0 %964
        %v968 = vadd.f32 %v920, %v963
        %v969 = vadd.f32 %v921, %v965
        %s970 = sld [smem:[#allocation4 + $0x7c]]
        %v971 = vstv %s970
        %v972 = vmul.f32 %v971, %v902
        %v973 = vmul.f32 %v971, %v903
        %976 = vrot.lane.b32.xlu0 %v972, 127
        %v977 = vpop.permute.xlu0 %976
        %978 = vrot.lane.b32.xlu0 %v973, 127
        %v979 = vpop.permute.xlu0 %978
        %v982 = vadd.f32 %v926, %v977
        %v983 = vadd.f32 %v927, %v979
        %s984 = sld [smem:[#allocation4 + $0x11]]
        %v985 = vstv %s984
        %v986 = vmul.f32 %v985, %v902
        %v987 = vmul.f32 %v985, %v903
        %990 = vrot.lane.b32.xlu0 %v986, 126
        %v991 = vpop.permute.xlu0 %990
        %992 = vrot.lane.b32.xlu0 %v987, 126
        %v993 = vpop.permute.xlu0 %992
        %v996 = vadd.f32 %v940, %v991
        %v997 = vadd.f32 %v941, %v993
        %s998 = sld [smem:[#allocation4 + $0x35]]
        %v999 = vstv %s998
        %v1000 = vmul.f32 %v999, %v902
        %v1001 = vmul.f32 %v999, %v903
        %1004 = vrot.lane.b32.xlu0 %v1000, 126
        %v1005 = vpop.permute.xlu0 %1004
        %1006 = vrot.lane.b32.xlu0 %v1001, 126
        %v1007 = vpop.permute.xlu0 %1006
        %v1010 = vadd.f32 %v954, %v1005
        %v1011 = vadd.f32 %v955, %v1007
        %s1012 = sld [smem:[#allocation4 + $0x59]]
        %v1013 = vstv %s1012
        %v1014 = vmul.f32 %v1013, %v902
        %v1015 = vmul.f32 %v1013, %v903
        %1018 = vrot.lane.b32.xlu0 %v1014, 126
        %v1019 = vpop.permute.xlu0 %1018
        %1020 = vrot.lane.b32.xlu0 %v1015, 126
        %v1021 = vpop.permute.xlu0 %1020
        %v1024 = vadd.f32 %v968, %v1019
        %v1025 = vadd.f32 %v969, %v1021
        %s1026 = sld [smem:[#allocation4 + $0x7d]]
        %v1027 = vstv %s1026
        %v1028 = vmul.f32 %v1027, %v902
        %v1029 = vmul.f32 %v1027, %v903
        %1032 = vrot.lane.b32.xlu0 %v1028, 126
        %v1033 = vpop.permute.xlu0 %1032
        %1034 = vrot.lane.b32.xlu0 %v1029, 126
        %v1035 = vpop.permute.xlu0 %1034
        %v1038 = vadd.f32 %v982, %v1033
        %v1039 = vadd.f32 %v983, %v1035
        %v1040 = vld [vmem:[%s195] sm:$0xff]
        %v1041 = vld [vmem:[%s195 + $0x8] sm:$0xff]
        %s1042 = sld [smem:[#allocation4 + $0x12]]
        %v1043 = vstv %s1042
        %v1044 = vmul.f32 %v1043, %v1040
        %v1045 = vmul.f32 %v1043, %v1041
        %v1046 = vadd.f32 %v996, %v1044
        %v1047 = vadd.f32 %v997, %v1045
        %s1048 = sld [smem:[#allocation4 + $0x36]]
        %v1049 = vstv %s1048
        %v1050 = vmul.f32 %v1049, %v1040
        %v1051 = vmul.f32 %v1049, %v1041
        %v1052 = vadd.f32 %v1010, %v1050
        %v1053 = vadd.f32 %v1011, %v1051
        %s1054 = sld [smem:[#allocation4 + $0x5a]]
        %v1055 = vstv %s1054
        %v1056 = vmul.f32 %v1055, %v1040
        %v1057 = vmul.f32 %v1055, %v1041
        %v1058 = vadd.f32 %v1024, %v1056
        %v1059 = vadd.f32 %v1025, %v1057
        %s1060 = sld [smem:[#allocation4 + $0x7e]]
        %v1061 = vstv %s1060
        %v1062 = vmul.f32 %v1061, %v1040
        %v1063 = vmul.f32 %v1061, %v1041
        %v1064 = vadd.f32 %v1038, %v1062
        %v1065 = vadd.f32 %v1039, %v1063
        %s1066 = sld [smem:[#allocation4 + $0x13]]
        %v1067 = vstv %s1066
        %v1068 = vmul.f32 %v1067, %v1040
        %v1069 = vmul.f32 %v1067, %v1041
        %1072 = vrot.lane.b32.xlu0 %v1068, 127
        %v1073 = vpop.permute.xlu0 %1072
        %1074 = vrot.lane.b32.xlu0 %v1069, 127
        %v1075 = vpop.permute.xlu0 %1074
        %v1078 = vadd.f32 %v1046, %v1073
        %v1079 = vadd.f32 %v1047, %v1075
        %s1080 = sld [smem:[#allocation4 + $0x37]]
        %v1081 = vstv %s1080
        %v1082 = vmul.f32 %v1081, %v1040
        %v1083 = vmul.f32 %v1081, %v1041
        %1086 = vrot.lane.b32.xlu0 %v1082, 127
        %v1087 = vpop.permute.xlu0 %1086
        %1088 = vrot.lane.b32.xlu0 %v1083, 127
        %v1089 = vpop.permute.xlu0 %1088
        %v1092 = vadd.f32 %v1052, %v1087
        %v1093 = vadd.f32 %v1053, %v1089
        %s1094 = sld [smem:[#allocation4 + $0x5b]]
        %v1095 = vstv %s1094
        %v1096 = vmul.f32 %v1095, %v1040
        %v1097 = vmul.f32 %v1095, %v1041
        %1100 = vrot.lane.b32.xlu0 %v1096, 127
        %v1101 = vpop.permute.xlu0 %1100
        %1102 = vrot.lane.b32.xlu0 %v1097, 127
        %v1103 = vpop.permute.xlu0 %1102
        %v1106 = vadd.f32 %v1058, %v1101
        %v1107 = vadd.f32 %v1059, %v1103
        %s1108 = sld [smem:[#allocation4 + $0x7f]]
        %v1109 = vstv %s1108
        %v1110 = vmul.f32 %v1109, %v1040
        %v1111 = vmul.f32 %v1109, %v1041
        %1114 = vrot.lane.b32.xlu0 %v1110, 127
        %v1115 = vpop.permute.xlu0 %1114
        %1116 = vrot.lane.b32.xlu0 %v1111, 127
        %v1117 = vpop.permute.xlu0 %1116
        %v1120 = vadd.f32 %v1064, %v1115
        %v1121 = vadd.f32 %v1065, %v1117
        %s1122 = sld [smem:[#allocation4 + $0x14]]
        %v1123 = vstv %s1122
        %v1124 = vmul.f32 %v1123, %v1040
        %v1125 = vmul.f32 %v1123, %v1041
        %1128 = vrot.lane.b32.xlu0 %v1124, 126
        %v1129 = vpop.permute.xlu0 %1128
        %1130 = vrot.lane.b32.xlu0 %v1125, 126
        %v1131 = vpop.permute.xlu0 %1130
        %v1134 = vadd.f32 %v1078, %v1129
        %v1135 = vadd.f32 %v1079, %v1131
        %s1136 = sld [smem:[#allocation4 + $0x38]]
        %v1137 = vstv %s1136
        %v1138 = vmul.f32 %v1137, %v1040
        %v1139 = vmul.f32 %v1137, %v1041
        %1142 = vrot.lane.b32.xlu0 %v1138, 126
        %v1143 = vpop.permute.xlu0 %1142
        %1144 = vrot.lane.b32.xlu0 %v1139, 126
        %v1145 = vpop.permute.xlu0 %1144
        %v1148 = vadd.f32 %v1092, %v1143
        %v1149 = vadd.f32 %v1093, %v1145
        %s1150 = sld [smem:[#allocation4 + $0x5c]]
        %v1151 = vstv %s1150
        %v1152 = vmul.f32 %v1151, %v1040
        %v1153 = vmul.f32 %v1151, %v1041
        %1156 = vrot.lane.b32.xlu0 %v1152, 126
        %v1157 = vpop.permute.xlu0 %1156
        %1158 = vrot.lane.b32.xlu0 %v1153, 126
        %v1159 = vpop.permute.xlu0 %1158
        %v1162 = vadd.f32 %v1106, %v1157
        %v1163 = vadd.f32 %v1107, %v1159
        %s1164 = sld [smem:[#allocation4 + $0x80]]
        %v1165 = vstv %s1164
        %v1166 = vmul.f32 %v1165, %v1040
        %v1167 = vmul.f32 %v1165, %v1041
        %1170 = vrot.lane.b32.xlu0 %v1166, 126
        %v1171 = vpop.permute.xlu0 %1170
        %1172 = vrot.lane.b32.xlu0 %v1167, 126
        %v1173 = vpop.permute.xlu0 %1172
        %v1176 = vadd.f32 %v1120, %v1171
        %v1177 = vadd.f32 %v1121, %v1173
        %v1178 = vld [vmem:[%s195 + $0x1] sm:$0xff]
        %v1179 = vld [vmem:[%s195 + $0x9] sm:$0xff]
        %s1180 = sld [smem:[#allocation4 + $0x15]]
        %v1181 = vstv %s1180
        %v1182 = vmul.f32 %v1181, %v1178
        %v1183 = vmul.f32 %v1181, %v1179
        %v1184 = vadd.f32 %v1134, %v1182
        %v1185 = vadd.f32 %v1135, %v1183
        %s1186 = sld [smem:[#allocation4 + $0x39]]
        %v1187 = vstv %s1186
        %v1188 = vmul.f32 %v1187, %v1178
        %v1189 = vmul.f32 %v1187, %v1179
        %v1190 = vadd.f32 %v1148, %v1188
        %v1191 = vadd.f32 %v1149, %v1189
        %s1192 = sld [smem:[#allocation4 + $0x5d]]
        %v1193 = vstv %s1192
        %v1194 = vmul.f32 %v1193, %v1178
        %v1195 = vmul.f32 %v1193, %v1179
        %v1196 = vadd.f32 %v1162, %v1194
        %v1197 = vadd.f32 %v1163, %v1195
        %s1198 = sld [smem:[#allocation4 + $0x81]]
        %v1199 = vstv %s1198
        %v1200 = vmul.f32 %v1199, %v1178
        %v1201 = vmul.f32 %v1199, %v1179
        %v1202 = vadd.f32 %v1176, %v1200
        %v1203 = vadd.f32 %v1177, %v1201
        %s1204 = sld [smem:[#allocation4 + $0x16]]
        %v1205 = vstv %s1204
        %v1206 = vmul.f32 %v1205, %v1178
        %v1207 = vmul.f32 %v1205, %v1179
        %1210 = vrot.lane.b32.xlu0 %v1206, 127
        %v1211 = vpop.permute.xlu0 %1210
        %1212 = vrot.lane.b32.xlu0 %v1207, 127
        %v1213 = vpop.permute.xlu0 %1212
        %v1216 = vadd.f32 %v1184, %v1211
        %v1217 = vadd.f32 %v1185, %v1213
        %s1218 = sld [smem:[#allocation4 + $0x3a]]
        %v1219 = vstv %s1218
        %v1220 = vmul.f32 %v1219, %v1178
        %v1221 = vmul.f32 %v1219, %v1179
        %1224 = vrot.lane.b32.xlu0 %v1220, 127
        %v1225 = vpop.permute.xlu0 %1224
        %1226 = vrot.lane.b32.xlu0 %v1221, 127
        %v1227 = vpop.permute.xlu0 %1226
        %v1230 = vadd.f32 %v1190, %v1225
        %v1231 = vadd.f32 %v1191, %v1227
        %s1232 = sld [smem:[#allocation4 + $0x5e]]
        %v1233 = vstv %s1232
        %v1234 = vmul.f32 %v1233, %v1178
        %v1235 = vmul.f32 %v1233, %v1179
        %1238 = vrot.lane.b32.xlu0 %v1234, 127
        %v1239 = vpop.permute.xlu0 %1238
        %1240 = vrot.lane.b32.xlu0 %v1235, 127
        %v1241 = vpop.permute.xlu0 %1240
        %v1244 = vadd.f32 %v1196, %v1239
        %v1245 = vadd.f32 %v1197, %v1241
        %s1246 = sld [smem:[#allocation4 + $0x82]]
        %v1247 = vstv %s1246
        %v1248 = vmul.f32 %v1247, %v1178
        %v1249 = vmul.f32 %v1247, %v1179
        %1252 = vrot.lane.b32.xlu0 %v1248, 127
        %v1253 = vpop.permute.xlu0 %1252
        %1254 = vrot.lane.b32.xlu0 %v1249, 127
        %v1255 = vpop.permute.xlu0 %1254
        %v1258 = vadd.f32 %v1202, %v1253
        %v1259 = vadd.f32 %v1203, %v1255
        %s1260 = sld [smem:[#allocation4 + $0x17]]
        %v1261 = vstv %s1260
        %v1262 = vmul.f32 %v1261, %v1178
        %v1263 = vmul.f32 %v1261, %v1179
        %1266 = vrot.lane.b32.xlu0 %v1262, 126
        %v1267 = vpop.permute.xlu0 %1266
        %1268 = vrot.lane.b32.xlu0 %v1263, 126
        %v1269 = vpop.permute.xlu0 %1268
        %v1272 = vadd.f32 %v1216, %v1267
        %v1273 = vadd.f32 %v1217, %v1269
        %s1274 = sld [smem:[#allocation4 + $0x3b]]
        %v1275 = vstv %s1274
        %v1276 = vmul.f32 %v1275, %v1178
        %v1277 = vmul.f32 %v1275, %v1179
        %1280 = vrot.lane.b32.xlu0 %v1276, 126
        %v1281 = vpop.permute.xlu0 %1280
        %1282 = vrot.lane.b32.xlu0 %v1277, 126
        %v1283 = vpop.permute.xlu0 %1282
        %v1286 = vadd.f32 %v1230, %v1281
        %v1287 = vadd.f32 %v1231, %v1283
        %s1288 = sld [smem:[#allocation4 + $0x5f]]
        %v1289 = vstv %s1288
        %v1290 = vmul.f32 %v1289, %v1178
        %v1291 = vmul.f32 %v1289, %v1179
        %1294 = vrot.lane.b32.xlu0 %v1290, 126
        %v1295 = vpop.permute.xlu0 %1294
        %1296 = vrot.lane.b32.xlu0 %v1291, 126
        %v1297 = vpop.permute.xlu0 %1296
        %v1300 = vadd.f32 %v1244, %v1295
        %v1301 = vadd.f32 %v1245, %v1297
        %s1302 = sld [smem:[#allocation4 + $0x83]]
        %v1303 = vstv %s1302
        %v1304 = vmul.f32 %v1303, %v1178
        %v1305 = vmul.f32 %v1303, %v1179
        %1308 = vrot.lane.b32.xlu0 %v1304, 126
        %v1309 = vpop.permute.xlu0 %1308
        %1310 = vrot.lane.b32.xlu0 %v1305, 126
        %v1311 = vpop.permute.xlu0 %1310
        %v1314 = vadd.f32 %v1258, %v1309
        %v1315 = vadd.f32 %v1259, %v1311
        %v1316 = vld [vmem:[%s195 + $0x2] sm:$0xff]
        %v1317 = vld [vmem:[%s195 + $0xa] sm:$0xff]
        %s1318 = sld [smem:[#allocation4 + $0x18]]
        %v1319 = vstv %s1318
        %v1320 = vmul.f32 %v1319, %v1316
        %v1321 = vmul.f32 %v1319, %v1317
        %v1322 = vadd.f32 %v1272, %v1320
        %v1323 = vadd.f32 %v1273, %v1321
        %s1324 = sld [smem:[#allocation4 + $0x3c]]
        %v1325 = vstv %s1324
        %v1326 = vmul.f32 %v1325, %v1316
        %v1327 = vmul.f32 %v1325, %v1317
        %v1328 = vadd.f32 %v1286, %v1326
        %v1329 = vadd.f32 %v1287, %v1327
        %s1330 = sld [smem:[#allocation4 + $0x60]]
        %v1331 = vstv %s1330
        %v1332 = vmul.f32 %v1331, %v1316
        %v1333 = vmul.f32 %v1331, %v1317
        %v1334 = vadd.f32 %v1300, %v1332
        %v1335 = vadd.f32 %v1301, %v1333
        %s1336 = sld [smem:[#allocation4 + $0x84]]
        %v1337 = vstv %s1336
        %v1338 = vmul.f32 %v1337, %v1316
        %v1339 = vmul.f32 %v1337, %v1317
        %v1340 = vadd.f32 %v1314, %v1338
        %v1341 = vadd.f32 %v1315, %v1339
        %s1342 = sld [smem:[#allocation4 + $0x19]]
        %v1343 = vstv %s1342
        %v1344 = vmul.f32 %v1343, %v1316
        %v1345 = vmul.f32 %v1343, %v1317
        %1348 = vrot.lane.b32.xlu0 %v1344, 127
        %v1349 = vpop.permute.xlu0 %1348
        %1350 = vrot.lane.b32.xlu0 %v1345, 127
        %v1351 = vpop.permute.xlu0 %1350
        %v1354 = vadd.f32 %v1322, %v1349
        %v1355 = vadd.f32 %v1323, %v1351
        %s1356 = sld [smem:[#allocation4 + $0x3d]]
        %v1357 = vstv %s1356
        %v1358 = vmul.f32 %v1357, %v1316
        %v1359 = vmul.f32 %v1357, %v1317
        %1362 = vrot.lane.b32.xlu0 %v1358, 127
        %v1363 = vpop.permute.xlu0 %1362
        %1364 = vrot.lane.b32.xlu0 %v1359, 127
        %v1365 = vpop.permute.xlu0 %1364
        %v1368 = vadd.f32 %v1328, %v1363
        %v1369 = vadd.f32 %v1329, %v1365
        %s1370 = sld [smem:[#allocation4 + $0x61]]
        %v1371 = vstv %s1370
        %v1372 = vmul.f32 %v1371, %v1316
        %v1373 = vmul.f32 %v1371, %v1317
        %1376 = vrot.lane.b32.xlu0 %v1372, 127
        %v1377 = vpop.permute.xlu0 %1376
        %1378 = vrot.lane.b32.xlu0 %v1373, 127
        %v1379 = vpop.permute.xlu0 %1378
        %v1382 = vadd.f32 %v1334, %v1377
        %v1383 = vadd.f32 %v1335, %v1379
        %s1384 = sld [smem:[#allocation4 + $0x85]]
        %v1385 = vstv %s1384
        %v1386 = vmul.f32 %v1385, %v1316
        %v1387 = vmul.f32 %v1385, %v1317
        %1390 = vrot.lane.b32.xlu0 %v1386, 127
        %v1391 = vpop.permute.xlu0 %1390
        %1392 = vrot.lane.b32.xlu0 %v1387, 127
        %v1393 = vpop.permute.xlu0 %1392
        %v1396 = vadd.f32 %v1340, %v1391
        %v1397 = vadd.f32 %v1341, %v1393
        %s1398 = sld [smem:[#allocation4 + $0x1a]]
        %v1399 = vstv %s1398
        %v1400 = vmul.f32 %v1399, %v1316
        %v1401 = vmul.f32 %v1399, %v1317
        %1404 = vrot.lane.b32.xlu0 %v1400, 126
        %v1405 = vpop.permute.xlu0 %1404
        %1406 = vrot.lane.b32.xlu0 %v1401, 126
        %v1407 = vpop.permute.xlu0 %1406
        %v1410 = vadd.f32 %v1354, %v1405
        %v1411 = vadd.f32 %v1355, %v1407
        %s1412 = sld [smem:[#allocation4 + $0x3e]]
        %v1413 = vstv %s1412
        %v1414 = vmul.f32 %v1413, %v1316
        %v1415 = vmul.f32 %v1413, %v1317
        %1418 = vrot.lane.b32.xlu0 %v1414, 126
        %v1419 = vpop.permute.xlu0 %1418
        %1420 = vrot.lane.b32.xlu0 %v1415, 126
        %v1421 = vpop.permute.xlu0 %1420
        %v1424 = vadd.f32 %v1368, %v1419
        %v1425 = vadd.f32 %v1369, %v1421
        %s1426 = sld [smem:[#allocation4 + $0x62]]
        %v1427 = vstv %s1426
        %v1428 = vmul.f32 %v1427, %v1316
        %v1429 = vmul.f32 %v1427, %v1317
        %1432 = vrot.lane.b32.xlu0 %v1428, 126
        %v1433 = vpop.permute.xlu0 %1432
        %1434 = vrot.lane.b32.xlu0 %v1429, 126
        %v1435 = vpop.permute.xlu0 %1434
        %v1438 = vadd.f32 %v1382, %v1433
        %v1439 = vadd.f32 %v1383, %v1435
        %s1440 = sld [smem:[#allocation4 + $0x86]]
        %v1441 = vstv %s1440
        %v1442 = vmul.f32 %v1441, %v1316
        %v1443 = vmul.f32 %v1441, %v1317
        %1446 = vrot.lane.b32.xlu0 %v1442, 126
        %v1447 = vpop.permute.xlu0 %1446
        %1448 = vrot.lane.b32.xlu0 %v1443, 126
        %v1449 = vpop.permute.xlu0 %1448
        %v1452 = vadd.f32 %v1396, %v1447
        %v1453 = vadd.f32 %v1397, %v1449
        %v1454 = vld [vmem:[%s209] sm:$0xff]
        %v1455 = vld [vmem:[%s209 + $0x8] sm:$0xff]
        %s1456 = sld [smem:[#allocation4 + $0x1b]]
        %v1457 = vstv %s1456
        %v1458 = vmul.f32 %v1457, %v1454
        %v1459 = vmul.f32 %v1457, %v1455
        %v1460 = vadd.f32 %v1410, %v1458
        %v1461 = vadd.f32 %v1411, %v1459
        %s1462 = sld [smem:[#allocation4 + $0x3f]]
        %v1463 = vstv %s1462
        %v1464 = vmul.f32 %v1463, %v1454
        %v1465 = vmul.f32 %v1463, %v1455
        %v1466 = vadd.f32 %v1424, %v1464
        %v1467 = vadd.f32 %v1425, %v1465
        %s1468 = sld [smem:[#allocation4 + $0x63]]
        %v1469 = vstv %s1468
        %v1470 = vmul.f32 %v1469, %v1454
        %v1471 = vmul.f32 %v1469, %v1455
        %v1472 = vadd.f32 %v1438, %v1470
        %v1473 = vadd.f32 %v1439, %v1471
        %s1474 = sld [smem:[#allocation4 + $0x87]]
        %v1475 = vstv %s1474
        %v1476 = vmul.f32 %v1475, %v1454
        %v1477 = vmul.f32 %v1475, %v1455
        %v1478 = vadd.f32 %v1452, %v1476
        %v1479 = vadd.f32 %v1453, %v1477
        %s1480 = sld [smem:[#allocation4 + $0x1c]]
        %v1481 = vstv %s1480
        %v1482 = vmul.f32 %v1481, %v1454
        %v1483 = vmul.f32 %v1481, %v1455
        %1486 = vrot.lane.b32.xlu0 %v1482, 127
        %v1487 = vpop.permute.xlu0 %1486
        %1488 = vrot.lane.b32.xlu0 %v1483, 127
        %v1489 = vpop.permute.xlu0 %1488
        %v1492 = vadd.f32 %v1460, %v1487
        %v1493 = vadd.f32 %v1461, %v1489
        %s1494 = sld [smem:[#allocation4 + $0x40]]
        %v1495 = vstv %s1494
        %v1496 = vmul.f32 %v1495, %v1454
        %v1497 = vmul.f32 %v1495, %v1455
        %1500 = vrot.lane.b32.xlu0 %v1496, 127
        %v1501 = vpop.permute.xlu0 %1500
        %1502 = vrot.lane.b32.xlu0 %v1497, 127
        %v1503 = vpop.permute.xlu0 %1502
        %v1506 = vadd.f32 %v1466, %v1501
        %v1507 = vadd.f32 %v1467, %v1503
        %s1508 = sld [smem:[#allocation4 + $0x64]]
        %v1509 = vstv %s1508
        %v1510 = vmul.f32 %v1509, %v1454
        %v1511 = vmul.f32 %v1509, %v1455
        %1514 = vrot.lane.b32.xlu0 %v1510, 127
        %v1515 = vpop.permute.xlu0 %1514
        %1516 = vrot.lane.b32.xlu0 %v1511, 127
        %v1517 = vpop.permute.xlu0 %1516
        %v1520 = vadd.f32 %v1472, %v1515
        %v1521 = vadd.f32 %v1473, %v1517
        %s1522 = sld [smem:[#allocation4 + $0x88]]
        %v1523 = vstv %s1522
        %v1524 = vmul.f32 %v1523, %v1454
        %v1525 = vmul.f32 %v1523, %v1455
        %1528 = vrot.lane.b32.xlu0 %v1524, 127
        %v1529 = vpop.permute.xlu0 %1528
        %1530 = vrot.lane.b32.xlu0 %v1525, 127
        %v1531 = vpop.permute.xlu0 %1530
        %v1534 = vadd.f32 %v1478, %v1529
        %v1535 = vadd.f32 %v1479, %v1531
        %s1536 = sld [smem:[#allocation4 + $0x1d]]
        %v1537 = vstv %s1536
        %v1538 = vmul.f32 %v1537, %v1454
        %v1539 = vmul.f32 %v1537, %v1455
        %1542 = vrot.lane.b32.xlu0 %v1538, 126
        %v1543 = vpop.permute.xlu0 %1542
        %1544 = vrot.lane.b32.xlu0 %v1539, 126
        %v1545 = vpop.permute.xlu0 %1544
        %v1548 = vadd.f32 %v1492, %v1543
        %v1549 = vadd.f32 %v1493, %v1545
        %s1550 = sld [smem:[#allocation4 + $0x41]]
        %v1551 = vstv %s1550
        %v1552 = vmul.f32 %v1551, %v1454
        %v1553 = vmul.f32 %v1551, %v1455
        %1556 = vrot.lane.b32.xlu0 %v1552, 126
        %v1557 = vpop.permute.xlu0 %1556
        %1558 = vrot.lane.b32.xlu0 %v1553, 126
        %v1559 = vpop.permute.xlu0 %1558
        %v1562 = vadd.f32 %v1506, %v1557
        %v1563 = vadd.f32 %v1507, %v1559
        %s1564 = sld [smem:[#allocation4 + $0x65]]
        %v1565 = vstv %s1564
        %v1566 = vmul.f32 %v1565, %v1454
        %v1567 = vmul.f32 %v1565, %v1455
        %1570 = vrot.lane.b32.xlu0 %v1566, 126
        %v1571 = vpop.permute.xlu0 %1570
        %1572 = vrot.lane.b32.xlu0 %v1567, 126
        %v1573 = vpop.permute.xlu0 %1572
        %v1576 = vadd.f32 %v1520, %v1571
        %v1577 = vadd.f32 %v1521, %v1573
        %s1578 = sld [smem:[#allocation4 + $0x89]]
        %v1579 = vstv %s1578
        %v1580 = vmul.f32 %v1579, %v1454
        %v1581 = vmul.f32 %v1579, %v1455
        %1584 = vrot.lane.b32.xlu0 %v1580, 126
        %v1585 = vpop.permute.xlu0 %1584
        %1586 = vrot.lane.b32.xlu0 %v1581, 126
        %v1587 = vpop.permute.xlu0 %1586
        %v1590 = vadd.f32 %v1534, %v1585
        %v1591 = vadd.f32 %v1535, %v1587
        %v1592 = vld [vmem:[%s209 + $0x1] sm:$0xff]
        %v1593 = vld [vmem:[%s209 + $0x9] sm:$0xff]
        %s1594 = sld [smem:[#allocation4 + $0x1e]]
        %v1595 = vstv %s1594
        %v1596 = vmul.f32 %v1595, %v1592
        %v1597 = vmul.f32 %v1595, %v1593
        %v1598 = vadd.f32 %v1548, %v1596
        %v1599 = vadd.f32 %v1549, %v1597
        %s1600 = sld [smem:[#allocation4 + $0x42]]
        %v1601 = vstv %s1600
        %v1602 = vmul.f32 %v1601, %v1592
        %v1603 = vmul.f32 %v1601, %v1593
        %v1604 = vadd.f32 %v1562, %v1602
        %v1605 = vadd.f32 %v1563, %v1603
        %s1606 = sld [smem:[#allocation4 + $0x66]]
        %v1607 = vstv %s1606
        %v1608 = vmul.f32 %v1607, %v1592
        %v1609 = vmul.f32 %v1607, %v1593
        %v1610 = vadd.f32 %v1576, %v1608
        %v1611 = vadd.f32 %v1577, %v1609
        %s1612 = sld [smem:[#allocation4 + $0x8a]]
        %v1613 = vstv %s1612
        %v1614 = vmul.f32 %v1613, %v1592
        %v1615 = vmul.f32 %v1613, %v1593
        %v1616 = vadd.f32 %v1590, %v1614
        %v1617 = vadd.f32 %v1591, %v1615
        %s1618 = sld [smem:[#allocation4 + $0x1f]]
        %v1619 = vstv %s1618
        %v1620 = vmul.f32 %v1619, %v1592
        %v1621 = vmul.f32 %v1619, %v1593
        %1624 = vrot.lane.b32.xlu0 %v1620, 127
        %v1625 = vpop.permute.xlu0 %1624
        %1626 = vrot.lane.b32.xlu0 %v1621, 127
        %v1627 = vpop.permute.xlu0 %1626
        %v1630 = vadd.f32 %v1598, %v1625
        %v1631 = vadd.f32 %v1599, %v1627
        %s1632 = sld [smem:[#allocation4 + $0x43]]
        %v1633 = vstv %s1632
        %v1634 = vmul.f32 %v1633, %v1592
        %v1635 = vmul.f32 %v1633, %v1593
        %1638 = vrot.lane.b32.xlu0 %v1634, 127
        %v1639 = vpop.permute.xlu0 %1638
        %1640 = vrot.lane.b32.xlu0 %v1635, 127
        %v1641 = vpop.permute.xlu0 %1640
        %v1644 = vadd.f32 %v1604, %v1639
        %v1645 = vadd.f32 %v1605, %v1641
        %s1646 = sld [smem:[#allocation4 + $0x67]]
        %v1647 = vstv %s1646
        %v1648 = vmul.f32 %v1647, %v1592
        %v1649 = vmul.f32 %v1647, %v1593
        %1652 = vrot.lane.b32.xlu0 %v1648, 127
        %v1653 = vpop.permute.xlu0 %1652
        %1654 = vrot.lane.b32.xlu0 %v1649, 127
        %v1655 = vpop.permute.xlu0 %1654
        %v1658 = vadd.f32 %v1610, %v1653
        %v1659 = vadd.f32 %v1611, %v1655
        %s1660 = sld [smem:[#allocation4 + $0x8b]]
        %v1661 = vstv %s1660
        %v1662 = vmul.f32 %v1661, %v1592
        %v1663 = vmul.f32 %v1661, %v1593
        %1666 = vrot.lane.b32.xlu0 %v1662, 127
        %v1667 = vpop.permute.xlu0 %1666
        %1668 = vrot.lane.b32.xlu0 %v1663, 127
        %v1669 = vpop.permute.xlu0 %1668
        %v1672 = vadd.f32 %v1616, %v1667
        %v1673 = vadd.f32 %v1617, %v1669
        %s1674 = sld [smem:[#allocation4 + $0x20]]
        %v1675 = vstv %s1674
        %v1676 = vmul.f32 %v1675, %v1592
        %v1677 = vmul.f32 %v1675, %v1593
        %1680 = vrot.lane.b32.xlu0 %v1676, 126
        %v1681 = vpop.permute.xlu0 %1680
        %1682 = vrot.lane.b32.xlu0 %v1677, 126
        %v1683 = vpop.permute.xlu0 %1682
        %v1686 = vadd.f32 %v1630, %v1681
        %v1687 = vadd.f32 %v1631, %v1683
        %s1688 = sld [smem:[#allocation4 + $0x44]]
        %v1689 = vstv %s1688
        %v1690 = vmul.f32 %v1689, %v1592
        %v1691 = vmul.f32 %v1689, %v1593
        %1694 = vrot.lane.b32.xlu0 %v1690, 126
        %v1695 = vpop.permute.xlu0 %1694
        %1696 = vrot.lane.b32.xlu0 %v1691, 126
        %v1697 = vpop.permute.xlu0 %1696
        %v1700 = vadd.f32 %v1644, %v1695
        %v1701 = vadd.f32 %v1645, %v1697
        %s1702 = sld [smem:[#allocation4 + $0x68]]
        %v1703 = vstv %s1702
        %v1704 = vmul.f32 %v1703, %v1592
        %v1705 = vmul.f32 %v1703, %v1593
        %1708 = vrot.lane.b32.xlu0 %v1704, 126
        %v1709 = vpop.permute.xlu0 %1708
        %1710 = vrot.lane.b32.xlu0 %v1705, 126
        %v1711 = vpop.permute.xlu0 %1710
        %v1714 = vadd.f32 %v1658, %v1709
        %v1715 = vadd.f32 %v1659, %v1711
        %s1716 = sld [smem:[#allocation4 + $0x8c]]
        %v1717 = vstv %s1716
        %v1718 = vmul.f32 %v1717, %v1592
        %v1719 = vmul.f32 %v1717, %v1593
        %1722 = vrot.lane.b32.xlu0 %v1718, 126
        %v1723 = vpop.permute.xlu0 %1722
        %1724 = vrot.lane.b32.xlu0 %v1719, 126
        %v1725 = vpop.permute.xlu0 %1724
        %v1728 = vadd.f32 %v1672, %v1723
        %v1729 = vadd.f32 %v1673, %v1725
        %v1730 = vld [vmem:[%s209 + $0x2] sm:$0xff]
        %v1731 = vld [vmem:[%s209 + $0xa] sm:$0xff]
        %s1732 = sld [smem:[#allocation4 + $0x21]]
        %v1733 = vstv %s1732
        %v1734 = vmul.f32 %v1733, %v1730
        %v1735 = vmul.f32 %v1733, %v1731
        %v1736 = vadd.f32 %v1686, %v1734
        %v1737 = vadd.f32 %v1687, %v1735
        %s1738 = sld [smem:[#allocation4 + $0x45]]
        %v1739 = vstv %s1738
        %v1740 = vmul.f32 %v1739, %v1730
        %v1741 = vmul.f32 %v1739, %v1731
        %v1742 = vadd.f32 %v1700, %v1740
        %v1743 = vadd.f32 %v1701, %v1741
        %s1744 = sld [smem:[#allocation4 + $0x69]]
        %v1745 = vstv %s1744
        %v1746 = vmul.f32 %v1745, %v1730
        %v1747 = vmul.f32 %v1745, %v1731
        %v1748 = vadd.f32 %v1714, %v1746
        %v1749 = vadd.f32 %v1715, %v1747
        %s1750 = sld [smem:[#allocation4 + $0x8d]]
        %v1751 = vstv %s1750
        %v1752 = vmul.f32 %v1751, %v1730
        %v1753 = vmul.f32 %v1751, %v1731
        %v1754 = vadd.f32 %v1728, %v1752
        %v1755 = vadd.f32 %v1729, %v1753
        %s1756 = sld [smem:[#allocation4 + $0x22]]
        %v1757 = vstv %s1756
        %v1758 = vmul.f32 %v1757, %v1730
        %v1759 = vmul.f32 %v1757, %v1731
        %1762 = vrot.lane.b32.xlu0 %v1758, 127
        %v1763 = vpop.permute.xlu0 %1762
        %1764 = vrot.lane.b32.xlu0 %v1759, 127
        %v1765 = vpop.permute.xlu0 %1764
        %v1768 = vadd.f32 %v1736, %v1763
        %v1769 = vadd.f32 %v1737, %v1765
        %s1770 = sld [smem:[#allocation4 + $0x46]]
        %v1771 = vstv %s1770
        %v1772 = vmul.f32 %v1771, %v1730
        %v1773 = vmul.f32 %v1771, %v1731
        %1776 = vrot.lane.b32.xlu0 %v1772, 127
        %v1777 = vpop.permute.xlu0 %1776
        %1778 = vrot.lane.b32.xlu0 %v1773, 127
        %v1779 = vpop.permute.xlu0 %1778
        %v1782 = vadd.f32 %v1742, %v1777
        %v1783 = vadd.f32 %v1743, %v1779
        %s1784 = sld [smem:[#allocation4 + $0x6a]]
        %v1785 = vstv %s1784
        %v1786 = vmul.f32 %v1785, %v1730
        %v1787 = vmul.f32 %v1785, %v1731
        %1790 = vrot.lane.b32.xlu0 %v1786, 127
        %v1791 = vpop.permute.xlu0 %1790
        %1792 = vrot.lane.b32.xlu0 %v1787, 127
        %v1793 = vpop.permute.xlu0 %1792
        %v1796 = vadd.f32 %v1748, %v1791
        %v1797 = vadd.f32 %v1749, %v1793
        %s1798 = sld [smem:[#allocation4 + $0x8e]]
        %v1799 = vstv %s1798
        %v1800 = vmul.f32 %v1799, %v1730
        %v1801 = vmul.f32 %v1799, %v1731
        %1804 = vrot.lane.b32.xlu0 %v1800, 127
        %v1805 = vpop.permute.xlu0 %1804
        %1806 = vrot.lane.b32.xlu0 %v1801, 127
        %v1807 = vpop.permute.xlu0 %1806
        %v1810 = vadd.f32 %v1754, %v1805
        %v1811 = vadd.f32 %v1755, %v1807
        %s1812 = sld [smem:[#allocation4 + $0x23]]
        %v1813 = vstv %s1812
        %v1814 = vmul.f32 %v1813, %v1730
        %v1815 = vmul.f32 %v1813, %v1731
        %1818 = vrot.lane.b32.xlu0 %v1814, 126
        %v1819 = vpop.permute.xlu0 %1818
        %1820 = vrot.lane.b32.xlu0 %v1815, 126
        %v1821 = vpop.permute.xlu0 %1820
        %v1824 = vadd.f32 %v1768, %v1819
        %v1825 = vadd.f32 %v1769, %v1821
        %s1826 = sld [smem:[#allocation4 + $0x47]]
        %v1827 = vstv %s1826
        %v1828 = vmul.f32 %v1827, %v1730
        %v1829 = vmul.f32 %v1827, %v1731
        %1832 = vrot.lane.b32.xlu0 %v1828, 126
        %v1833 = vpop.permute.xlu0 %1832
        %1834 = vrot.lane.b32.xlu0 %v1829, 126
        %v1835 = vpop.permute.xlu0 %1834
        %v1838 = vadd.f32 %v1782, %v1833
        %v1839 = vadd.f32 %v1783, %v1835
        %s1840 = sld [smem:[#allocation4 + $0x6b]]
        %v1841 = vstv %s1840
        %v1842 = vmul.f32 %v1841, %v1730
        %v1843 = vmul.f32 %v1841, %v1731
        %1846 = vrot.lane.b32.xlu0 %v1842, 126
        %v1847 = vpop.permute.xlu0 %1846
        %1848 = vrot.lane.b32.xlu0 %v1843, 126
        %v1849 = vpop.permute.xlu0 %1848
        %v1852 = vadd.f32 %v1796, %v1847
        %v1853 = vadd.f32 %v1797, %v1849
        %s1854 = sld [smem:[#allocation4 + $0x8f]]
        %v1855 = vstv %s1854
        %v1856 = vmul.f32 %v1855, %v1730
        %v1857 = vmul.f32 %v1855, %v1731
        %1860 = vrot.lane.b32.xlu0 %v1856, 126
        %v1861 = vpop.permute.xlu0 %1860
        %1862 = vrot.lane.b32.xlu0 %v1857, 126
        %v1863 = vpop.permute.xlu0 %1862
        %v1866 = vadd.f32 %v1810, %v1861
        %v1867 = vadd.f32 %v1811, %v1863
        %s1868 = sld [smem:[#allocation5]]
        %v1869 = vstv %s1868
        %v1870 = vadd.f32 %v1824, %v1869
        %v1871 = vadd.f32 %v1825, %v1869
        %v1872 = vmax.f32 %v1870, 0.0
        %v1873 = vmax.f32 %v1871, 0.0
        %1876 = vrot.lane.b32.xlu0 %v1872, 1
        %v1877 = vpop.permute.xlu0 %1876
        %1878 = vrot.lane.b32.xlu0 %v1873, 1
        %v1879 = vpop.permute.xlu0 %1878
        %1882 = vst.msk [vmem:[#allocation2 + $0x1] sm:$0xff] %vm167, %v1877
        %1883 = vst.msk [vmem:[#allocation2 + $0x9] sm:$0xff] %vm167, %v1879
        %s1884 = sld [smem:[#allocation5 + $0x1]]
        %v1885 = vstv %s1884
        %v1886 = vadd.f32 %v1838, %v1885
        %v1887 = vadd.f32 %v1839, %v1885
        %v1888 = vmax.f32 %v1886, 0.0
        %v1889 = vmax.f32 %v1887, 0.0
        %1892 = vrot.lane.b32.xlu0 %v1888, 1
        %v1893 = vpop.permute.xlu0 %1892
        %1894 = vrot.lane.b32.xlu0 %v1889, 1
        %v1895 = vpop.permute.xlu0 %1894
        %1898 = vst.msk [vmem:[%s181 + $0x1] sm:$0xff] %vm167, %v1893
        %1899 = vst.msk [vmem:[%s181 + $0x9] sm:$0xff] %vm167, %v1895
        %s1900 = sld [smem:[#allocation5 + $0x2]]
        %v1901 = vstv %s1900
        %v1902 = vadd.f32 %v1852, %v1901
        %v1903 = vadd.f32 %v1853, %v1901
        %v1904 = vmax.f32 %v1902, 0.0
        %v1905 = vmax.f32 %v1903, 0.0
        %1908 = vrot.lane.b32.xlu0 %v1904, 1
        %v1909 = vpop.permute.xlu0 %1908
        %1910 = vrot.lane.b32.xlu0 %v1905, 1
        %v1911 = vpop.permute.xlu0 %1910
        %1914 = vst.msk [vmem:[%s195 + $0x1] sm:$0xff] %vm167, %v1909
        %1915 = vst.msk [vmem:[%s195 + $0x9] sm:$0xff] %vm167, %v1911
        %s1916 = sld [smem:[#allocation5 + $0x3]]
        %v1917 = vstv %s1916
        %v1918 = vadd.f32 %v1866, %v1917
        %v1919 = vadd.f32 %v1867, %v1917
        %v1920 = vmax.f32 %v1918, 0.0
        %v1921 = vmax.f32 %v1919, 0.0
        %1924 = vrot.lane.b32.xlu0 %v1920, 1
        %v1925 = vpop.permute.xlu0 %1924
        %1926 = vrot.lane.b32.xlu0 %v1921, 1
        %v1927 = vpop.permute.xlu0 %1926
        %1930 = vst.msk [vmem:[%s209 + $0x1] sm:$0xff] %vm167, %v1925
        %1931 = vst.msk [vmem:[%s209 + $0x9] sm:$0xff] %vm167, %v1927
        %v1932 = vld [vmem:[#allocation2] sm:$0xff]
        %v1933 = vld [vmem:[#allocation2 + $0x8] sm:$0xff]
        %s1934 = sld [smem:[#allocation4 + $0x90]]
        %v1935 = vstv %s1934
        %v1936 = vmul.f32 %v1935, %v1932
        %v1937 = vmul.f32 %v1935, %v1933
        %v1938 = vadd.f32 %v1936, 0.0
        %v1939 = vadd.f32 %v1937, 0.0
        %s1940 = sld [smem:[#allocation4 + $0xb4]]
        %v1941 = vstv %s1940
        %v1942 = vmul.f32 %v1941, %v1932
        %v1943 = vmul.f32 %v1941, %v1933
        %v1944 = vadd.f32 %v1942, 0.0
        %v1945 = vadd.f32 %v1943, 0.0
        %s1946 = sld [smem:[#allocation4 + $0xd8]]
        %v1947 = vstv %s1946
        %v1948 = vmul.f32 %v1947, %v1932
        %v1949 = vmul.f32 %v1947, %v1933
        %v1950 = vadd.f32 %v1948, 0.0
        %v1951 = vadd.f32 %v1949, 0.0
        %s1952 = sld [smem:[#allocation4 + $0xfc]]
        %v1953 = vstv %s1952
        %v1954 = vmul.f32 %v1953, %v1932
        %v1955 = vmul.f32 %v1953, %v1933
        %v1956 = vadd.f32 %v1954, 0.0
        %v1957 = vadd.f32 %v1955, 0.0
        %s1958 = sld [smem:[#allocation4 + $0x91]]
        %v1959 = vstv %s1958
        %v1960 = vmul.f32 %v1959, %v1932
        %v1961 = vmul.f32 %v1959, %v1933
        %1964 = vrot.lane.b32.xlu0 %v1960, 127
        %v1965 = vpop.permute.xlu0 %1964
        %1966 = vrot.lane.b32.xlu0 %v1961, 127
        %v1967 = vpop.permute.xlu0 %1966
        %v1970 = vadd.f32 %v1938, %v1965
        %v1971 = vadd.f32 %v1939, %v1967
        %s1972 = sld [smem:[#allocation4 + $0xb5]]
        %v1973 = vstv %s1972
        %v1974 = vmul.f32 %v1973, %v1932
        %v1975 = vmul.f32 %v1973, %v1933
        %1978 = vrot.lane.b32.xlu0 %v1974, 127
        %v1979 = vpop.permute.xlu0 %1978
        %1980 = vrot.lane.b32.xlu0 %v1975, 127
        %v1981 = vpop.permute.xlu0 %1980
        %v1984 = vadd.f32 %v1944, %v1979
        %v1985 = vadd.f32 %v1945, %v1981
        %s1986 = sld [smem:[#allocation4 + $0xd9]]
        %v1987 = vstv %s1986
        %v1988 = vmul.f32 %v1987, %v1932
        %v1989 = vmul.f32 %v1987, %v1933
        %1992 = vrot.lane.b32.xlu0 %v1988, 127
        %v1993 = vpop.permute.xlu0 %1992
        %1994 = vrot.lane.b32.xlu0 %v1989, 127
        %v1995 = vpop.permute.xlu0 %1994
        %v1998 = vadd.f32 %v1950, %v1993
        %v1999 = vadd.f32 %v1951, %v1995
        %s2000 = sld [smem:[#allocation4 + $0xfd]]
        %v2001 = vstv %s2000
        %v2002 = vmul.f32 %v2001, %v1932
        %v2003 = vmul.f32 %v2001, %v1933
        %2006 = vrot.lane.b32.xlu0 %v2002, 127
        %v2007 = vpop.permute.xlu0 %2006
        %2008 = vrot.lane.b32.xlu0 %v2003, 127
        %v2009 = vpop.permute.xlu0 %2008
        %v2012 = vadd.f32 %v1956, %v2007
        %v2013 = vadd.f32 %v1957, %v2009
        %s2014 = sld [smem:[#allocation4 + $0x92]]
        %v2015 = vstv %s2014
        %v2016 = vmul.f32 %v2015, %v1932
        %v2017 = vmul.f32 %v2015, %v1933
        %2020 = vrot.lane.b32.xlu0 %v2016, 126
        %v2021 = vpop.permute.xlu0 %2020
        %2022 = vrot.lane.b32.xlu0 %v2017, 126
        %v2023 = vpop.permute.xlu0 %2022
        %v2026 = vadd.f32 %v1970, %v2021
        %v2027 = vadd.f32 %v1971, %v2023
        %s2028 = sld [smem:[#allocation4 + $0xb6]]
        %v2029 = vstv %s2028
        %v2030 = vmul.f32 %v2029, %v1932
        %v2031 = vmul.f32 %v2029, %v1933
        %2034 = vrot.lane.b32.xlu0 %v2030, 126
        %v2035 = vpop.permute.xlu0 %2034
        %2036 = vrot.lane.b32.xlu0 %v2031, 126
        %v2037 = vpop.permute.xlu0 %2036
        %v2040 = vadd.f32 %v1984, %v2035
        %v2041 = vadd.f32 %v1985, %v2037
        %s2042 = sld [smem:[#allocation4 + $0xda]]
        %v2043 = vstv %s2042
        %v2044 = vmul.f32 %v2043, %v1932
        %v2045 = vmul.f32 %v2043, %v1933
        %2048 = vrot.lane.b32.xlu0 %v2044, 126
        %v2049 = vpop.permute.xlu0 %2048
        %2050 = vrot.lane.b32.xlu0 %v2045, 126
        %v2051 = vpop.permute.xlu0 %2050
        %v2054 = vadd.f32 %v1998, %v2049
        %v2055 = vadd.f32 %v1999, %v2051
        %s2056 = sld [smem:[#allocation4 + $0xfe]]
        %v2057 = vstv %s2056
        %v2058 = vmul.f32 %v2057, %v1932
        %v2059 = vmul.f32 %v2057, %v1933
        %2062 = vrot.lane.b32.xlu0 %v2058, 126
        %v2063 = vpop.permute.xlu0 %2062
        %2064 = vrot.lane.b32.xlu0 %v2059, 126
        %v2065 = vpop.permute.xlu0 %2064
        %v2068 = vadd.f32 %v2012, %v2063
        %v2069 = vadd.f32 %v2013, %v2065
        %v2070 = vld [vmem:[#allocation2 + $0x1] sm:$0xff]
        %v2071 = vld [vmem:[#allocation2 + $0x9] sm:$0xff]
        %s2072 = sld [smem:[#allocation4 + $0x93]]
        %v2073 = vstv %s2072
        %v2074 = vmul.f32 %v2073, %v2070
        %v2075 = vmul.f32 %v2073, %v2071
        %v2076 = vadd.f32 %v2026, %v2074
        %v2077 = vadd.f32 %v2027, %v2075
        %s2078 = sld [smem:[#allocation4 + $0xb7]]
        %v2079 = vstv %s2078
        %v2080 = vmul.f32 %v2079, %v2070
        %v2081 = vmul.f32 %v2079, %v2071
        %v2082 = vadd.f32 %v2040, %v2080
        %v2083 = vadd.f32 %v2041, %v2081
        %s2084 = sld [smem:[#allocation4 + $0xdb]]
        %v2085 = vstv %s2084
        %v2086 = vmul.f32 %v2085, %v2070
        %v2087 = vmul.f32 %v2085, %v2071
        %v2088 = vadd.f32 %v2054, %v2086
        %v2089 = vadd.f32 %v2055, %v2087
        %s2090 = sld [smem:[#allocation4 + $0xff]]
        %v2091 = vstv %s2090
        %v2092 = vmul.f32 %v2091, %v2070
        %v2093 = vmul.f32 %v2091, %v2071
        %v2094 = vadd.f32 %v2068, %v2092
        %v2095 = vadd.f32 %v2069, %v2093
        %s2096 = sld [smem:[#allocation4 + $0x94]]
        %v2097 = vstv %s2096
        %v2098 = vmul.f32 %v2097, %v2070
        %v2099 = vmul.f32 %v2097, %v2071
        %2102 = vrot.lane.b32.xlu0 %v2098, 127
        %v2103 = vpop.permute.xlu0 %2102
        %2104 = vrot.lane.b32.xlu0 %v2099, 127
        %v2105 = vpop.permute.xlu0 %2104
        %v2108 = vadd.f32 %v2076, %v2103
        %v2109 = vadd.f32 %v2077, %v2105
        %s2110 = sld [smem:[#allocation4 + $0xb8]]
        %v2111 = vstv %s2110
        %v2112 = vmul.f32 %v2111, %v2070
        %v2113 = vmul.f32 %v2111, %v2071
        %2116 = vrot.lane.b32.xlu0 %v2112, 127
        %v2117 = vpop.permute.xlu0 %2116
        %2118 = vrot.lane.b32.xlu0 %v2113, 127
        %v2119 = vpop.permute.xlu0 %2118
        %v2122 = vadd.f32 %v2082, %v2117
        %v2123 = vadd.f32 %v2083, %v2119
        %s2124 = sld [smem:[#allocation4 + $0xdc]]
        %v2125 = vstv %s2124
        %v2126 = vmul.f32 %v2125, %v2070
        %v2127 = vmul.f32 %v2125, %v2071
        %2130 = vrot.lane.b32.xlu0 %v2126, 127
        %v2131 = vpop.permute.xlu0 %2130
        %2132 = vrot.lane.b32.xlu0 %v2127, 127
        %v2133 = vpop.permute.xlu0 %2132
        %v2136 = vadd.f32 %v2088, %v2131
        %v2137 = vadd.f32 %v2089, %v2133
        %s2138 = sld [smem:[#allocation4 + $0x100]]
        %v2139 = vstv %s2138
        %v2140 = vmul.f32 %v2139, %v2070
        %v2141 = vmul.f32 %v2139, %v2071
        %2144 = vrot.lane.b32.xlu0 %v2140, 127
        %v2145 = vpop.permute.xlu0 %2144
        %2146 = vrot.lane.b32.xlu0 %v2141, 127
        %v2147 = vpop.permute.xlu0 %2146
        %v2150 = vadd.f32 %v2094, %v2145
        %v2151 = vadd.f32 %v2095, %v2147
        %s2152 = sld [smem:[#allocation4 + $0x95]]
        %v2153 = vstv %s2152
        %v2154 = vmul.f32 %v2153, %v2070
        %v2155 = vmul.f32 %v2153, %v2071
        %2158 = vrot.lane.b32.xlu0 %v2154, 126
        %v2159 = vpop.permute.xlu0 %2158
        %2160 = vrot.lane.b32.xlu0 %v2155, 126
        %v2161 = vpop.permute.xlu0 %2160
        %v2164 = vadd.f32 %v2108, %v2159
        %v2165 = vadd.f32 %v2109, %v2161
        %s2166 = sld [smem:[#allocation4 + $0xb9]]
        %v2167 = vstv %s2166
        %v2168 = vmul.f32 %v2167, %v2070
        %v2169 = vmul.f32 %v2167, %v2071
        %2172 = vrot.lane.b32.xlu0 %v2168, 126
        %v2173 = vpop.permute.xlu0 %2172
        %2174 = vrot.lane.b32.xlu0 %v2169, 126
        %v2175 = vpop.permute.xlu0 %2174
        %v2178 = vadd.f32 %v2122, %v2173
        %v2179 = vadd.f32 %v2123, %v2175
        %s2180 = sld [smem:[#allocation4 + $0xdd]]
        %v2181 = vstv %s2180
        %v2182 = vmul.f32 %v2181, %v2070
        %v2183 = vmul.f32 %v2181, %v2071
        %2186 = vrot.lane.b32.xlu0 %v2182, 126
        %v2187 = vpop.permute.xlu0 %2186
        %2188 = vrot.lane.b32.xlu0 %v2183, 126
        %v2189 = vpop.permute.xlu0 %2188
        %v2192 = vadd.f32 %v2136, %v2187
        %v2193 = vadd.f32 %v2137, %v2189
        %s2194 = sld [smem:[#allocation4 + $0x101]]
        %v2195 = vstv %s2194
        %v2196 = vmul.f32 %v2195, %v2070
        %v2197 = vmul.f32 %v2195, %v2071
        %2200 = vrot.lane.b32.xlu0 %v2196, 126
        %v2201 = vpop.permute.xlu0 %2200
        %2202 = vrot.lane.b32.xlu0 %v2197, 126
        %v2203 = vpop.permute.xlu0 %2202
        %v2206 = vadd.f32 %v2150, %v2201
        %v2207 = vadd.f32 %v2151, %v2203
        %v2208 = vld [vmem:[#allocation2 + $0x2] sm:$0xff]
        %v2209 = vld [vmem:[#allocation2 + $0xa] sm:$0xff]
        %s2210 = sld [smem:[#allocation4 + $0x96]]
        %v2211 = vstv %s2210
        %v2212 = vmul.f32 %v2211, %v2208
        %v2213 = vmul.f32 %v2211, %v2209
        %v2214 = vadd.f32 %v2164, %v2212
        %v2215 = vadd.f32 %v2165, %v2213
        %s2216 = sld [smem:[#allocation4 + $0xba]]
        %v2217 = vstv %s2216
        %v2218 = vmul.f32 %v2217, %v2208
        %v2219 = vmul.f32 %v2217, %v2209
        %v2220 = vadd.f32 %v2178, %v2218
        %v2221 = vadd.f32 %v2179, %v2219
        %s2222 = sld [smem:[#allocation4 + $0xde]]
        %v2223 = vstv %s2222
        %v2224 = vmul.f32 %v2223, %v2208
        %v2225 = vmul.f32 %v2223, %v2209
        %v2226 = vadd.f32 %v2192, %v2224
        %v2227 = vadd.f32 %v2193, %v2225
        %s2228 = sld [smem:[#allocation4 + $0x102]]
        %v2229 = vstv %s2228
        %v2230 = vmul.f32 %v2229, %v2208
        %v2231 = vmul.f32 %v2229, %v2209
        %v2232 = vadd.f32 %v2206, %v2230
        %v2233 = vadd.f32 %v2207, %v2231
        %s2234 = sld [smem:[#allocation4 + $0x97]]
        %v2235 = vstv %s2234
        %v2236 = vmul.f32 %v2235, %v2208
        %v2237 = vmul.f32 %v2235, %v2209
        %2240 = vrot.lane.b32.xlu0 %v2236, 127
        %v2241 = vpop.permute.xlu0 %2240
        %2242 = vrot.lane.b32.xlu0 %v2237, 127
        %v2243 = vpop.permute.xlu0 %2242
        %v2246 = vadd.f32 %v2214, %v2241
        %v2247 = vadd.f32 %v2215, %v2243
        %s2248 = sld [smem:[#allocation4 + $0xbb]]
        %v2249 = vstv %s2248
        %v2250 = vmul.f32 %v2249, %v2208
        %v2251 = vmul.f32 %v2249, %v2209
        %2254 = vrot.lane.b32.xlu0 %v2250, 127
        %v2255 = vpop.permute.xlu0 %2254
        %2256 = vrot.lane.b32.xlu0 %v2251, 127
        %v2257 = vpop.permute.xlu0 %2256
        %v2260 = vadd.f32 %v2220, %v2255
        %v2261 = vadd.f32 %v2221, %v2257
        %s2262 = sld [smem:[#allocation4 + $0xdf]]
        %v2263 = vstv %s2262
        %v2264 = vmul.f32 %v2263, %v2208
        %v2265 = vmul.f32 %v2263, %v2209
        %2268 = vrot.lane.b32.xlu0 %v2264, 127
        %v2269 = vpop.permute.xlu0 %2268
        %2270 = vrot.lane.b32.xlu0 %v2265, 127
        %v2271 = vpop.permute.xlu0 %2270
        %v2274 = vadd.f32 %v2226, %v2269
        %v2275 = vadd.f32 %v2227, %v2271
        %s2276 = sld [smem:[#allocation4 + $0x103]]
        %v2277 = vstv %s2276
        %v2278 = vmul.f32 %v2277, %v2208
        %v2279 = vmul.f32 %v2277, %v2209
        %2282 = vrot.lane.b32.xlu0 %v2278, 127
        %v2283 = vpop.permute.xlu0 %2282
        %2284 = vrot.lane.b32.xlu0 %v2279, 127
        %v2285 = vpop.permute.xlu0 %2284
        %v2288 = vadd.f32 %v2232, %v2283
        %v2289 = vadd.f32 %v2233, %v2285
        %s2290 = sld [smem:[#allocation4 + $0x98]]
        %v2291 = vstv %s2290
        %v2292 = vmul.f32 %v2291, %v2208
        %v2293 = vmul.f32 %v2291, %v2209
        %2296 = vrot.lane.b32.xlu0 %v2292, 126
        %v2297 = vpop.permute.xlu0 %2296
        %2298 = vrot.lane.b32.xlu0 %v2293, 126
        %v2299 = vpop.permute.xlu0 %2298
        %v2302 = vadd.f32 %v2246, %v2297
        %v2303 = vadd.f32 %v2247, %v2299
        %s2304 = sld [smem:[#allocation4 + $0xbc]]
        %v2305 = vstv %s2304
        %v2306 = vmul.f32 %v2305, %v2208
        %v2307 = vmul.f32 %v2305, %v2209
        %2310 = vrot.lane.b32.xlu0 %v2306, 126
        %v2311 = vpop.permute.xlu0 %2310
        %2312 = vrot.lane.b32.xlu0 %v2307, 126
        %v2313 = vpop.permute.xlu0 %2312
        %v2316 = vadd.f32 %v2260, %v2311
        %v2317 = vadd.f32 %v2261, %v2313
        %s2318 = sld [smem:[#allocation4 + $0xe0]]
        %v2319 = vstv %s2318
        %v2320 = vmul.f32 %v2319, %v2208
        %v2321 = vmul.f32 %v2319, %v2209
        %2324 = vrot.lane.b32.xlu0 %v2320, 126
        %v2325 = vpop.permute.xlu0 %2324
        %2326 = vrot.lane.b32.xlu0 %v2321, 126
        %v2327 = vpop.permute.xlu0 %2326
        %v2330 = vadd.f32 %v2274, %v2325
        %v2331 = vadd.f32 %v2275, %v2327
        %s2332 = sld [smem:[#allocation4 + $0x104]]
        %v2333 = vstv %s2332
        %v2334 = vmul.f32 %v2333, %v2208
        %v2335 = vmul.f32 %v2333, %v2209
        %2338 = vrot.lane.b32.xlu0 %v2334, 126
        %v2339 = vpop.permute.xlu0 %2338
        %2340 = vrot.lane.b32.xlu0 %v2335, 126
        %v2341 = vpop.permute.xlu0 %2340
        %v2344 = vadd.f32 %v2288, %v2339
        %v2345 = vadd.f32 %v2289, %v2341
        %v2346 = vld [vmem:[%s181] sm:$0xff]
        %v2347 = vld [vmem:[%s181 + $0x8] sm:$0xff]
        %s2348 = sld [smem:[#allocation4 + $0x99]]
        %v2349 = vstv %s2348
        %v2350 = vmul.f32 %v2349, %v2346
        %v2351 = vmul.f32 %v2349, %v2347
        %v2352 = vadd.f32 %v2302, %v2350
        %v2353 = vadd.f32 %v2303, %v2351
        %s2354 = sld [smem:[#allocation4 + $0xbd]]
        %v2355 = vstv %s2354
        %v2356 = vmul.f32 %v2355, %v2346
        %v2357 = vmul.f32 %v2355, %v2347
        %v2358 = vadd.f32 %v2316, %v2356
        %v2359 = vadd.f32 %v2317, %v2357
        %s2360 = sld [smem:[#allocation4 + $0xe1]]
        %v2361 = vstv %s2360
        %v2362 = vmul.f32 %v2361, %v2346
        %v2363 = vmul.f32 %v2361, %v2347
        %v2364 = vadd.f32 %v2330, %v2362
        %v2365 = vadd.f32 %v2331, %v2363
        %s2366 = sld [smem:[#allocation4 + $0x105]]
        %v2367 = vstv %s2366
        %v2368 = vmul.f32 %v2367, %v2346
        %v2369 = vmul.f32 %v2367, %v2347
        %v2370 = vadd.f32 %v2344, %v2368
        %v2371 = vadd.f32 %v2345, %v2369
        %s2372 = sld [smem:[#allocation4 + $0x9a]]
        %v2373 = vstv %s2372
        %v2374 = vmul.f32 %v2373, %v2346
        %v2375 = vmul.f32 %v2373, %v2347
        %2378 = vrot.lane.b32.xlu0 %v2374, 127
        %v2379 = vpop.permute.xlu0 %2378
        %2380 = vrot.lane.b32.xlu0 %v2375, 127
        %v2381 = vpop.permute.xlu0 %2380
        %v2384 = vadd.f32 %v2352, %v2379
        %v2385 = vadd.f32 %v2353, %v2381
        %s2386 = sld [smem:[#allocation4 + $0xbe]]
        %v2387 = vstv %s2386
        %v2388 = vmul.f32 %v2387, %v2346
        %v2389 = vmul.f32 %v2387, %v2347
        %2392 = vrot.lane.b32.xlu0 %v2388, 127
        %v2393 = vpop.permute.xlu0 %2392
        %2394 = vrot.lane.b32.xlu0 %v2389, 127
        %v2395 = vpop.permute.xlu0 %2394
        %v2398 = vadd.f32 %v2358, %v2393
        %v2399 = vadd.f32 %v2359, %v2395
        %s2400 = sld [smem:[#allocation4 + $0xe2]]
        %v2401 = vstv %s2400
        %v2402 = vmul.f32 %v2401, %v2346
        %v2403 = vmul.f32 %v2401, %v2347
        %2406 = vrot.lane.b32.xlu0 %v2402, 127
        %v2407 = vpop.permute.xlu0 %2406
        %2408 = vrot.lane.b32.xlu0 %v2403, 127
        %v2409 = vpop.permute.xlu0 %2408
        %v2412 = vadd.f32 %v2364, %v2407
        %v2413 = vadd.f32 %v2365, %v2409
        %s2414 = sld [smem:[#allocation4 + $0x106]]
        %v2415 = vstv %s2414
        %v2416 = vmul.f32 %v2415, %v2346
        %v2417 = vmul.f32 %v2415, %v2347
        %2420 = vrot.lane.b32.xlu0 %v2416, 127
        %v2421 = vpop.permute.xlu0 %2420
        %2422 = vrot.lane.b32.xlu0 %v2417, 127
        %v2423 = vpop.permute.xlu0 %2422
        %v2426 = vadd.f32 %v2370, %v2421
        %v2427 = vadd.f32 %v2371, %v2423
        %s2428 = sld [smem:[#allocation4 + $0x9b]]
        %v2429 = vstv %s2428
        %v2430 = vmul.f32 %v2429, %v2346
        %v2431 = vmul.f32 %v2429, %v2347
        %2434 = vrot.lane.b32.xlu0 %v2430, 126
        %v2435 = vpop.permute.xlu0 %2434
        %2436 = vrot.lane.b32.xlu0 %v2431, 126
        %v2437 = vpop.permute.xlu0 %2436
        %v2440 = vadd.f32 %v2384, %v2435
        %v2441 = vadd.f32 %v2385, %v2437
        %s2442 = sld [smem:[#allocation4 + $0xbf]]
        %v2443 = vstv %s2442
        %v2444 = vmul.f32 %v2443, %v2346
        %v2445 = vmul.f32 %v2443, %v2347
        %2448 = vrot.lane.b32.xlu0 %v2444, 126
        %v2449 = vpop.permute.xlu0 %2448
        %2450 = vrot.lane.b32.xlu0 %v2445, 126
        %v2451 = vpop.permute.xlu0 %2450
        %v2454 = vadd.f32 %v2398, %v2449
        %v2455 = vadd.f32 %v2399, %v2451
        %s2456 = sld [smem:[#allocation4 + $0xe3]]
        %v2457 = vstv %s2456
        %v2458 = vmul.f32 %v2457, %v2346
        %v2459 = vmul.f32 %v2457, %v2347
        %2462 = vrot.lane.b32.xlu0 %v2458, 126
        %v2463 = vpop.permute.xlu0 %2462
        %2464 = vrot.lane.b32.xlu0 %v2459, 126
        %v2465 = vpop.permute.xlu0 %2464
        %v2468 = vadd.f32 %v2412, %v2463
        %v2469 = vadd.f32 %v2413, %v2465
        %s2470 = sld [smem:[#allocation4 + $0x107]]
        %v2471 = vstv %s2470
        %v2472 = vmul.f32 %v2471, %v2346
        %v2473 = vmul.f32 %v2471, %v2347
        %2476 = vrot.lane.b32.xlu0 %v2472, 126
        %v2477 = vpop.permute.xlu0 %2476
        %2478 = vrot.lane.b32.xlu0 %v2473, 126
        %v2479 = vpop.permute.xlu0 %2478
        %v2482 = vadd.f32 %v2426, %v2477
        %v2483 = vadd.f32 %v2427, %v2479
        %v2484 = vld [vmem:[%s181 + $0x1] sm:$0xff]
        %v2485 = vld [vmem:[%s181 + $0x9] sm:$0xff]
        %s2486 = sld [smem:[#allocation4 + $0x9c]]
        %v2487 = vstv %s2486
        %v2488 = vmul.f32 %v2487, %v2484
        %v2489 = vmul.f32 %v2487, %v2485
        %v2490 = vadd.f32 %v2440, %v2488
        %v2491 = vadd.f32 %v2441, %v2489
        %s2492 = sld [smem:[#allocation4 + $0xc0]]
        %v2493 = vstv %s2492
        %v2494 = vmul.f32 %v2493, %v2484
        %v2495 = vmul.f32 %v2493, %v2485
        %v2496 = vadd.f32 %v2454, %v2494
        %v2497 = vadd.f32 %v2455, %v2495
        %s2498 = sld [smem:[#allocation4 + $0xe4]]
        %v2499 = vstv %s2498
        %v2500 = vmul.f32 %v2499, %v2484
        %v2501 = vmul.f32 %v2499, %v2485
        %v2502 = vadd.f32 %v2468, %v2500
        %v2503 = vadd.f32 %v2469, %v2501
        %s2504 = sld [smem:[#allocation4 + $0x108]]
        %v2505 = vstv %s2504
        %v2506 = vmul.f32 %v2505, %v2484
        %v2507 = vmul.f32 %v2505, %v2485
        %v2508 = vadd.f32 %v2482, %v2506
        %v2509 = vadd.f32 %v2483, %v2507
        %s2510 = sld [smem:[#allocation4 + $0x9d]]
        %v2511 = vstv %s2510
        %v2512 = vmul.f32 %v2511, %v2484
        %v2513 = vmul.f32 %v2511, %v2485
        %2516 = vrot.lane.b32.xlu0 %v2512, 127
        %v2517 = vpop.permute.xlu0 %2516
        %2518 = vrot.lane.b32.xlu0 %v2513, 127
        %v2519 = vpop.permute.xlu0 %2518
        %v2522 = vadd.f32 %v2490, %v2517
        %v2523 = vadd.f32 %v2491, %v2519
        %s2524 = sld [smem:[#allocation4 + $0xc1]]
        %v2525 = vstv %s2524
        %v2526 = vmul.f32 %v2525, %v2484
        %v2527 = vmul.f32 %v2525, %v2485
        %2530 = vrot.lane.b32.xlu0 %v2526, 127
        %v2531 = vpop.permute.xlu0 %2530
        %2532 = vrot.lane.b32.xlu0 %v2527, 127
        %v2533 = vpop.permute.xlu0 %2532
        %v2536 = vadd.f32 %v2496, %v2531
        %v2537 = vadd.f32 %v2497, %v2533
        %s2538 = sld [smem:[#allocation4 + $0xe5]]
        %v2539 = vstv %s2538
        %v2540 = vmul.f32 %v2539, %v2484
        %v2541 = vmul.f32 %v2539, %v2485
        %2544 = vrot.lane.b32.xlu0 %v2540, 127
        %v2545 = vpop.permute.xlu0 %2544
        %2546 = vrot.lane.b32.xlu0 %v2541, 127
        %v2547 = vpop.permute.xlu0 %2546
        %v2550 = vadd.f32 %v2502, %v2545
        %v2551 = vadd.f32 %v2503, %v2547
        %s2552 = sld [smem:[#allocation4 + $0x109]]
        %v2553 = vstv %s2552
        %v2554 = vmul.f32 %v2553, %v2484
        %v2555 = vmul.f32 %v2553, %v2485
        %2558 = vrot.lane.b32.xlu0 %v2554, 127
        %v2559 = vpop.permute.xlu0 %2558
        %2560 = vrot.lane.b32.xlu0 %v2555, 127
        %v2561 = vpop.permute.xlu0 %2560
        %v2564 = vadd.f32 %v2508, %v2559
        %v2565 = vadd.f32 %v2509, %v2561
        %s2566 = sld [smem:[#allocation4 + $0x9e]]
        %v2567 = vstv %s2566
        %v2568 = vmul.f32 %v2567, %v2484
        %v2569 = vmul.f32 %v2567, %v2485
        %2572 = vrot.lane.b32.xlu0 %v2568, 126
        %v2573 = vpop.permute.xlu0 %2572
        %2574 = vrot.lane.b32.xlu0 %v2569, 126
        %v2575 = vpop.permute.xlu0 %2574
        %v2578 = vadd.f32 %v2522, %v2573
        %v2579 = vadd.f32 %v2523, %v2575
        %s2580 = sld [smem:[#allocation4 + $0xc2]]
        %v2581 = vstv %s2580
        %v2582 = vmul.f32 %v2581, %v2484
        %v2583 = vmul.f32 %v2581, %v2485
        %2586 = vrot.lane.b32.xlu0 %v2582, 126
        %v2587 = vpop.permute.xlu0 %2586
        %2588 = vrot.lane.b32.xlu0 %v2583, 126
        %v2589 = vpop.permute.xlu0 %2588
        %v2592 = vadd.f32 %v2536, %v2587
        %v2593 = vadd.f32 %v2537, %v2589
        %s2594 = sld [smem:[#allocation4 + $0xe6]]
        %v2595 = vstv %s2594
        %v2596 = vmul.f32 %v2595, %v2484
        %v2597 = vmul.f32 %v2595, %v2485
        %2600 = vrot.lane.b32.xlu0 %v2596, 126
        %v2601 = vpop.permute.xlu0 %2600
        %2602 = vrot.lane.b32.xlu0 %v2597, 126
        %v2603 = vpop.permute.xlu0 %2602
        %v2606 = vadd.f32 %v2550, %v2601
        %v2607 = vadd.f32 %v2551, %v2603
        %s2608 = sld [smem:[#allocation4 + $0x10a]]
        %v2609 = vstv %s2608
        %v2610 = vmul.f32 %v2609, %v2484
        %v2611 = vmul.f32 %v2609, %v2485
        %2614 = vrot.lane.b32.xlu0 %v2610, 126
        %v2615 = vpop.permute.xlu0 %2614
        %2616 = vrot.lane.b32.xlu0 %v2611, 126
        %v2617 = vpop.permute.xlu0 %2616
        %v2620 = vadd.f32 %v2564, %v2615
        %v2621 = vadd.f32 %v2565, %v2617
        %v2622 = vld [vmem:[%s181 + $0x2] sm:$0xff]
        %v2623 = vld [vmem:[%s181 + $0xa] sm:$0xff]
        %s2624 = sld [smem:[#allocation4 + $0x9f]]
        %v2625 = vstv %s2624
        %v2626 = vmul.f32 %v2625, %v2622
        %v2627 = vmul.f32 %v2625, %v2623
        %v2628 = vadd.f32 %v2578, %v2626
        %v2629 = vadd.f32 %v2579, %v2627
        %s2630 = sld [smem:[#allocation4 + $0xc3]]
        %v2631 = vstv %s2630
        %v2632 = vmul.f32 %v2631, %v2622
        %v2633 = vmul.f32 %v2631, %v2623
        %v2634 = vadd.f32 %v2592, %v2632
        %v2635 = vadd.f32 %v2593, %v2633
        %s2636 = sld [smem:[#allocation4 + $0xe7]]
        %v2637 = vstv %s2636
        %v2638 = vmul.f32 %v2637, %v2622
        %v2639 = vmul.f32 %v2637, %v2623
        %v2640 = vadd.f32 %v2606, %v2638
        %v2641 = vadd.f32 %v2607, %v2639
        %s2642 = sld [smem:[#allocation4 + $0x10b]]
        %v2643 = vstv %s2642
        %v2644 = vmul.f32 %v2643, %v2622
        %v2645 = vmul.f32 %v2643, %v2623
        %v2646 = vadd.f32 %v2620, %v2644
        %v2647 = vadd.f32 %v2621, %v2645
        %s2648 = sld [smem:[#allocation4 + $0xa0]]
        %v2649 = vstv %s2648
        %v2650 = vmul.f32 %v2649, %v2622
        %v2651 = vmul.f32 %v2649, %v2623
        %2654 = vrot.lane.b32.xlu0 %v2650, 127
        %v2655 = vpop.permute.xlu0 %2654
        %2656 = vrot.lane.b32.xlu0 %v2651, 127
        %v2657 = vpop.permute.xlu0 %2656
        %v2660 = vadd.f32 %v2628, %v2655
        %v2661 = vadd.f32 %v2629, %v2657
        %s2662 = sld [smem:[#allocation4 + $0xc4]]
        %v2663 = vstv %s2662
        %v2664 = vmul.f32 %v2663, %v2622
        %v2665 = vmul.f32 %v2663, %v2623
        %2668 = vrot.lane.b32.xlu0 %v2664, 127
        %v2669 = vpop.permute.xlu0 %2668
        %2670 = vrot.lane.b32.xlu0 %v2665, 127
        %v2671 = vpop.permute.xlu0 %2670
        %v2674 = vadd.f32 %v2634, %v2669
        %v2675 = vadd.f32 %v2635, %v2671
        %s2676 = sld [smem:[#allocation4 + $0xe8]]
        %v2677 = vstv %s2676
        %v2678 = vmul.f32 %v2677, %v2622
        %v2679 = vmul.f32 %v2677, %v2623
        %2682 = vrot.lane.b32.xlu0 %v2678, 127
        %v2683 = vpop.permute.xlu0 %2682
        %2684 = vrot.lane.b32.xlu0 %v2679, 127
        %v2685 = vpop.permute.xlu0 %2684
        %v2688 = vadd.f32 %v2640, %v2683
        %v2689 = vadd.f32 %v2641, %v2685
        %s2690 = sld [smem:[#allocation4 + $0x10c]]
        %v2691 = vstv %s2690
        %v2692 = vmul.f32 %v2691, %v2622
        %v2693 = vmul.f32 %v2691, %v2623
        %2696 = vrot.lane.b32.xlu0 %v2692, 127
        %v2697 = vpop.permute.xlu0 %2696
        %2698 = vrot.lane.b32.xlu0 %v2693, 127
        %v2699 = vpop.permute.xlu0 %2698
        %v2702 = vadd.f32 %v2646, %v2697
        %v2703 = vadd.f32 %v2647, %v2699
        %s2704 = sld [smem:[#allocation4 + $0xa1]]
        %v2705 = vstv %s2704
        %v2706 = vmul.f32 %v2705, %v2622
        %v2707 = vmul.f32 %v2705, %v2623
        %2710 = vrot.lane.b32.xlu0 %v2706, 126
        %v2711 = vpop.permute.xlu0 %2710
        %2712 = vrot.lane.b32.xlu0 %v2707, 126
        %v2713 = vpop.permute.xlu0 %2712
        %v2716 = vadd.f32 %v2660, %v2711
        %v2717 = vadd.f32 %v2661, %v2713
        %s2718 = sld [smem:[#allocation4 + $0xc5]]
        %v2719 = vstv %s2718
        %v2720 = vmul.f32 %v2719, %v2622
        %v2721 = vmul.f32 %v2719, %v2623
        %2724 = vrot.lane.b32.xlu0 %v2720, 126
        %v2725 = vpop.permute.xlu0 %2724
        %2726 = vrot.lane.b32.xlu0 %v2721, 126
        %v2727 = vpop.permute.xlu0 %2726
        %v2730 = vadd.f32 %v2674, %v2725
        %v2731 = vadd.f32 %v2675, %v2727
        %s2732 = sld [smem:[#allocation4 + $0xe9]]
        %v2733 = vstv %s2732
        %v2734 = vmul.f32 %v2733, %v2622
        %v2735 = vmul.f32 %v2733, %v2623
        %2738 = vrot.lane.b32.xlu0 %v2734, 126
        %v2739 = vpop.permute.xlu0 %2738
        %2740 = vrot.lane.b32.xlu0 %v2735, 126
        %v2741 = vpop.permute.xlu0 %2740
        %v2744 = vadd.f32 %v2688, %v2739
        %v2745 = vadd.f32 %v2689, %v2741
        %s2746 = sld [smem:[#allocation4 + $0x10d]]
        %v2747 = vstv %s2746
        %v2748 = vmul.f32 %v2747, %v2622
        %v2749 = vmul.f32 %v2747, %v2623
        %2752 = vrot.lane.b32.xlu0 %v2748, 126
        %v2753 = vpop.permute.xlu0 %2752
        %2754 = vrot.lane.b32.xlu0 %v2749, 126
        %v2755 = vpop.permute.xlu0 %2754
        %v2758 = vadd.f32 %v2702, %v2753
        %v2759 = vadd.f32 %v2703, %v2755
        %v2760 = vld [vmem:[%s195] sm:$0xff]
        %v2761 = vld [vmem:[%s195 + $0x8] sm:$0xff]
        %s2762 = sld [smem:[#allocation4 + $0xa2]]
        %v2763 = vstv %s2762
        %v2764 = vmul.f32 %v2763, %v2760
        %v2765 = vmul.f32 %v2763, %v2761
        %v2766 = vadd.f32 %v2716, %v2764
        %v2767 = vadd.f32 %v2717, %v2765
        %s2768 = sld [smem:[#allocation4 + $0xc6]]
        %v2769 = vstv %s2768
        %v2770 = vmul.f32 %v2769, %v2760
        %v2771 = vmul.f32 %v2769, %v2761
        %v2772 = vadd.f32 %v2730, %v2770
        %v2773 = vadd.f32 %v2731, %v2771
        %s2774 = sld [smem:[#allocation4 + $0xea]]
        %v2775 = vstv %s2774
        %v2776 = vmul.f32 %v2775, %v2760
        %v2777 = vmul.f32 %v2775, %v2761
        %v2778 = vadd.f32 %v2744, %v2776
        %v2779 = vadd.f32 %v2745, %v2777
        %s2780 = sld [smem:[#allocation4 + $0x10e]]
        %v2781 = vstv %s2780
        %v2782 = vmul.f32 %v2781, %v2760
        %v2783 = vmul.f32 %v2781, %v2761
        %v2784 = vadd.f32 %v2758, %v2782
        %v2785 = vadd.f32 %v2759, %v2783
        %s2786 = sld [smem:[#allocation4 + $0xa3]]
        %v2787 = vstv %s2786
        %v2788 = vmul.f32 %v2787, %v2760
        %v2789 = vmul.f32 %v2787, %v2761
        %2792 = vrot.lane.b32.xlu0 %v2788, 127
        %v2793 = vpop.permute.xlu0 %2792
        %2794 = vrot.lane.b32.xlu0 %v2789, 127
        %v2795 = vpop.permute.xlu0 %2794
        %v2798 = vadd.f32 %v2766, %v2793
        %v2799 = vadd.f32 %v2767, %v2795
        %s2800 = sld [smem:[#allocation4 + $0xc7]]
        %v2801 = vstv %s2800
        %v2802 = vmul.f32 %v2801, %v2760
        %v2803 = vmul.f32 %v2801, %v2761
        %2806 = vrot.lane.b32.xlu0 %v2802, 127
        %v2807 = vpop.permute.xlu0 %2806
        %2808 = vrot.lane.b32.xlu0 %v2803, 127
        %v2809 = vpop.permute.xlu0 %2808
        %v2812 = vadd.f32 %v2772, %v2807
        %v2813 = vadd.f32 %v2773, %v2809
        %s2814 = sld [smem:[#allocation4 + $0xeb]]
        %v2815 = vstv %s2814
        %v2816 = vmul.f32 %v2815, %v2760
        %v2817 = vmul.f32 %v2815, %v2761
        %2820 = vrot.lane.b32.xlu0 %v2816, 127
        %v2821 = vpop.permute.xlu0 %2820
        %2822 = vrot.lane.b32.xlu0 %v2817, 127
        %v2823 = vpop.permute.xlu0 %2822
        %v2826 = vadd.f32 %v2778, %v2821
        %v2827 = vadd.f32 %v2779, %v2823
        %s2828 = sld [smem:[#allocation4 + $0x10f]]
        %v2829 = vstv %s2828
        %v2830 = vmul.f32 %v2829, %v2760
        %v2831 = vmul.f32 %v2829, %v2761
        %2834 = vrot.lane.b32.xlu0 %v2830, 127
        %v2835 = vpop.permute.xlu0 %2834
        %2836 = vrot.lane.b32.xlu0 %v2831, 127
        %v2837 = vpop.permute.xlu0 %2836
        %v2840 = vadd.f32 %v2784, %v2835
        %v2841 = vadd.f32 %v2785, %v2837
        %s2842 = sld [smem:[#allocation4 + $0xa4]]
        %v2843 = vstv %s2842
        %v2844 = vmul.f32 %v2843, %v2760
        %v2845 = vmul.f32 %v2843, %v2761
        %2848 = vrot.lane.b32.xlu0 %v2844, 126
        %v2849 = vpop.permute.xlu0 %2848
        %2850 = vrot.lane.b32.xlu0 %v2845, 126
        %v2851 = vpop.permute.xlu0 %2850
        %v2854 = vadd.f32 %v2798, %v2849
        %v2855 = vadd.f32 %v2799, %v2851
        %s2856 = sld [smem:[#allocation4 + $0xc8]]
        %v2857 = vstv %s2856
        %v2858 = vmul.f32 %v2857, %v2760
        %v2859 = vmul.f32 %v2857, %v2761
        %2862 = vrot.lane.b32.xlu0 %v2858, 126
        %v2863 = vpop.permute.xlu0 %2862
        %2864 = vrot.lane.b32.xlu0 %v2859, 126
        %v2865 = vpop.permute.xlu0 %2864
        %v2868 = vadd.f32 %v2812, %v2863
        %v2869 = vadd.f32 %v2813, %v2865
        %s2870 = sld [smem:[#allocation4 + $0xec]]
        %v2871 = vstv %s2870
        %v2872 = vmul.f32 %v2871, %v2760
        %v2873 = vmul.f32 %v2871, %v2761
        %2876 = vrot.lane.b32.xlu0 %v2872, 126
        %v2877 = vpop.permute.xlu0 %2876
        %2878 = vrot.lane.b32.xlu0 %v2873, 126
        %v2879 = vpop.permute.xlu0 %2878
        %v2882 = vadd.f32 %v2826, %v2877
        %v2883 = vadd.f32 %v2827, %v2879
        %s2884 = sld [smem:[#allocation4 + $0x110]]
        %v2885 = vstv %s2884
        %v2886 = vmul.f32 %v2885, %v2760
        %v2887 = vmul.f32 %v2885, %v2761
        %2890 = vrot.lane.b32.xlu0 %v2886, 126
        %v2891 = vpop.permute.xlu0 %2890
        %2892 = vrot.lane.b32.xlu0 %v2887, 126
        %v2893 = vpop.permute.xlu0 %2892
        %v2896 = vadd.f32 %v2840, %v2891
        %v2897 = vadd.f32 %v2841, %v2893
        %v2898 = vld [vmem:[%s195 + $0x1] sm:$0xff]
        %v2899 = vld [vmem:[%s195 + $0x9] sm:$0xff]
        %s2900 = sld [smem:[#allocation4 + $0xa5]]
        %v2901 = vstv %s2900
        %v2902 = vmul.f32 %v2901, %v2898
        %v2903 = vmul.f32 %v2901, %v2899
        %v2904 = vadd.f32 %v2854, %v2902
        %v2905 = vadd.f32 %v2855, %v2903
        %s2906 = sld [smem:[#allocation4 + $0xc9]]
        %v2907 = vstv %s2906
        %v2908 = vmul.f32 %v2907, %v2898
        %v2909 = vmul.f32 %v2907, %v2899
        %v2910 = vadd.f32 %v2868, %v2908
        %v2911 = vadd.f32 %v2869, %v2909
        %s2912 = sld [smem:[#allocation4 + $0xed]]
        %v2913 = vstv %s2912
        %v2914 = vmul.f32 %v2913, %v2898
        %v2915 = vmul.f32 %v2913, %v2899
        %v2916 = vadd.f32 %v2882, %v2914
        %v2917 = vadd.f32 %v2883, %v2915
        %s2918 = sld [smem:[#allocation4 + $0x111]]
        %v2919 = vstv %s2918
        %v2920 = vmul.f32 %v2919, %v2898
        %v2921 = vmul.f32 %v2919, %v2899
        %v2922 = vadd.f32 %v2896, %v2920
        %v2923 = vadd.f32 %v2897, %v2921
        %s2924 = sld [smem:[#allocation4 + $0xa6]]
        %v2925 = vstv %s2924
        %v2926 = vmul.f32 %v2925, %v2898
        %v2927 = vmul.f32 %v2925, %v2899
        %2930 = vrot.lane.b32.xlu0 %v2926, 127
        %v2931 = vpop.permute.xlu0 %2930
        %2932 = vrot.lane.b32.xlu0 %v2927, 127
        %v2933 = vpop.permute.xlu0 %2932
        %v2936 = vadd.f32 %v2904, %v2931
        %v2937 = vadd.f32 %v2905, %v2933
        %s2938 = sld [smem:[#allocation4 + $0xca]]
        %v2939 = vstv %s2938
        %v2940 = vmul.f32 %v2939, %v2898
        %v2941 = vmul.f32 %v2939, %v2899
        %2944 = vrot.lane.b32.xlu0 %v2940, 127
        %v2945 = vpop.permute.xlu0 %2944
        %2946 = vrot.lane.b32.xlu0 %v2941, 127
        %v2947 = vpop.permute.xlu0 %2946
        %v2950 = vadd.f32 %v2910, %v2945
        %v2951 = vadd.f32 %v2911, %v2947
        %s2952 = sld [smem:[#allocation4 + $0xee]]
        %v2953 = vstv %s2952
        %v2954 = vmul.f32 %v2953, %v2898
        %v2955 = vmul.f32 %v2953, %v2899
        %2958 = vrot.lane.b32.xlu0 %v2954, 127
        %v2959 = vpop.permute.xlu0 %2958
        %2960 = vrot.lane.b32.xlu0 %v2955, 127
        %v2961 = vpop.permute.xlu0 %2960
        %v2964 = vadd.f32 %v2916, %v2959
        %v2965 = vadd.f32 %v2917, %v2961
        %s2966 = sld [smem:[#allocation4 + $0x112]]
        %v2967 = vstv %s2966
        %v2968 = vmul.f32 %v2967, %v2898
        %v2969 = vmul.f32 %v2967, %v2899
        %2972 = vrot.lane.b32.xlu0 %v2968, 127
        %v2973 = vpop.permute.xlu0 %2972
        %2974 = vrot.lane.b32.xlu0 %v2969, 127
        %v2975 = vpop.permute.xlu0 %2974
        %v2978 = vadd.f32 %v2922, %v2973
        %v2979 = vadd.f32 %v2923, %v2975
        %s2980 = sld [smem:[#allocation4 + $0xa7]]
        %v2981 = vstv %s2980
        %v2982 = vmul.f32 %v2981, %v2898
        %v2983 = vmul.f32 %v2981, %v2899
        %2986 = vrot.lane.b32.xlu0 %v2982, 126
        %v2987 = vpop.permute.xlu0 %2986
        %2988 = vrot.lane.b32.xlu0 %v2983, 126
        %v2989 = vpop.permute.xlu0 %2988
        %v2992 = vadd.f32 %v2936, %v2987
        %v2993 = vadd.f32 %v2937, %v2989
        %s2994 = sld [smem:[#allocation4 + $0xcb]]
        %v2995 = vstv %s2994
        %v2996 = vmul.f32 %v2995, %v2898
        %v2997 = vmul.f32 %v2995, %v2899
        %3000 = vrot.lane.b32.xlu0 %v2996, 126
        %v3001 = vpop.permute.xlu0 %3000
        %3002 = vrot.lane.b32.xlu0 %v2997, 126
        %v3003 = vpop.permute.xlu0 %3002
        %v3006 = vadd.f32 %v2950, %v3001
        %v3007 = vadd.f32 %v2951, %v3003
        %s3008 = sld [smem:[#allocation4 + $0xef]]
        %v3009 = vstv %s3008
        %v3010 = vmul.f32 %v3009, %v2898
        %v3011 = vmul.f32 %v3009, %v2899
        %3014 = vrot.lane.b32.xlu0 %v3010, 126
        %v3015 = vpop.permute.xlu0 %3014
        %3016 = vrot.lane.b32.xlu0 %v3011, 126
        %v3017 = vpop.permute.xlu0 %3016
        %v3020 = vadd.f32 %v2964, %v3015
        %v3021 = vadd.f32 %v2965, %v3017
        %s3022 = sld [smem:[#allocation4 + $0x113]]
        %v3023 = vstv %s3022
        %v3024 = vmul.f32 %v3023, %v2898
        %v3025 = vmul.f32 %v3023, %v2899
        %3028 = vrot.lane.b32.xlu0 %v3024, 126
        %v3029 = vpop.permute.xlu0 %3028
        %3030 = vrot.lane.b32.xlu0 %v3025, 126
        %v3031 = vpop.permute.xlu0 %3030
        %v3034 = vadd.f32 %v2978, %v3029
        %v3035 = vadd.f32 %v2979, %v3031
        %v3036 = vld [vmem:[%s195 + $0x2] sm:$0xff]
        %v3037 = vld [vmem:[%s195 + $0xa] sm:$0xff]
        %s3038 = sld [smem:[#allocation4 + $0xa8]]
        %v3039 = vstv %s3038
        %v3040 = vmul.f32 %v3039, %v3036
        %v3041 = vmul.f32 %v3039, %v3037
        %v3042 = vadd.f32 %v2992, %v3040
        %v3043 = vadd.f32 %v2993, %v3041
        %s3044 = sld [smem:[#allocation4 + $0xcc]]
        %v3045 = vstv %s3044
        %v3046 = vmul.f32 %v3045, %v3036
        %v3047 = vmul.f32 %v3045, %v3037
        %v3048 = vadd.f32 %v3006, %v3046
        %v3049 = vadd.f32 %v3007, %v3047
        %s3050 = sld [smem:[#allocation4 + $0xf0]]
        %v3051 = vstv %s3050
        %v3052 = vmul.f32 %v3051, %v3036
        %v3053 = vmul.f32 %v3051, %v3037
        %v3054 = vadd.f32 %v3020, %v3052
        %v3055 = vadd.f32 %v3021, %v3053
        %s3056 = sld [smem:[#allocation4 + $0x114]]
        %v3057 = vstv %s3056
        %v3058 = vmul.f32 %v3057, %v3036
        %v3059 = vmul.f32 %v3057, %v3037
        %v3060 = vadd.f32 %v3034, %v3058
        %v3061 = vadd.f32 %v3035, %v3059
        %s3062 = sld [smem:[#allocation4 + $0xa9]]
        %v3063 = vstv %s3062
        %v3064 = vmul.f32 %v3063, %v3036
        %v3065 = vmul.f32 %v3063, %v3037
        %3068 = vrot.lane.b32.xlu0 %v3064, 127
        %v3069 = vpop.permute.xlu0 %3068
        %3070 = vrot.lane.b32.xlu0 %v3065, 127
        %v3071 = vpop.permute.xlu0 %3070
        %v3074 = vadd.f32 %v3042, %v3069
        %v3075 = vadd.f32 %v3043, %v3071
        %s3076 = sld [smem:[#allocation4 + $0xcd]]
        %v3077 = vstv %s3076
        %v3078 = vmul.f32 %v3077, %v3036
        %v3079 = vmul.f32 %v3077, %v3037
        %3082 = vrot.lane.b32.xlu0 %v3078, 127
        %v3083 = vpop.permute.xlu0 %3082
        %3084 = vrot.lane.b32.xlu0 %v3079, 127
        %v3085 = vpop.permute.xlu0 %3084
        %v3088 = vadd.f32 %v3048, %v3083
        %v3089 = vadd.f32 %v3049, %v3085
        %s3090 = sld [smem:[#allocation4 + $0xf1]]
        %v3091 = vstv %s3090
        %v3092 = vmul.f32 %v3091, %v3036
        %v3093 = vmul.f32 %v3091, %v3037
        %3096 = vrot.lane.b32.xlu0 %v3092, 127
        %v3097 = vpop.permute.xlu0 %3096
        %3098 = vrot.lane.b32.xlu0 %v3093, 127
        %v3099 = vpop.permute.xlu0 %3098
        %v3102 = vadd.f32 %v3054, %v3097
        %v3103 = vadd.f32 %v3055, %v3099
        %s3104 = sld [smem:[#allocation4 + $0x115]]
        %v3105 = vstv %s3104
        %v3106 = vmul.f32 %v3105, %v3036
        %v3107 = vmul.f32 %v3105, %v3037
        %3110 = vrot.lane.b32.xlu0 %v3106, 127
        %v3111 = vpop.permute.xlu0 %3110
        %3112 = vrot.lane.b32.xlu0 %v3107, 127
        %v3113 = vpop.permute.xlu0 %3112
        %v3116 = vadd.f32 %v3060, %v3111
        %v3117 = vadd.f32 %v3061, %v3113
        %s3118 = sld [smem:[#allocation4 + $0xaa]]
        %v3119 = vstv %s3118
        %v3120 = vmul.f32 %v3119, %v3036
        %v3121 = vmul.f32 %v3119, %v3037
        %3124 = vrot.lane.b32.xlu0 %v3120, 126
        %v3125 = vpop.permute.xlu0 %3124
        %3126 = vrot.lane.b32.xlu0 %v3121, 126
        %v3127 = vpop.permute.xlu0 %3126
        %v3130 = vadd.f32 %v3074, %v3125
        %v3131 = vadd.f32 %v3075, %v3127
        %s3132 = sld [smem:[#allocation4 + $0xce]]
        %v3133 = vstv %s3132
        %v3134 = vmul.f32 %v3133, %v3036
        %v3135 = vmul.f32 %v3133, %v3037
        %3138 = vrot.lane.b32.xlu0 %v3134, 126
        %v3139 = vpop.permute.xlu0 %3138
        %3140 = vrot.lane.b32.xlu0 %v3135, 126
        %v3141 = vpop.permute.xlu0 %3140
        %v3144 = vadd.f32 %v3088, %v3139
        %v3145 = vadd.f32 %v3089, %v3141
        %s3146 = sld [smem:[#allocation4 + $0xf2]]
        %v3147 = vstv %s3146
        %v3148 = vmul.f32 %v3147, %v3036
        %v3149 = vmul.f32 %v3147, %v3037
        %3152 = vrot.lane.b32.xlu0 %v3148, 126
        %v3153 = vpop.permute.xlu0 %3152
        %3154 = vrot.lane.b32.xlu0 %v3149, 126
        %v3155 = vpop.permute.xlu0 %3154
        %v3158 = vadd.f32 %v3102, %v3153
        %v3159 = vadd.f32 %v3103, %v3155
        %s3160 = sld [smem:[#allocation4 + $0x116]]
        %v3161 = vstv %s3160
        %v3162 = vmul.f32 %v3161, %v3036
        %v3163 = vmul.f32 %v3161, %v3037
        %3166 = vrot.lane.b32.xlu0 %v3162, 126
        %v3167 = vpop.permute.xlu0 %3166
        %3168 = vrot.lane.b32.xlu0 %v3163, 126
        %v3169 = vpop.permute.xlu0 %3168
        %v3172 = vadd.f32 %v3116, %v3167
        %v3173 = vadd.f32 %v3117, %v3169
        %v3174 = vld [vmem:[%s209] sm:$0xff]
        %v3175 = vld [vmem:[%s209 + $0x8] sm:$0xff]
        %s3176 = sld [smem:[#allocation4 + $0xab]]
        %v3177 = vstv %s3176
        %v3178 = vmul.f32 %v3177, %v3174
        %v3179 = vmul.f32 %v3177, %v3175
        %v3180 = vadd.f32 %v3130, %v3178
        %v3181 = vadd.f32 %v3131, %v3179
        %s3182 = sld [smem:[#allocation4 + $0xcf]]
        %v3183 = vstv %s3182
        %v3184 = vmul.f32 %v3183, %v3174
        %v3185 = vmul.f32 %v3183, %v3175
        %v3186 = vadd.f32 %v3144, %v3184
        %v3187 = vadd.f32 %v3145, %v3185
        %s3188 = sld [smem:[#allocation4 + $0xf3]]
        %v3189 = vstv %s3188
        %v3190 = vmul.f32 %v3189, %v3174
        %v3191 = vmul.f32 %v3189, %v3175
        %v3192 = vadd.f32 %v3158, %v3190
        %v3193 = vadd.f32 %v3159, %v3191
        %s3194 = sld [smem:[#allocation4 + $0x117]]
        %v3195 = vstv %s3194
        %v3196 = vmul.f32 %v3195, %v3174
        %v3197 = vmul.f32 %v3195, %v3175
        %v3198 = vadd.f32 %v3172, %v3196
        %v3199 = vadd.f32 %v3173, %v3197
        %s3200 = sld [smem:[#allocation4 + $0xac]]
        %v3201 = vstv %s3200
        %v3202 = vmul.f32 %v3201, %v3174
        %v3203 = vmul.f32 %v3201, %v3175
        %3206 = vrot.lane.b32.xlu0 %v3202, 127
        %v3207 = vpop.permute.xlu0 %3206
        %3208 = vrot.lane.b32.xlu0 %v3203, 127
        %v3209 = vpop.permute.xlu0 %3208
        %v3212 = vadd.f32 %v3180, %v3207
        %v3213 = vadd.f32 %v3181, %v3209
        %s3214 = sld [smem:[#allocation4 + $0xd0]]
        %v3215 = vstv %s3214
        %v3216 = vmul.f32 %v3215, %v3174
        %v3217 = vmul.f32 %v3215, %v3175
        %3220 = vrot.lane.b32.xlu0 %v3216, 127
        %v3221 = vpop.permute.xlu0 %3220
        %3222 = vrot.lane.b32.xlu0 %v3217, 127
        %v3223 = vpop.permute.xlu0 %3222
        %v3226 = vadd.f32 %v3186, %v3221
        %v3227 = vadd.f32 %v3187, %v3223
        %s3228 = sld [smem:[#allocation4 + $0xf4]]
        %v3229 = vstv %s3228
        %v3230 = vmul.f32 %v3229, %v3174
        %v3231 = vmul.f32 %v3229, %v3175
        %3234 = vrot.lane.b32.xlu0 %v3230, 127
        %v3235 = vpop.permute.xlu0 %3234
        %3236 = vrot.lane.b32.xlu0 %v3231, 127
        %v3237 = vpop.permute.xlu0 %3236
        %v3240 = vadd.f32 %v3192, %v3235
        %v3241 = vadd.f32 %v3193, %v3237
        %s3242 = sld [smem:[#allocation4 + $0x118]]
        %v3243 = vstv %s3242
        %v3244 = vmul.f32 %v3243, %v3174
        %v3245 = vmul.f32 %v3243, %v3175
        %3248 = vrot.lane.b32.xlu0 %v3244, 127
        %v3249 = vpop.permute.xlu0 %3248
        %3250 = vrot.lane.b32.xlu0 %v3245, 127
        %v3251 = vpop.permute.xlu0 %3250
        %v3254 = vadd.f32 %v3198, %v3249
        %v3255 = vadd.f32 %v3199, %v3251
        %s3256 = sld [smem:[#allocation4 + $0xad]]
        %v3257 = vstv %s3256
        %v3258 = vmul.f32 %v3257, %v3174
        %v3259 = vmul.f32 %v3257, %v3175
        %3262 = vrot.lane.b32.xlu0 %v3258, 126
        %v3263 = vpop.permute.xlu0 %3262
        %3264 = vrot.lane.b32.xlu0 %v3259, 126
        %v3265 = vpop.permute.xlu0 %3264
        %v3268 = vadd.f32 %v3212, %v3263
        %v3269 = vadd.f32 %v3213, %v3265
        %s3270 = sld [smem:[#allocation4 + $0xd1]]
        %v3271 = vstv %s3270
        %v3272 = vmul.f32 %v3271, %v3174
        %v3273 = vmul.f32 %v3271, %v3175
        %3276 = vrot.lane.b32.xlu0 %v3272, 126
        %v3277 = vpop.permute.xlu0 %3276
        %3278 = vrot.lane.b32.xlu0 %v3273, 126
        %v3279 = vpop.permute.xlu0 %3278
        %v3282 = vadd.f32 %v3226, %v3277
        %v3283 = vadd.f32 %v3227, %v3279
        %s3284 = sld [smem:[#allocation4 + $0xf5]]
        %v3285 = vstv %s3284
        %v3286 = vmul.f32 %v3285, %v3174
        %v3287 = vmul.f32 %v3285, %v3175
        %3290 = vrot.lane.b32.xlu0 %v3286, 126
        %v3291 = vpop.permute.xlu0 %3290
        %3292 = vrot.lane.b32.xlu0 %v3287, 126
        %v3293 = vpop.permute.xlu0 %3292
        %v3296 = vadd.f32 %v3240, %v3291
        %v3297 = vadd.f32 %v3241, %v3293
        %s3298 = sld [smem:[#allocation4 + $0x119]]
        %v3299 = vstv %s3298
        %v3300 = vmul.f32 %v3299, %v3174
        %v3301 = vmul.f32 %v3299, %v3175
        %3304 = vrot.lane.b32.xlu0 %v3300, 126
        %v3305 = vpop.permute.xlu0 %3304
        %3306 = vrot.lane.b32.xlu0 %v3301, 126
        %v3307 = vpop.permute.xlu0 %3306
        %v3310 = vadd.f32 %v3254, %v3305
        %v3311 = vadd.f32 %v3255, %v3307
        %v3312 = vld [vmem:[%s209 + $0x1] sm:$0xff]
        %v3313 = vld [vmem:[%s209 + $0x9] sm:$0xff]
        %s3314 = sld [smem:[#allocation4 + $0xae]]
        %v3315 = vstv %s3314
        %v3316 = vmul.f32 %v3315, %v3312
        %v3317 = vmul.f32 %v3315, %v3313
        %v3318 = vadd.f32 %v3268, %v3316
        %v3319 = vadd.f32 %v3269, %v3317
        %s3320 = sld [smem:[#allocation4 + $0xd2]]
        %v3321 = vstv %s3320
        %v3322 = vmul.f32 %v3321, %v3312
        %v3323 = vmul.f32 %v3321, %v3313
        %v3324 = vadd.f32 %v3282, %v3322
        %v3325 = vadd.f32 %v3283, %v3323
        %s3326 = sld [smem:[#allocation4 + $0xf6]]
        %v3327 = vstv %s3326
        %v3328 = vmul.f32 %v3327, %v3312
        %v3329 = vmul.f32 %v3327, %v3313
        %v3330 = vadd.f32 %v3296, %v3328
        %v3331 = vadd.f32 %v3297, %v3329
        %s3332 = sld [smem:[#allocation4 + $0x11a]]
        %v3333 = vstv %s3332
        %v3334 = vmul.f32 %v3333, %v3312
        %v3335 = vmul.f32 %v3333, %v3313
        %v3336 = vadd.f32 %v3310, %v3334
        %v3337 = vadd.f32 %v3311, %v3335
        %s3338 = sld [smem:[#allocation4 + $0xaf]]
        %v3339 = vstv %s3338
        %v3340 = vmul.f32 %v3339, %v3312
        %v3341 = vmul.f32 %v3339, %v3313
        %3344 = vrot.lane.b32.xlu0 %v3340, 127
        %v3345 = vpop.permute.xlu0 %3344
        %3346 = vrot.lane.b32.xlu0 %v3341, 127
        %v3347 = vpop.permute.xlu0 %3346
        %v3350 = vadd.f32 %v3318, %v3345
        %v3351 = vadd.f32 %v3319, %v3347
        %s3352 = sld [smem:[#allocation4 + $0xd3]]
        %v3353 = vstv %s3352
        %v3354 = vmul.f32 %v3353, %v3312
        %v3355 = vmul.f32 %v3353, %v3313
        %3358 = vrot.lane.b32.xlu0 %v3354, 127
        %v3359 = vpop.permute.xlu0 %3358
        %3360 = vrot.lane.b32.xlu0 %v3355, 127
        %v3361 = vpop.permute.xlu0 %3360
        %v3364 = vadd.f32 %v3324, %v3359
        %v3365 = vadd.f32 %v3325, %v3361
        %s3366 = sld [smem:[#allocation4 + $0xf7]]
        %v3367 = vstv %s3366
        %v3368 = vmul.f32 %v3367, %v3312
        %v3369 = vmul.f32 %v3367, %v3313
        %3372 = vrot.lane.b32.xlu0 %v3368, 127
        %v3373 = vpop.permute.xlu0 %3372
        %3374 = vrot.lane.b32.xlu0 %v3369, 127
        %v3375 = vpop.permute.xlu0 %3374
        %v3378 = vadd.f32 %v3330, %v3373
        %v3379 = vadd.f32 %v3331, %v3375
        %s3380 = sld [smem:[#allocation4 + $0x11b]]
        %v3381 = vstv %s3380
        %v3382 = vmul.f32 %v3381, %v3312
        %v3383 = vmul.f32 %v3381, %v3313
        %3386 = vrot.lane.b32.xlu0 %v3382, 127
        %v3387 = vpop.permute.xlu0 %3386
        %3388 = vrot.lane.b32.xlu0 %v3383, 127
        %v3389 = vpop.permute.xlu0 %3388
        %v3392 = vadd.f32 %v3336, %v3387
        %v3393 = vadd.f32 %v3337, %v3389
        %s3394 = sld [smem:[#allocation4 + $0xb0]]
        %v3395 = vstv %s3394
        %v3396 = vmul.f32 %v3395, %v3312
        %v3397 = vmul.f32 %v3395, %v3313
        %3400 = vrot.lane.b32.xlu0 %v3396, 126
        %v3401 = vpop.permute.xlu0 %3400
        %3402 = vrot.lane.b32.xlu0 %v3397, 126
        %v3403 = vpop.permute.xlu0 %3402
        %v3406 = vadd.f32 %v3350, %v3401
        %v3407 = vadd.f32 %v3351, %v3403
        %s3408 = sld [smem:[#allocation4 + $0xd4]]
        %v3409 = vstv %s3408
        %v3410 = vmul.f32 %v3409, %v3312
        %v3411 = vmul.f32 %v3409, %v3313
        %3414 = vrot.lane.b32.xlu0 %v3410, 126
        %v3415 = vpop.permute.xlu0 %3414
        %3416 = vrot.lane.b32.xlu0 %v3411, 126
        %v3417 = vpop.permute.xlu0 %3416
        %v3420 = vadd.f32 %v3364, %v3415
        %v3421 = vadd.f32 %v3365, %v3417
        %s3422 = sld [smem:[#allocation4 + $0xf8]]
        %v3423 = vstv %s3422
        %v3424 = vmul.f32 %v3423, %v3312
        %v3425 = vmul.f32 %v3423, %v3313
        %3428 = vrot.lane.b32.xlu0 %v3424, 126
        %v3429 = vpop.permute.xlu0 %3428
        %3430 = vrot.lane.b32.xlu0 %v3425, 126
        %v3431 = vpop.permute.xlu0 %3430
        %v3434 = vadd.f32 %v3378, %v3429
        %v3435 = vadd.f32 %v3379, %v3431
        %s3436 = sld [smem:[#allocation4 + $0x11c]]
        %v3437 = vstv %s3436
        %v3438 = vmul.f32 %v3437, %v3312
        %v3439 = vmul.f32 %v3437, %v3313
        %3442 = vrot.lane.b32.xlu0 %v3438, 126
        %v3443 = vpop.permute.xlu0 %3442
        %3444 = vrot.lane.b32.xlu0 %v3439, 126
        %v3445 = vpop.permute.xlu0 %3444
        %v3448 = vadd.f32 %v3392, %v3443
        %v3449 = vadd.f32 %v3393, %v3445
        %v3450 = vld [vmem:[%s209 + $0x2] sm:$0xff]
        %v3451 = vld [vmem:[%s209 + $0xa] sm:$0xff]
        %s3452 = sld [smem:[#allocation4 + $0xb1]]
        %v3453 = vstv %s3452
        %v3454 = vmul.f32 %v3453, %v3450
        %v3455 = vmul.f32 %v3453, %v3451
        %v3456 = vadd.f32 %v3406, %v3454
        %v3457 = vadd.f32 %v3407, %v3455
        %s3458 = sld [smem:[#allocation4 + $0xd5]]
        %v3459 = vstv %s3458
        %v3460 = vmul.f32 %v3459, %v3450
        %v3461 = vmul.f32 %v3459, %v3451
        %v3462 = vadd.f32 %v3420, %v3460
        %v3463 = vadd.f32 %v3421, %v3461
        %s3464 = sld [smem:[#allocation4 + $0xf9]]
        %v3465 = vstv %s3464
        %v3466 = vmul.f32 %v3465, %v3450
        %v3467 = vmul.f32 %v3465, %v3451
        %v3468 = vadd.f32 %v3434, %v3466
        %v3469 = vadd.f32 %v3435, %v3467
        %s3470 = sld [smem:[#allocation4 + $0x11d]]
        %v3471 = vstv %s3470
        %v3472 = vmul.f32 %v3471, %v3450
        %v3473 = vmul.f32 %v3471, %v3451
        %v3474 = vadd.f32 %v3448, %v3472
        %v3475 = vadd.f32 %v3449, %v3473
        %s3476 = sld [smem:[#allocation4 + $0xb2]]
        %v3477 = vstv %s3476
        %v3478 = vmul.f32 %v3477, %v3450
        %v3479 = vmul.f32 %v3477, %v3451
        %3482 = vrot.lane.b32.xlu0 %v3478, 127
        %v3483 = vpop.permute.xlu0 %3482
        %3484 = vrot.lane.b32.xlu0 %v3479, 127
        %v3485 = vpop.permute.xlu0 %3484
        %v3488 = vadd.f32 %v3456, %v3483
        %v3489 = vadd.f32 %v3457, %v3485
        %s3490 = sld [smem:[#allocation4 + $0xd6]]
        %v3491 = vstv %s3490
        %v3492 = vmul.f32 %v3491, %v3450
        %v3493 = vmul.f32 %v3491, %v3451
        %3496 = vrot.lane.b32.xlu0 %v3492, 127
        %v3497 = vpop.permute.xlu0 %3496
        %3498 = vrot.lane.b32.xlu0 %v3493, 127
        %v3499 = vpop.permute.xlu0 %3498
        %v3502 = vadd.f32 %v3462, %v3497
        %v3503 = vadd.f32 %v3463, %v3499
        %s3504 = sld [smem:[#allocation4 + $0xfa]]
        %v3505 = vstv %s3504
        %v3506 = vmul.f32 %v3505, %v3450
        %v3507 = vmul.f32 %v3505, %v3451
        %3510 = vrot.lane.b32.xlu0 %v3506, 127
        %v3511 = vpop.permute.xlu0 %3510
        %3512 = vrot.lane.b32.xlu0 %v3507, 127
        %v3513 = vpop.permute.xlu0 %3512
        %v3516 = vadd.f32 %v3468, %v3511
        %v3517 = vadd.f32 %v3469, %v3513
        %s3518 = sld [smem:[#allocation4 + $0x11e]]
        %v3519 = vstv %s3518
        %v3520 = vmul.f32 %v3519, %v3450
        %v3521 = vmul.f32 %v3519, %v3451
        %3524 = vrot.lane.b32.xlu0 %v3520, 127
        %v3525 = vpop.permute.xlu0 %3524
        %3526 = vrot.lane.b32.xlu0 %v3521, 127
        %v3527 = vpop.permute.xlu0 %3526
        %v3530 = vadd.f32 %v3474, %v3525
        %v3531 = vadd.f32 %v3475, %v3527
        %s3532 = sld [smem:[#allocation4 + $0xb3]]
        %v3533 = vstv %s3532
        %v3534 = vmul.f32 %v3533, %v3450
        %v3535 = vmul.f32 %v3533, %v3451
        %3538 = vrot.lane.b32.xlu0 %v3534, 126
        %v3539 = vpop.permute.xlu0 %3538
        %3540 = vrot.lane.b32.xlu0 %v3535, 126
        %v3541 = vpop.permute.xlu0 %3540
        %v3544 = vadd.f32 %v3488, %v3539
        %v3545 = vadd.f32 %v3489, %v3541
        %s3546 = sld [smem:[#allocation4 + $0xd7]]
        %v3547 = vstv %s3546
        %v3548 = vmul.f32 %v3547, %v3450
        %v3549 = vmul.f32 %v3547, %v3451
        %3552 = vrot.lane.b32.xlu0 %v3548, 126
        %v3553 = vpop.permute.xlu0 %3552
        %3554 = vrot.lane.b32.xlu0 %v3549, 126
        %v3555 = vpop.permute.xlu0 %3554
        %v3558 = vadd.f32 %v3502, %v3553
        %v3559 = vadd.f32 %v3503, %v3555
        %s3560 = sld [smem:[#allocation4 + $0xfb]]
        %v3561 = vstv %s3560
        %v3562 = vmul.f32 %v3561, %v3450
        %v3563 = vmul.f32 %v3561, %v3451
        %3566 = vrot.lane.b32.xlu0 %v3562, 126
        %v3567 = vpop.permute.xlu0 %3566
        %3568 = vrot.lane.b32.xlu0 %v3563, 126
        %v3569 = vpop.permute.xlu0 %3568
        %v3572 = vadd.f32 %v3516, %v3567
        %v3573 = vadd.f32 %v3517, %v3569
        %s3574 = sld [smem:[#allocation4 + $0x11f]]
        %v3575 = vstv %s3574
        %v3576 = vmul.f32 %v3575, %v3450
        %v3577 = vmul.f32 %v3575, %v3451
        %3580 = vrot.lane.b32.xlu0 %v3576, 126
        %v3581 = vpop.permute.xlu0 %3580
        %3582 = vrot.lane.b32.xlu0 %v3577, 126
        %v3583 = vpop.permute.xlu0 %3582
        %v3586 = vadd.f32 %v3530, %v3581
        %v3587 = vadd.f32 %v3531, %v3583
        %v3588 = vld [vmem:[%s124] sm:$0xff]
        %v3589 = vld [vmem:[%s124 + $0x8] sm:$0xff]
        %s3590 = sld [smem:[#allocation5 + $0x4]]
        %v3591 = vstv %s3590
        %v3592 = vadd.f32 %v3544, %v3591
        %v3593 = vadd.f32 %v3545, %v3591
        %v3594 = vadd.f32 %v3592, %v3588
        %v3595 = vadd.f32 %v3593, %v3589
        %v3596 = vmax.f32 %v3594, 0.0
        %v3597 = vmax.f32 %v3595, 0.0
        %vm3598 = vcmask 130048
        %3599 = vst.msk [vmem:[%s142] sm:$0xff] %vm3598, %v3596
        %3600 = vst.msk [vmem:[%s142 + $0x8] sm:$0xff] %vm3598, %v3597
        %v3601 = vld [vmem:[%s170] sm:$0xff]
        %v3602 = vld [vmem:[%s170 + $0x8] sm:$0xff]
        %s3603 = sld [smem:[#allocation5 + $0x5]]
        %v3604 = vstv %s3603
        %v3605 = vadd.f32 %v3558, %v3604
        %v3606 = vadd.f32 %v3559, %v3604
        %v3607 = vadd.f32 %v3605, %v3601
        %v3608 = vadd.f32 %v3606, %v3602
        %v3609 = vmax.f32 %v3607, 0.0
        %v3610 = vmax.f32 %v3608, 0.0
        %s3611 = scalar_lea.vmem %s142, 16 [#allocation9]
        %3612 = vst.msk [vmem:[%s3611] sm:$0xff] %vm3598, %v3609
        %3613 = vst.msk [vmem:[%s3611 + $0x8] sm:$0xff] %vm3598, %v3610
        %v3614 = vld [vmem:[%s184] sm:$0xff]
        %v3615 = vld [vmem:[%s184 + $0x8] sm:$0xff]
        %s3616 = sld [smem:[#allocation5 + $0x6]]
        %v3617 = vstv %s3616
        %v3618 = vadd.f32 %v3572, %v3617
        %v3619 = vadd.f32 %v3573, %v3617
        %v3620 = vadd.f32 %v3618, %v3614
        %v3621 = vadd.f32 %v3619, %v3615
        %v3622 = vmax.f32 %v3620, 0.0
        %v3623 = vmax.f32 %v3621, 0.0
        %s3624 = scalar_lea.vmem %s142, 32 [#allocation9]
        %3625 = vst.msk [vmem:[%s3624] sm:$0xff] %vm3598, %v3622
        %3626 = vst.msk [vmem:[%s3624 + $0x8] sm:$0xff] %vm3598, %v3623
        %v3627 = vld [vmem:[%s198] sm:$0xff]
        %v3628 = vld [vmem:[%s198 + $0x8] sm:$0xff]
        %s3629 = sld [smem:[#allocation5 + $0x7]]
        %v3630 = vstv %s3629
        %v3631 = vadd.f32 %v3586, %v3630
        %v3632 = vadd.f32 %v3587, %v3630
        %v3633 = vadd.f32 %v3631, %v3627
        %v3634 = vadd.f32 %v3632, %v3628
        %v3635 = vmax.f32 %v3633, 0.0
        %v3636 = vmax.f32 %v3634, 0.0
        %s3637 = scalar_lea.vmem %s142, 48 [#allocation9]
        %3638 = vst.msk [vmem:[%s3637] sm:$0xff] %vm3598, %v3635
        %3639 = vst.msk [vmem:[%s3637 + $0x8] sm:$0xff] %vm3598, %v3636
        %s3640 = sand.u32 %s60, 1
        %s3641 = scalar_lea.sflag [#allocation8], %s3640
        %s3642 = sand.u32 %s60, 1
        %s3643 = smul.addr %s3642, 64
        %s3644 = scalar_lea.vmem [#allocation9], %s3643
        // Predicated region
        $region29: #{tpu_custom_call.1} parent=23 // pred_check
          %p3645 = pneg %p70
        $region30: #{tpu_custom_call.1} parent=23 // pred_check_branch
          %3647 = sbr.rel (%p3645) target = $region32
        $region31: #{tpu_custom_call.1} parent=23 // pred_region
          %s3649 = ssub.s32 1024, 1024
          %3650 = vsyncadd %s3641, %s3649
          %s3651 = smul.addr %s26, 8
          %s3652 = smul.addr %s3651, 128
          %s3653 = scalar_lea.hbm %s3, %s3652
          %s3654 = sshll.u32 %s3644, 4
          %s3655 = int_to_ptr.vmem [resolvable:$true] %s3654
          %3660 = dma.vmem_to_hbm [thread:$0]  %s3655, 1024, %s3653, %s3641, 128, 128, 8
        $region32: #{tpu_custom_call.1} parent=23 // pred_fallthru
          _
      $region24: #{tpu_custom_call.1} parent=5 // pred_fallthru
        _
      %p3661 = scmp.le.s32.totalorder 2, %s21
      // Predicated region
      $region33: #{tpu_custom_call.1} parent=5 // pred_check
        %p3662 = pneg %p3661
      $region34: #{tpu_custom_call.1} parent=5 // pred_check_branch
        %3664 = sbr.rel (%p3662) target = $region36
      $region35: #{tpu_custom_call.1} parent=5 // pred_region
        %s3665 = ssub.s32 %s21, 2
        // Predicated region
        $region37: #{tpu_custom_call.1} parent=35 // pred_check
          %p3666 = pneg %p76
        $region38: #{tpu_custom_call.1} parent=35 // pred_check_branch
          %3668 = sbr.rel (%p3666) target = $region40
        $region39: #{tpu_custom_call.1} parent=35 // pred_region
          %s3669 = sand.u32 %s61, 1
          %s3670 = scalar_lea.sflag [#allocation8], %s3669
          %s3671 = sand.u32 %s61, 1
          %s3672 = smul.addr %s3671, 64
          %s3673 = scalar_lea.vmem [#allocation9], %s3672
          %3674 = dma.done %s3670, 1024
        $region40: #{tpu_custom_call.1} parent=35 // pred_fallthru
          _
      $region36: #{tpu_custom_call.1} parent=5 // pred_fallthru
        _
    $region6: #{tpu_custom_call.1} parent=1 // loop_footer
      %s25 = sadd.s32 1, %s21
    $region7: #{tpu_custom_call.1} parent=1 // loop_footer_branch
      %20 = sbr.rel target = $region3
    $region8: #{tpu_custom_call.1} parent=1 // loop_exit
      _
    %3675 = vsyncpa [#allocation7], 1
    %s3676 = scalar_lea.sflag [#allocation7], 1
    %3677 = vsyncpa %s3676, 1
    %3678 = vsyncpa [#allocation8], 1
    %s3679 = scalar_lea.sflag [#allocation8], 1
    %3680 = vsyncpa %s3679, 1

</llo_original>
